<compile_context>
chip_gen: v7x
topology: tpu7x:2x2x1
jax: 0.10.0
libtpu: 0.0.40
codegen_flags: <defaults>
</compile_context>

<pallas_src>
import jax
import jax.numpy as jnp
from jax.experimental import pallas as pl
from jax.experimental.pallas import tpu as pltpu

N_CLASSES = 3
EPS = 1e-3  # BatchNorm eps from the module


# ----------------------------------------------------------------------------
# Pallas kernel: one (batch element, point-tile) grid step.
# ----------------------------------------------------------------------------
def _stn_kernel(pts_ref, oh_ref,
                w1_ref, b1_ref, w2_ref, b2_ref, w3_ref, b3_ref,
                wf1a_ref, wf1b_ref, bf1_ref, wf2_ref, bf2_ref,
                wf3t_ref, bf3_ref,
                out_ref,
                feat_ref):
    t = pl.program_id(1)
    last_t = pl.num_programs(1) - 1

    x = pts_ref[0]                                     # (3, TILE_N), channels-first

    # conv1 + bn1 + relu: 3-channel input -> three VPU broadcast-FMAs
    # (avoids a degenerate K=3 MXU matmul and a lane-sparse input layout).
    w1 = w1_ref[...]                                   # (128, 3), BN-folded, f32
    h = (w1[:, 0:1] * x[0:1, :]
         + w1[:, 1:2] * x[1:2, :]
         + w1[:, 2:3] * x[2:3, :]
         + b1_ref[...])
    h = jnp.maximum(h, 0.0)                            # (128, TILE_N) f32

    # conv2 + bn2 + relu  (bf16 MXU operands, f32 accumulation)
    h = jnp.dot(w2_ref[...], h.astype(w2_ref.dtype),
                preferred_element_type=jnp.float32) + b2_ref[...]
    h = jnp.maximum(h, 0.0)                            # (128, TILE_N) f32

    # conv3 + bn3 + relu
    h = jnp.dot(w3_ref[...], h.astype(w3_ref.dtype),
                preferred_element_type=jnp.float32) + b3_ref[...]
    h = jnp.maximum(h, 0.0)                            # (256, TILE_N) f32

    # streaming global max-pool over the points of this batch element
    tile_max = jnp.max(h, axis=1, keepdims=True)       # (256, 1)

    @pl.when(t == 0)
    def _():
        feat_ref[...] = jnp.full_like(feat_ref, -jnp.inf)

    feat_ref[...] = jnp.maximum(feat_ref[...], tile_max)

    # FC head: runs once per batch element, on the last point-tile only.
    @pl.when(t == last_t)
    def _():
        feat = feat_ref[...]                           # (256, 1)
        oh = oh_ref[0]                                 # (1, n_classes)
        # fc1 on concat([feat, one_hot]) == Wf1a @ feat + sum_c Wf1b[:, c] * oh[c]
        y = jnp.dot(wf1a_ref[...], feat, preferred_element_type=jnp.float32)
        y = y + jnp.sum(wf1b_ref[...] * oh, axis=1, keepdims=True)
        y = jnp.maximum(y + bf1_ref[...], 0.0)         # fcbn1 + relu, (256, 1)
        # TODO(synk): nn.Dropout(p=0.3) is identity here (inference mode, no RNG mask)
        y = jnp.dot(wf2_ref[...], y, preferred_element_type=jnp.float32) + bf2_ref[...]
        y = jnp.maximum(y, 0.0)                        # fcbn2 + relu, (128, 1)
        # fc3: emit the (1, 3) output row via a sublane reduce (no transpose)
        out_ref[0] = jnp.sum(wf3t_ref[...] * y, axis=0, keepdims=True) + bf3_ref[...]


# ----------------------------------------------------------------------------
# Parameter construction (deterministic, mirrors shapes in STNxyz.__init__)
# ----------------------------------------------------------------------------
def make_params(key, n_classes=N_CLASSES):
    ks = iter(jax.random.split(key, 40))

    def lin(kout, shape, scale=0.1):
        return (scale * jax.random.normal(kout, shape)).astype(jnp.float32)

    def bn(c):
        return dict(
            gamma=(1.0 + 0.1 * jax.random.normal(next(ks), (c,))).astype(jnp.float32),
            beta=(0.1 * jax.random.normal(next(ks), (c,))).astype(jnp.float32),
            mean=(0.1 * jax.random.normal(next(ks), (c,))).astype(jnp.float32),
            var=(1.0 + 0.1 * jax.random.uniform(next(ks), (c,))).astype(jnp.float32),
        )

    p = {
        # Conv1d(kernel=1) / Linear weights stored PyTorch-style: (out, in)
        "conv1_w": lin(next(ks), (128, 3)),   "conv1_b": lin(next(ks), (128,)),
        "conv2_w": lin(next(ks), (128, 128)), "conv2_b": lin(next(ks), (128,)),
        "conv3_w": lin(next(ks), (256, 128)), "conv3_b": lin(next(ks), (256,)),
        "fc1_w": lin(next(ks), (256, 256 + n_classes)), "fc1_b": lin(next(ks), (256,)),
        "fc2_w": lin(next(ks), (128, 256)), "fc2_b": lin(next(ks), (128,)),
        # NOTE: the real module zero-inits fc3; we use small random values here so
        # the numerical check below is meaningful (forward semantics unchanged).
        "fc3_w": lin(next(ks), (3, 128)), "fc3_b": lin(next(ks), (3,)),
        "bn1": bn(128), "bn2": bn(128), "bn3": bn(256),
        "fcbn1": bn(256), "fcbn2": bn(128),
    }
    return p


def _fold_bn(w, b, bnp):
    """Fold inference-mode BatchNorm into a (out, in) weight.

    Returns (out, in) weight and (out, 1) bias column (channels-first)."""
    scale = bnp["gamma"] / jnp.sqrt(bnp["var"] + EPS)
    w_f = (w * scale[:, None]).astype(jnp.float32)
    b_f = ((b - bnp["mean"]) * scale + bnp["beta"])[:, None].astype(jnp.float32)
    return w_f, b_f


# ----------------------------------------------------------------------------
# Wrapper: glue (BN folding, tiling, padding) + pallas_call
# ----------------------------------------------------------------------------
def stn_forward(pts, one_hot_vec, params, *, tile_n=512):
    """pts: (B, 3, N) float NCW (PyTorch layout); one_hot_vec: (B, n_classes)."""
    pts = pts.astype(jnp.float32)
    one_hot_vec = one_hot_vec.astype(jnp.float32)
    B, C, N = pts.shape
    assert C == 3, pts.shape
    n_cls = one_hot_vec.shape[1]

    # Point-dim tile: multiple of 128 lanes; small enough for v7x's VMEM budget.
    tile_n = max(128, (min(tile_n, N) // 128) * 128)
    n_padded = ((N + tile_n - 1) // tile_n) * tile_n
    if n_padded != N:
        # replicate the last point so the global max-pool is unchanged
        pts = jnp.pad(pts, ((0, 0), (0, 0), (0, n_padded - N)), mode="edge")
    num_tiles = n_padded // tile_n

    # Fold inference-mode BN into the conv/linear params (channels-first).
    w1, b1 = _fold_bn(params["conv1_w"], params["conv1_b"], params["bn1"])
    w2, b2 = _fold_bn(params["conv2_w"], params["conv2_b"], params["bn2"])
    w3, b3 = _fold_bn(params["conv3_w"], params["conv3_b"], params["bn3"])
    wf1, bf1 = _fold_bn(params["fc1_w"], params["fc1_b"], params["fcbn1"])
    wf1a, wf1b = wf1[:, :256], wf1[:, 256:]            # split: [point-feat | one-hot]
    wf2, bf2 = _fold_bn(params["fc2_w"], params["fc2_b"], params["fcbn2"])
    wf3t = params["fc3_w"].T.astype(jnp.float32)       # (128, 3)
    bf3 = params["fc3_b"][None, :].astype(jnp.float32) # (1, 3)

    # bf16 operands for the dominant conv matmuls (f32 accumulation in-kernel).
    # conv1 stays on the VPU and the tiny FC head is latency-only -> kept f32.
    w2 = w2.astype(jnp.bfloat16)
    w3 = w3.astype(jnp.bfloat16)

    oh = one_hot_vec.reshape(B, 1, n_cls)

    args = (pts, oh, w1, b1, w2, b2, w3, b3,
            wf1a, wf1b, bf1, wf2, bf2, wf3t, bf3)

    def resident(shape):
        # weights/biases: constant index_map -> stay VMEM-resident across the grid
        return pl.BlockSpec(shape, lambda b, t, nd=len(shape): (0,) * nd)

    in_specs = [
        pl.BlockSpec((1, 3, tile_n), lambda b, t: (b, 0, t)),   # streamed point tiles
        pl.BlockSpec((1, 1, n_cls), lambda b, t: (b, 0, 0)),    # per-batch one-hot
    ] + [resident(a.shape) for a in args[2:]]

    grid_spec = pltpu.PrefetchScalarGridSpec(
        num_scalar_prefetch=0,
        grid=(B, num_tiles),
        in_specs=in_specs,
        out_specs=pl.BlockSpec((1, 1, 3), lambda b, t: (b, 0, 0)),
        scratch_shapes=[pltpu.VMEM((256, 1), jnp.float32)],     # running-max feature
    )

    out = pl.pallas_call(
        _stn_kernel,
        out_shape=jax.ShapeDtypeStruct((B, 1, 3), jnp.float32),
        grid_spec=grid_spec,
        compiler_params=pltpu.CompilerParams(
            dimension_semantics=("parallel", "arbitrary"),
            vmem_limit_bytes=32 * 1024 * 1024),
    )(*args)

    return out.reshape(B, 3)


# ----------------------------------------------------------------------------
# Pure-JAX reference (PyTorch NCW semantics, f32) for validation
# ----------------------------------------------------------------------------
def stn_reference(pts, one_hot_vec, p):
    def bn_ncw(x, b):   # x: (B, C, N)
        s = b["gamma"] / jnp.sqrt(b["var"] + EPS)
        return (x - b["mean"][None, :, None]) * s[None, :, None] + b["beta"][None, :, None]

    def bn_nc(x, b):    # x: (B, C)
        s = b["gamma"] / jnp.sqrt(b["var"] + EPS)
        return (x - b["mean"][None, :]) * s[None, :] + b["beta"][None, :]

    def conv1x1(x, w, b):   # x: (B, Cin, N), w: (Cout, Cin)
        return jnp.einsum("oc,bcn->bon", w, x) + b[None, :, None]

    x = jax.nn.relu(bn_ncw(conv1x1(pts, p["conv1_w"], p["conv1_b"]), p["bn1"]))
    x = jax.nn.relu(bn_ncw(conv1x1(x, p["conv2_w"], p["conv2_b"]), p["bn2"]))
    x = jax.nn.relu(bn_ncw(conv1x1(x, p["conv3_w"], p["conv3_b"]), p["bn3"]))
    x = jnp.max(x, axis=2)                                    # (B, 256)
    x = jnp.concatenate([x, one_hot_vec], axis=1)             # (B, 256 + n_classes)
    x = jax.nn.relu(bn_nc(x @ p["fc1_w"].T + p["fc1_b"], p["fcbn1"]))
    x = jax.nn.relu(bn_nc(x @ p["fc2_w"].T + p["fc2_b"], p["fcbn2"]))
    x = x @ p["fc3_w"].T + p["fc3_b"]
    return x


if __name__ == "__main__":
    key = jax.random.PRNGKey(0)
    kp, kpts, koh = jax.random.split(key, 3)

    B, N = 2, 512                       # small: 2 frustums, 512 points each
    params = make_params(kp)

    pts = jax.random.normal(kpts, (B, 3, N), dtype=jnp.float32)       # NCW like PyTorch
    cls = jax.random.randint(koh, (B,), 0, N_CLASSES)
    one_hot_vec = jnp.eye(N_CLASSES, dtype=jnp.float32)[cls]          # (B, n_classes)

    ref = stn_reference(pts, one_hot_vec, params)

    # multi-tile streaming path (4 point-tiles per frustum, batch axis parallel)
    out = stn_forward(pts, one_hot_vec, params, tile_n=128)
    out = jax.block_until_ready(out)
    assert out.shape == (B, 3), out.shape
    # bf16 MXU operands -> looser tolerance than pure-f32
    assert jnp.allclose(out, ref, atol=5e-2, rtol=5e-2), (out, ref)

    # single-frustum path (no duplicate-to-2 workaround needed with folded BN)
    out1 = stn_forward(pts[:1], one_hot_vec[:1], params, tile_n=128)
    out1 = jax.block_until_ready(out1)
    assert out1.shape == (1, 3), out1.shape
    assert jnp.allclose(out1, ref[:1], atol=5e-2, rtol=5e-2), (out1, ref[:1])

    print("KERNEL_OK")
</pallas_src>

<mosaic_0001>
module attributes {stable_mosaic.version = 11 : i64} {
  func.func @_stn_kernel(%arg0: i32, %arg1: i32, %arg2: memref<1x3x128xf32, #tpu.memory_space<vmem>>, %arg3: memref<1x1x3xf32, #tpu.memory_space<vmem>>, %arg4: memref<128x3xf32, #tpu.memory_space<vmem>>, %arg5: memref<128x1xf32, #tpu.memory_space<vmem>>, %arg6: memref<128x128xbf16, #tpu.memory_space<vmem>>, %arg7: memref<128x1xf32, #tpu.memory_space<vmem>>, %arg8: memref<256x128xbf16, #tpu.memory_space<vmem>>, %arg9: memref<256x1xf32, #tpu.memory_space<vmem>>, %arg10: memref<256x256xf32, #tpu.memory_space<vmem>>, %arg11: memref<256x3xf32, #tpu.memory_space<vmem>>, %arg12: memref<256x1xf32, #tpu.memory_space<vmem>>, %arg13: memref<128x256xf32, #tpu.memory_space<vmem>>, %arg14: memref<128x1xf32, #tpu.memory_space<vmem>>, %arg15: memref<128x3xf32, #tpu.memory_space<vmem>>, %arg16: memref<1x3xf32, #tpu.memory_space<vmem>>, %arg17: memref<1x1x3xf32, #tpu.memory_space<vmem>>, %arg18: memref<256x1xf32, #tpu.memory_space<vmem>>) attributes {dimension_semantics = [#tpu.dimension_semantics<parallel>, #tpu.dimension_semantics<arbitrary>], iteration_bounds = array<i64: 2, 4>, scalar_prefetch = 0 : i64, scratch_operands = 1 : i64, tpu.core_type = #tpu.core_type<tc>, window_params = [{transform_indices = @transform_0, window_bounds = array<i64: 1, 3, 128>}, {transform_indices = @transform_1, window_bounds = array<i64: 1, 1, 3>}, {pipeline_mode = #tpu.pipeline_mode<synchronous>, transform_indices = @transform_2, window_bounds = array<i64: 128, 3>}, {pipeline_mode = #tpu.pipeline_mode<synchronous>, transform_indices = @transform_3, window_bounds = array<i64: 128, 1>}, {pipeline_mode = #tpu.pipeline_mode<synchronous>, transform_indices = @transform_4, window_bounds = array<i64: 128, 128>}, {pipeline_mode = #tpu.pipeline_mode<synchronous>, transform_indices = @transform_5, window_bounds = array<i64: 128, 1>}, {pipeline_mode = #tpu.pipeline_mode<synchronous>, transform_indices = @transform_6, window_bounds = array<i64: 256, 128>}, {pipeline_mode = #tpu.pipeline_mode<synchronous>, transform_indices = @transform_7, window_bounds = array<i64: 256, 1>}, {pipeline_mode = #tpu.pipeline_mode<synchronous>, transform_indices = @transform_8, window_bounds = array<i64: 256, 256>}, {pipeline_mode = #tpu.pipeline_mode<synchronous>, transform_indices = @transform_9, window_bounds = array<i64: 256, 3>}, {pipeline_mode = #tpu.pipeline_mode<synchronous>, transform_indices = @transform_10, window_bounds = array<i64: 256, 1>}, {pipeline_mode = #tpu.pipeline_mode<synchronous>, transform_indices = @transform_11, window_bounds = array<i64: 128, 256>}, {pipeline_mode = #tpu.pipeline_mode<synchronous>, transform_indices = @transform_12, window_bounds = array<i64: 128, 1>}, {pipeline_mode = #tpu.pipeline_mode<synchronous>, transform_indices = @transform_13, window_bounds = array<i64: 128, 3>}, {pipeline_mode = #tpu.pipeline_mode<synchronous>, transform_indices = @transform_14, window_bounds = array<i64: 1, 3>}, {transform_indices = @transform_15, window_bounds = array<i64: 1, 1, 3>}]} {
    %c0 = arith.constant 0 : index
    %c0_0 = arith.constant 0 : index
    %c0_1 = arith.constant 0 : index
    %0 = vector.load %arg2[%c0, %c0_0, %c0_1] : memref<1x3x128xf32, #tpu.memory_space<vmem>>, vector<1x3x128xf32>
    %1 = vector.shape_cast %0 : vector<1x3x128xf32> to vector<3x128xf32>
    %c0_2 = arith.constant 0 : index
    %c0_3 = arith.constant 0 : index
    %2 = vector.load %arg4[%c0_2, %c0_3] : memref<128x3xf32, #tpu.memory_space<vmem>>, vector<128x3xf32>
    %3 = vector.extract_strided_slice %2 {offsets = [0, 0], sizes = [128, 1], strides = [1, 1]} : vector<128x3xf32> to vector<128x1xf32>
    %4 = vector.extract_strided_slice %1 {offsets = [0, 0], sizes = [1, 128], strides = [1, 1]} : vector<3x128xf32> to vector<1x128xf32>
    %5 = vector.broadcast %3 : vector<128x1xf32> to vector<128x128xf32>
    %6 = vector.broadcast %4 : vector<1x128xf32> to vector<128x128xf32>
    %7 = arith.mulf %5, %6 : vector<128x128xf32>
    %8 = vector.extract_strided_slice %2 {offsets = [0, 1], sizes = [128, 1], strides = [1, 1]} : vector<128x3xf32> to vector<128x1xf32>
    %9 = vector.extract_strided_slice %1 {offsets = [1, 0], sizes = [1, 128], strides = [1, 1]} : vector<3x128xf32> to vector<1x128xf32>
    %10 = vector.broadcast %8 : vector<128x1xf32> to vector<128x128xf32>
    %11 = vector.broadcast %9 : vector<1x128xf32> to vector<128x128xf32>
    %12 = arith.mulf %10, %11 : vector<128x128xf32>
    %13 = arith.addf %7, %12 : vector<128x128xf32>
    %14 = vector.extract_strided_slice %2 {offsets = [0, 2], sizes = [128, 1], strides = [1, 1]} : vector<128x3xf32> to vector<128x1xf32>
    %15 = vector.extract_strided_slice %1 {offsets = [2, 0], sizes = [1, 128], strides = [1, 1]} : vector<3x128xf32> to vector<1x128xf32>
    %16 = vector.broadcast %14 : vector<128x1xf32> to vector<128x128xf32>
    %17 = vector.broadcast %15 : vector<1x128xf32> to vector<128x128xf32>
    %18 = arith.mulf %16, %17 : vector<128x128xf32>
    %19 = arith.addf %13, %18 : vector<128x128xf32>
    %c0_4 = arith.constant 0 : index
    %c0_5 = arith.constant 0 : index
    %20 = vector.load %arg5[%c0_4, %c0_5] : memref<128x1xf32, #tpu.memory_space<vmem>>, vector<128x1xf32>
    %21 = vector.broadcast %20 : vector<128x1xf32> to vector<128x128xf32>
    %22 = arith.addf %19, %21 : vector<128x128xf32>
    %cst = arith.constant 0.000000e+00 : f32
    %23 = vector.broadcast %cst : f32 to vector<128x128xf32>
    %24 = arith.maximumf %22, %23 : vector<128x128xf32>
    %c0_6 = arith.constant 0 : index
    %c0_7 = arith.constant 0 : index
    %25 = vector.load %arg6[%c0_6, %c0_7] : memref<128x128xbf16, #tpu.memory_space<vmem>>, vector<128x128xbf16>
    %26 = arith.truncf %24 : vector<128x128xf32> to vector<128x128xbf16>
    %cst_8 = arith.constant dense<0.000000e+00> : vector<128x128xf32>
    %27 = tpu.matmul %25, %26, %cst_8 {dimension_numbers = #tpu.dot_dimension_numbers<[1], [0], [0], [1], [0, 0, 1, 1], [], []>} : vector<128x128xbf16>, vector<128x128xbf16>, vector<128x128xf32> -> vector<128x128xf32>
    %c0_9 = arith.constant 0 : index
    %c0_10 = arith.constant 0 : index
    %28 = vector.load %arg7[%c0_9, %c0_10] : memref<128x1xf32, #tpu.memory_space<vmem>>, vector<128x1xf32>
    %29 = vector.broadcast %28 : vector<128x1xf32> to vector<128x128xf32>
    %30 = arith.addf %27, %29 : vector<128x128xf32>
    %cst_11 = arith.constant 0.000000e+00 : f32
    %31 = vector.broadcast %cst_11 : f32 to vector<128x128xf32>
    %32 = arith.maximumf %30, %31 : vector<128x128xf32>
    %c0_12 = arith.constant 0 : index
    %c0_13 = arith.constant 0 : index
    %33 = vector.load %arg8[%c0_12, %c0_13] : memref<256x128xbf16, #tpu.memory_space<vmem>>, vector<256x128xbf16>
    %34 = arith.truncf %32 : vector<128x128xf32> to vector<128x128xbf16>
    %cst_14 = arith.constant dense<0.000000e+00> : vector<256x128xf32>
    %35 = tpu.matmul %33, %34, %cst_14 {dimension_numbers = #tpu.dot_dimension_numbers<[1], [0], [0], [1], [0, 0, 1, 1], [], []>} : vector<256x128xbf16>, vector<128x128xbf16>, vector<256x128xf32> -> vector<256x128xf32>
    %c0_15 = arith.constant 0 : index
    %c0_16 = arith.constant 0 : index
    %36 = vector.load %arg9[%c0_15, %c0_16] : memref<256x1xf32, #tpu.memory_space<vmem>>, vector<256x1xf32>
    %37 = vector.broadcast %36 : vector<256x1xf32> to vector<256x128xf32>
    %38 = arith.addf %35, %37 : vector<256x128xf32>
    %cst_17 = arith.constant 0.000000e+00 : f32
    %39 = vector.broadcast %cst_17 : f32 to vector<256x128xf32>
    %40 = arith.maximumf %38, %39 : vector<256x128xf32>
    %cst_18 = arith.constant dense<0xFF800000> : vector<256xf32>
    %41 = vector.multi_reduction <maximumf>, %40, %cst_18 [1] : vector<256x128xf32> to vector<256xf32>
    %42 = vector.shape_cast %41 : vector<256xf32> to vector<256x1xf32>
    %c0_i32 = arith.constant 0 : i32
    %43 = arith.cmpi eq, %arg1, %c0_i32 : i32
    %44 = arith.extui %43 : i1 to i32
    %c0_i32_19 = arith.constant 0 : i32
    %45 = arith.cmpi ne, %44, %c0_i32_19 : i32
    scf.if %45 {
      %cst_25 = arith.constant 0xFF800000 : f32
      %52 = vector.broadcast %cst_25 : f32 to vector<256x1xf32>
      %c0_26 = arith.constant 0 : index
      %c0_27 = arith.constant 0 : index
      %53 = vector.load %arg18[%c0_26, %c0_27] : memref<256x1xf32, #tpu.memory_space<vmem>>, vector<256x1xf32>
      tpu.vector_store %arg18[%c0_26, %c0_27], %52 {strides = array<i32>} : memref<256x1xf32, #tpu.memory_space<vmem>>, vector<256x1xf32>,
    } else {
    }
    %c0_20 = arith.constant 0 : index
    %c0_21 = arith.constant 0 : index
    %46 = vector.load %arg18[%c0_20, %c0_21] : memref<256x1xf32, #tpu.memory_space<vmem>>, vector<256x1xf32>
    %47 = arith.maximumf %46, %42 : vector<256x1xf32>
    %c0_22 = arith.constant 0 : index
    %c0_23 = arith.constant 0 : index
    %48 = vector.load %arg18[%c0_22, %c0_23] : memref<256x1xf32, #tpu.memory_space<vmem>>, vector<256x1xf32>
    tpu.vector_store %arg18[%c0_22, %c0_23], %47 {strides = array<i32>} : memref<256x1xf32, #tpu.memory_space<vmem>>, vector<256x1xf32>,
    %c3_i32 = arith.constant 3 : i32
    %49 = arith.cmpi eq, %arg1, %c3_i32 : i32
    %50 = arith.extui %49 : i1 to i32
    %c0_i32_24 = arith.constant 0 : i32
    %51 = arith.cmpi ne, %50, %c0_i32_24 : i32
    scf.if %51 {
      %c0_25 = arith.constant 0 : index
      %c0_26 = arith.constant 0 : index
      %52 = vector.load %arg18[%c0_25, %c0_26] : memref<256x1xf32, #tpu.memory_space<vmem>>, vector<256x1xf32>
      %c0_27 = arith.constant 0 : index
      %c0_28 = arith.constant 0 : index
      %c0_29 = arith.constant 0 : index
      %53 = vector.load %arg3[%c0_27, %c0_28, %c0_29] : memref<1x1x3xf32, #tpu.memory_space<vmem>>, vector<1x1x3xf32>
      %54 = vector.shape_cast %53 : vector<1x1x3xf32> to vector<1x3xf32>
      %c0_30 = arith.constant 0 : index
      %c0_31 = arith.constant 0 : index
      %55 = vector.load %arg10[%c0_30, %c0_31] : memref<256x256xf32, #tpu.memory_space<vmem>>, vector<256x256xf32>
      %cst_32 = arith.constant dense<0.000000e+00> : vector<256x1xf32>
      %56 = tpu.matmul %55, %52, %cst_32 {dimension_numbers = #tpu.dot_dimension_numbers<[1], [0], [0], [1], [0, 0, 1, 1], [], []>} : vector<256x256xf32>, vector<256x1xf32>, vector<256x1xf32> -> vector<256x1xf32>
      %c0_33 = arith.constant 0 : index
      %c0_34 = arith.constant 0 : index
      %57 = vector.load %arg11[%c0_33, %c0_34] : memref<256x3xf32, #tpu.memory_space<vmem>>, vector<256x3xf32>
      %58 = vector.broadcast %54 : vector<1x3xf32> to vector<256x3xf32>
      %59 = arith.mulf %57, %58 : vector<256x3xf32>
      %cst_35 = arith.constant dense<0.000000e+00> : vector<256xf32>
      %60 = vector.multi_reduction <add>, %59, %cst_35 [1] : vector<256x3xf32> to vector<256xf32>
      %61 = vector.shape_cast %60 : vector<256xf32> to vector<256x1xf32>
      %62 = arith.addf %56, %61 : vector<256x1xf32>
      %c0_36 = arith.constant 0 : index
      %c0_37 = arith.constant 0 : index
      %63 = vector.load %arg12[%c0_36, %c0_37] : memref<256x1xf32, #tpu.memory_space<vmem>>, vector<256x1xf32>
      %64 = arith.addf %62, %63 : vector<256x1xf32>
      %cst_38 = arith.constant 0.000000e+00 : f32
      %65 = vector.broadcast %cst_38 : f32 to vector<256x1xf32>
      %66 = arith.maximumf %64, %65 : vector<256x1xf32>
      %c0_39 = arith.constant 0 : index
      %c0_40 = arith.constant 0 : index
      %67 = vector.load %arg13[%c0_39, %c0_40] : memref<128x256xf32, #tpu.memory_space<vmem>>, vector<128x256xf32>
      %cst_41 = arith.constant dense<0.000000e+00> : vector<128x1xf32>
      %68 = tpu.matmul %67, %66, %cst_41 {dimension_numbers = #tpu.dot_dimension_numbers<[1], [0], [0], [1], [0, 0, 1, 1], [], []>} : vector<128x256xf32>, vector<256x1xf32>, vector<128x1xf32> -> vector<128x1xf32>
      %c0_42 = arith.constant 0 : index
      %c0_43 = arith.constant 0 : index
      %69 = vector.load %arg14[%c0_42, %c0_43] : memref<128x1xf32, #tpu.memory_space<vmem>>, vector<128x1xf32>
      %70 = arith.addf %68, %69 : vector<128x1xf32>
      %cst_44 = arith.constant 0.000000e+00 : f32
      %71 = vector.broadcast %cst_44 : f32 to vector<128x1xf32>
      %72 = arith.maximumf %70, %71 : vector<128x1xf32>
      %c0_45 = arith.constant 0 : index
      %c0_46 = arith.constant 0 : index
      %73 = vector.load %arg15[%c0_45, %c0_46] : memref<128x3xf32, #tpu.memory_space<vmem>>, vector<128x3xf32>
      %74 = vector.broadcast %72 : vector<128x1xf32> to vector<128x3xf32>
      %75 = arith.mulf %73, %74 : vector<128x3xf32>
      %cst_47 = arith.constant dense<0.000000e+00> : vector<3xf32>
      %76 = vector.multi_reduction <add>, %75, %cst_47 [0] : vector<128x3xf32> to vector<3xf32>
      %77 = vector.shape_cast %76 : vector<3xf32> to vector<1x3xf32>
      %c0_48 = arith.constant 0 : index
      %c0_49 = arith.constant 0 : index
      %78 = vector.load %arg16[%c0_48, %c0_49] : memref<1x3xf32, #tpu.memory_space<vmem>>, vector<1x3xf32>
      %79 = arith.addf %77, %78 : vector<1x3xf32>
      %c0_50 = arith.constant 0 : index
      %c0_51 = arith.constant 0 : index
      %c0_52 = arith.constant 0 : index
      %80 = vector.load %arg17[%c0_50, %c0_51, %c0_52] : memref<1x1x3xf32, #tpu.memory_space<vmem>>, vector<1x1x3xf32>
      %81 = vector.shape_cast %80 : vector<1x1x3xf32> to vector<1x3xf32>
      %82 = vector.shape_cast %79 : vector<1x3xf32> to vector<1x1x3xf32>
      tpu.vector_store %arg17[%c0_50, %c0_51, %c0_52], %82 {strides = array<i32>} : memref<1x1x3xf32, #tpu.memory_space<vmem>>, vector<1x1x3xf32>,
    } else {
    }
    return
  }
  func.func @transform_0(%arg0: i32, %arg1: i32) -> (i32, i32, i32) {
    %c0_i32 = arith.constant 0 : i32
    %c0_i32_0 = arith.constant 0 : i32
    return %arg0, %c0_i32, %arg1 : i32, i32, i32
  }
  func.func @transform_1(%arg0: i32, %arg1: i32) -> (i32, i32, i32) {
    %c0_i32 = arith.constant 0 : i32
    %c0_i32_0 = arith.constant 0 : i32
    %c0_i32_1 = arith.constant 0 : i32
    return %arg0, %c0_i32, %c0_i32_0 : i32, i32, i32
  }
  func.func @transform_2(%arg0: i32, %arg1: i32) -> (i32, i32) {
    %c0_i32 = arith.constant 0 : i32
    %c0_i32_0 = arith.constant 0 : i32
    %c0_i32_1 = arith.constant 0 : i32
    return %c0_i32, %c0_i32_0 : i32, i32
  }
  func.func @transform_3(%arg0: i32, %arg1: i32) -> (i32, i32) {
    %c0_i32 = arith.constant 0 : i32
    %c0_i32_0 = arith.constant 0 : i32
    %c0_i32_1 = arith.constant 0 : i32
    return %c0_i32, %c0_i32_0 : i32, i32
  }
  func.func @transform_4(%arg0: i32, %arg1: i32) -> (i32, i32) {
    %c0_i32 = arith.constant 0 : i32
    %c0_i32_0 = arith.constant 0 : i32
    %c0_i32_1 = arith.constant 0 : i32
    return %c0_i32, %c0_i32_0 : i32, i32
  }
  func.func @transform_5(%arg0: i32, %arg1: i32) -> (i32, i32) {
    %c0_i32 = arith.constant 0 : i32
    %c0_i32_0 = arith.constant 0 : i32
    %c0_i32_1 = arith.constant 0 : i32
    return %c0_i32, %c0_i32_0 : i32, i32
  }
  func.func @transform_6(%arg0: i32, %arg1: i32) -> (i32, i32) {
    %c0_i32 = arith.constant 0 : i32
    %c0_i32_0 = arith.constant 0 : i32
    %c0_i32_1 = arith.constant 0 : i32
    return %c0_i32, %c0_i32_0 : i32, i32
  }
  func.func @transform_7(%arg0: i32, %arg1: i32) -> (i32, i32) {
    %c0_i32 = arith.constant 0 : i32
    %c0_i32_0 = arith.constant 0 : i32
    %c0_i32_1 = arith.constant 0 : i32
    return %c0_i32, %c0_i32_0 : i32, i32
  }
  func.func @transform_8(%arg0: i32, %arg1: i32) -> (i32, i32) {
    %c0_i32 = arith.constant 0 : i32
    %c0_i32_0 = arith.constant 0 : i32
    %c0_i32_1 = arith.constant 0 : i32
    return %c0_i32, %c0_i32_0 : i32, i32
  }
  func.func @transform_9(%arg0: i32, %arg1: i32) -> (i32, i32) {
    %c0_i32 = arith.constant 0 : i32
    %c0_i32_0 = arith.constant 0 : i32
    %c0_i32_1 = arith.constant 0 : i32
    return %c0_i32, %c0_i32_0 : i32, i32
  }
  func.func @transform_10(%arg0: i32, %arg1: i32) -> (i32, i32) {
    %c0_i32 = arith.constant 0 : i32
    %c0_i32_0 = arith.constant 0 : i32
    %c0_i32_1 = arith.constant 0 : i32
    return %c0_i32, %c0_i32_0 : i32, i32
  }
  func.func @transform_11(%arg0: i32, %arg1: i32) -> (i32, i32) {
    %c0_i32 = arith.constant 0 : i32
    %c0_i32_0 = arith.constant 0 : i32
    %c0_i32_1 = arith.constant 0 : i32
    return %c0_i32, %c0_i32_0 : i32, i32
  }
  func.func @transform_12(%arg0: i32, %arg1: i32) -> (i32, i32) {
    %c0_i32 = arith.constant 0 : i32
    %c0_i32_0 = arith.constant 0 : i32
    %c0_i32_1 = arith.constant 0 : i32
    return %c0_i32, %c0_i32_0 : i32, i32
  }
  func.func @transform_13(%arg0: i32, %arg1: i32) -> (i32, i32) {
    %c0_i32 = arith.constant 0 : i32
    %c0_i32_0 = arith.constant 0 : i32
    %c0_i32_1 = arith.constant 0 : i32
    return %c0_i32, %c0_i32_0 : i32, i32
  }
  func.func @transform_14(%arg0: i32, %arg1: i32) -> (i32, i32) {
    %c0_i32 = arith.constant 0 : i32
    %c0_i32_0 = arith.constant 0 : i32
    %c0_i32_1 = arith.constant 0 : i32
    return %c0_i32, %c0_i32_0 : i32, i32
  }
  func.func @transform_15(%arg0: i32, %arg1: i32) -> (i32, i32, i32) {
    %c0_i32 = arith.constant 0 : i32
    %c0_i32_0 = arith.constant 0 : i32
    %c0_i32_1 = arith.constant 0 : i32
    return %arg0, %c0_i32, %c0_i32_0 : i32, i32, i32
  }
}

</mosaic_0001>

<llo_original>
// kernel: tpu_custom_call.1
$region0: #{tpu_custom_call.1}
  #allocation0 [shape = 'u32[]', space=smem, size = 0x4, offset = 0x4, fixed_abs, tag = 'smem constant byte address 0x4 - core index']
  #allocation1 [shape = 'u32[144,128]{1,0:T(1,128)}', space=vmem, size = 0x12000, scoped, tag = 'internal scratch']
  #allocation2 [shape = 'f32[256,1]{1,0:T(8,128)}', space=vmem, size = 0x20000, scoped, tag = 'scratch operand']
  %s0 = inlined_call_operand.vmem [shape: f32[2,3,512], index: 0, kind: input, shape index: {}]
  %s1 = inlined_call_operand.vmem [shape: f32[2,1,3], index: 1, kind: input, shape index: {}]
  %s2 = inlined_call_operand.vmem [shape: f32[128,3], index: 2, kind: input, shape index: {}]
  %s3 = inlined_call_operand.vmem [shape: f32[128,1], index: 3, kind: input, shape index: {}]
  %s4 = inlined_call_operand.vmem [shape: bf16[128,128], index: 4, kind: input, shape index: {}]
  %s5 = inlined_call_operand.vmem [shape: f32[128,1], index: 5, kind: input, shape index: {}]
  %s6 = inlined_call_operand.vmem [shape: bf16[256,128], index: 6, kind: input, shape index: {}]
  %s7 = inlined_call_operand.vmem [shape: f32[256,1], index: 7, kind: input, shape index: {}]
  %s8 = inlined_call_operand.vmem [shape: f32[256,256], index: 8, kind: input, shape index: {}]
  %s9 = inlined_call_operand.vmem [shape: f32[256,3], index: 9, kind: input, shape index: {}]
  %s10 = inlined_call_operand.vmem [shape: f32[256,1], index: 10, kind: input, shape index: {}]
  %s11 = inlined_call_operand.vmem [shape: f32[128,256], index: 11, kind: input, shape index: {}]
  %s12 = inlined_call_operand.vmem [shape: f32[128,1], index: 12, kind: input, shape index: {}]
  %s13 = inlined_call_operand.vmem [shape: f32[128,3], index: 13, kind: input, shape index: {}]
  %s14 = inlined_call_operand.vmem [shape: f32[1,3], index: 14, kind: input, shape index: {}]
  %s15 = inlined_call_operand.hbm [shape: f32[2,1,3], index: 15, kind: output, shape index: {}]
  %s16 = sld [smem:[#allocation0]]
  $region101: #{tpu_custom_call.1} parent=0
    _
  %s18 = ssub.s32 1, %s16
  %s19 = scalar_select 0, %s18, %s16
  $region1: #{tpu_custom_call.1} parent=0
    #allocation3 [shape = 'u8[1024]{0}', space=vmem, size = 0x400, scoped, tag = 'output window, operand 0']
    #allocation4 [shape = 's32[2]{0}', space=sflag, size = 0x8, scoped, tag = 'scoped memory for tpu_custom_call.1']
    %20 = vsyncpa [#allocation4], 0
    %s21 = scalar_lea.sflag [#allocation4], 1
    %22 = vsyncpa %s21, 0
    loop: start=0, step=1, limit=10
    $region2: #{tpu_custom_call.1} parent=1 // loop_pre_header
      _
    $region3: #{tpu_custom_call.1} parent=1 // loop_header
      %s24 = sphi 0, %s28
      %p25 = scmp.ge.s32.totalorder %s24, 10
      %s31 = sphi 0, %s43
      %s32 = sphi 0, %s39
      %s33 = sphi 0, %s31
      %s34 = sphi 0, %s32
      %s35 = sphi 0, %s33
      %s36 = sphi 0, %s34
      %s48 = sphi 0, %s50
      %s51 = sphi 0, %s48
      %s52 = sphi 0, %s51
      %s68 = sphi 0, %s52
      %s74 = sphi 0, %s76
      %s77 = sphi 0, %s74
      %s78 = sphi 0, %s77
      %s94 = sphi 0, %s78
      %s98 = sphi 0, %s98
      %s100 = sphi 0, %s98
      %s101 = sphi 0, %s100
      %s115 = sphi 0, %s101
      %s119 = sphi 0, %s119
      %s121 = sphi 0, %s119
      %s122 = sphi 0, %s121
      %s136 = sphi 0, %s122
      %s140 = sphi 0, %s140
      %s142 = sphi 0, %s140
      %s143 = sphi 0, %s142
      %s157 = sphi 0, %s143
      %s161 = sphi 0, %s161
      %s163 = sphi 0, %s161
      %s164 = sphi 0, %s163
      %s178 = sphi 0, %s164
      %s182 = sphi 0, %s182
      %s184 = sphi 0, %s182
      %s185 = sphi 0, %s184
      %s199 = sphi 0, %s185
      %s203 = sphi 0, %s203
      %s205 = sphi 0, %s203
      %s206 = sphi 0, %s205
      %s220 = sphi 0, %s206
      %s224 = sphi 0, %s224
      %s226 = sphi 0, %s224
      %s227 = sphi 0, %s226
      %s241 = sphi 0, %s227
      %s245 = sphi 0, %s245
      %s247 = sphi 0, %s245
      %s248 = sphi 0, %s247
      %s262 = sphi 0, %s248
      %s266 = sphi 0, %s266
      %s268 = sphi 0, %s266
      %s269 = sphi 0, %s268
      %s283 = sphi 0, %s269
      %s287 = sphi 0, %s287
      %s289 = sphi 0, %s287
      %s290 = sphi 0, %s289
      %s304 = sphi 0, %s290
      %s308 = sphi 0, %s308
      %s310 = sphi 0, %s308
      %s311 = sphi 0, %s310
      %s325 = sphi 0, %s311
      %s329 = sphi 0, %s329
      %s331 = sphi 0, %s329
      %s332 = sphi 0, %s331
      %s346 = sphi 0, %s332
      %s350 = sphi 0, %s350
      %s352 = sphi 0, %s350
      %s353 = sphi 0, %s352
      %s367 = sphi 0, %s353
      %s373 = sphi 0, %s375
      %s376 = sphi 0, %s373
      %s377 = sphi 0, %s376
      %s393 = sphi 0, %s377
    $region4: #{tpu_custom_call.1} parent=1 // loop_header_branch
      %27 = sbr.rel (%p25) target = $region8
    $region5: #{tpu_custom_call.1} parent=1 // loop_body
      %s29 = ssub.s32 %s24, 1
      %s30 = ssub.s32 %s24, 2
      %s37 = sadd.s32 1, %s32
      %p38 = scmp.ge.s32.totalorder %s37, 4
      %s39 = scalar_select %p38, 0, %s37
      %s40 = sadd.s32 1, %s31
      %s41 = scalar_select %p38, %s40, %s31
      %p42 = scmp.ge.s32.totalorder %s41, 2
      %s43 = scalar_select %p42, 0, %s41
      %s44 = ssub.s32 %s31, %s43
      %s45 = ssub.s32 %s32, %s39
      %s46 = sor.u32 %s44, %s45
      %p47 = scmp.eq.s32.totalorder %s46, 0
      %s49 = sadd.s32 %s48, 1
      %s50 = scalar_select %p47, %s48, %s49
      %p53 = pneg %p47
      %p54 = scmp.eq.s32.totalorder %s24, 7
      %p55 = por %p53, %p54
      %p56 = scmp.ne.s32.totalorder %s48, %s51
      %p57 = scmp.eq.s32.totalorder %s24, 0
      %p58 = por %p56, %p57
      %p59 = scmp.ne.s32.totalorder %s48, %s51
      %p60 = scmp.eq.s32.totalorder %s29, 7
      %p61 = por %p59, %p60
      %p62 = scmp.ne.s32.totalorder %s51, %s52
      %p63 = scmp.eq.s32.totalorder %s29, 0
      %p64 = por %p62, %p63
      %p65 = scmp.ne.s32.totalorder %s51, %s52
      %p66 = scmp.eq.s32.totalorder %s30, 7
      %p67 = por %p65, %p66
      %p69 = scmp.ne.s32.totalorder %s52, %s68
      %p70 = scmp.eq.s32.totalorder %s30, 0
      %p71 = por %p69, %p70
      %s72 = ssub.s32 %s31, %s43
      %p73 = scmp.eq.s32.totalorder %s72, 0
      %s75 = sadd.s32 %s74, 1
      %s76 = scalar_select %p73, %s74, %s75
      %p79 = pneg %p73
      %p80 = scmp.eq.s32.totalorder %s24, 7
      %p81 = por %p79, %p80
      %p82 = scmp.ne.s32.totalorder %s74, %s77
      %p83 = scmp.eq.s32.totalorder %s24, 0
      %p84 = por %p82, %p83
      %p85 = scmp.ne.s32.totalorder %s74, %s77
      %p86 = scmp.eq.s32.totalorder %s29, 7
      %p87 = por %p85, %p86
      %p88 = scmp.ne.s32.totalorder %s77, %s78
      %p89 = scmp.eq.s32.totalorder %s29, 0
      %p90 = por %p88, %p89
      %p91 = scmp.ne.s32.totalorder %s77, %s78
      %p92 = scmp.eq.s32.totalorder %s30, 7
      %p93 = por %p91, %p92
      %p95 = scmp.ne.s32.totalorder %s78, %s94
      %p96 = scmp.eq.s32.totalorder %s30, 0
      %p97 = por %p95, %p96
      %s99 = sadd.s32 %s98, 1
      %p102 = scmp.eq.s32.totalorder %s24, 7
      %p103 = scmp.ne.s32.totalorder %s98, %s100
      %p104 = scmp.eq.s32.totalorder %s24, 0
      %p105 = por %p103, %p104
      %p106 = scmp.ne.s32.totalorder %s98, %s100
      %p107 = scmp.eq.s32.totalorder %s29, 7
      %p108 = por %p106, %p107
      %p109 = scmp.ne.s32.totalorder %s100, %s101
      %p110 = scmp.eq.s32.totalorder %s29, 0
      %p111 = por %p109, %p110
      %p112 = scmp.ne.s32.totalorder %s100, %s101
      %p113 = scmp.eq.s32.totalorder %s30, 7
      %p114 = por %p112, %p113
      %p116 = scmp.ne.s32.totalorder %s101, %s115
      %p117 = scmp.eq.s32.totalorder %s30, 0
      %p118 = por %p116, %p117
      %s120 = sadd.s32 %s119, 1
      %p123 = scmp.eq.s32.totalorder %s24, 7
      %p124 = scmp.ne.s32.totalorder %s119, %s121
      %p125 = scmp.eq.s32.totalorder %s24, 0
      %p126 = por %p124, %p125
      %p127 = scmp.ne.s32.totalorder %s119, %s121
      %p128 = scmp.eq.s32.totalorder %s29, 7
      %p129 = por %p127, %p128
      %p130 = scmp.ne.s32.totalorder %s121, %s122
      %p131 = scmp.eq.s32.totalorder %s29, 0
      %p132 = por %p130, %p131
      %p133 = scmp.ne.s32.totalorder %s121, %s122
      %p134 = scmp.eq.s32.totalorder %s30, 7
      %p135 = por %p133, %p134
      %p137 = scmp.ne.s32.totalorder %s122, %s136
      %p138 = scmp.eq.s32.totalorder %s30, 0
      %p139 = por %p137, %p138
      %s141 = sadd.s32 %s140, 1
      %p144 = scmp.eq.s32.totalorder %s24, 7
      %p145 = scmp.ne.s32.totalorder %s140, %s142
      %p146 = scmp.eq.s32.totalorder %s24, 0
      %p147 = por %p145, %p146
      %p148 = scmp.ne.s32.totalorder %s140, %s142
      %p149 = scmp.eq.s32.totalorder %s29, 7
      %p150 = por %p148, %p149
      %p151 = scmp.ne.s32.totalorder %s142, %s143
      %p152 = scmp.eq.s32.totalorder %s29, 0
      %p153 = por %p151, %p152
      %p154 = scmp.ne.s32.totalorder %s142, %s143
      %p155 = scmp.eq.s32.totalorder %s30, 7
      %p156 = por %p154, %p155
      %p158 = scmp.ne.s32.totalorder %s143, %s157
      %p159 = scmp.eq.s32.totalorder %s30, 0
      %p160 = por %p158, %p159
      %s162 = sadd.s32 %s161, 1
      %p165 = scmp.eq.s32.totalorder %s24, 7
      %p166 = scmp.ne.s32.totalorder %s161, %s163
      %p167 = scmp.eq.s32.totalorder %s24, 0
      %p168 = por %p166, %p167
      %p169 = scmp.ne.s32.totalorder %s161, %s163
      %p170 = scmp.eq.s32.totalorder %s29, 7
      %p171 = por %p169, %p170
      %p172 = scmp.ne.s32.totalorder %s163, %s164
      %p173 = scmp.eq.s32.totalorder %s29, 0
      %p174 = por %p172, %p173
      %p175 = scmp.ne.s32.totalorder %s163, %s164
      %p176 = scmp.eq.s32.totalorder %s30, 7
      %p177 = por %p175, %p176
      %p179 = scmp.ne.s32.totalorder %s164, %s178
      %p180 = scmp.eq.s32.totalorder %s30, 0
      %p181 = por %p179, %p180
      %s183 = sadd.s32 %s182, 1
      %p186 = scmp.eq.s32.totalorder %s24, 7
      %p187 = scmp.ne.s32.totalorder %s182, %s184
      %p188 = scmp.eq.s32.totalorder %s24, 0
      %p189 = por %p187, %p188
      %p190 = scmp.ne.s32.totalorder %s182, %s184
      %p191 = scmp.eq.s32.totalorder %s29, 7
      %p192 = por %p190, %p191
      %p193 = scmp.ne.s32.totalorder %s184, %s185
      %p194 = scmp.eq.s32.totalorder %s29, 0
      %p195 = por %p193, %p194
      %p196 = scmp.ne.s32.totalorder %s184, %s185
      %p197 = scmp.eq.s32.totalorder %s30, 7
      %p198 = por %p196, %p197
      %p200 = scmp.ne.s32.totalorder %s185, %s199
      %p201 = scmp.eq.s32.totalorder %s30, 0
      %p202 = por %p200, %p201
      %s204 = sadd.s32 %s203, 1
      %p207 = scmp.eq.s32.totalorder %s24, 7
      %p208 = scmp.ne.s32.totalorder %s203, %s205
      %p209 = scmp.eq.s32.totalorder %s24, 0
      %p210 = por %p208, %p209
      %p211 = scmp.ne.s32.totalorder %s203, %s205
      %p212 = scmp.eq.s32.totalorder %s29, 7
      %p213 = por %p211, %p212
      %p214 = scmp.ne.s32.totalorder %s205, %s206
      %p215 = scmp.eq.s32.totalorder %s29, 0
      %p216 = por %p214, %p215
      %p217 = scmp.ne.s32.totalorder %s205, %s206
      %p218 = scmp.eq.s32.totalorder %s30, 7
      %p219 = por %p217, %p218
      %p221 = scmp.ne.s32.totalorder %s206, %s220
      %p222 = scmp.eq.s32.totalorder %s30, 0
      %p223 = por %p221, %p222
      %s225 = sadd.s32 %s224, 1
      %p228 = scmp.eq.s32.totalorder %s24, 7
      %p229 = scmp.ne.s32.totalorder %s224, %s226
      %p230 = scmp.eq.s32.totalorder %s24, 0
      %p231 = por %p229, %p230
      %p232 = scmp.ne.s32.totalorder %s224, %s226
      %p233 = scmp.eq.s32.totalorder %s29, 7
      %p234 = por %p232, %p233
      %p235 = scmp.ne.s32.totalorder %s226, %s227
      %p236 = scmp.eq.s32.totalorder %s29, 0
      %p237 = por %p235, %p236
      %p238 = scmp.ne.s32.totalorder %s226, %s227
      %p239 = scmp.eq.s32.totalorder %s30, 7
      %p240 = por %p238, %p239
      %p242 = scmp.ne.s32.totalorder %s227, %s241
      %p243 = scmp.eq.s32.totalorder %s30, 0
      %p244 = por %p242, %p243
      %s246 = sadd.s32 %s245, 1
      %p249 = scmp.eq.s32.totalorder %s24, 7
      %p250 = scmp.ne.s32.totalorder %s245, %s247
      %p251 = scmp.eq.s32.totalorder %s24, 0
      %p252 = por %p250, %p251
      %p253 = scmp.ne.s32.totalorder %s245, %s247
      %p254 = scmp.eq.s32.totalorder %s29, 7
      %p255 = por %p253, %p254
      %p256 = scmp.ne.s32.totalorder %s247, %s248
      %p257 = scmp.eq.s32.totalorder %s29, 0
      %p258 = por %p256, %p257
      %p259 = scmp.ne.s32.totalorder %s247, %s248
      %p260 = scmp.eq.s32.totalorder %s30, 7
      %p261 = por %p259, %p260
      %p263 = scmp.ne.s32.totalorder %s248, %s262
      %p264 = scmp.eq.s32.totalorder %s30, 0
      %p265 = por %p263, %p264
      %s267 = sadd.s32 %s266, 1
      %p270 = scmp.eq.s32.totalorder %s24, 7
      %p271 = scmp.ne.s32.totalorder %s266, %s268
      %p272 = scmp.eq.s32.totalorder %s24, 0
      %p273 = por %p271, %p272
      %p274 = scmp.ne.s32.totalorder %s266, %s268
      %p275 = scmp.eq.s32.totalorder %s29, 7
      %p276 = por %p274, %p275
      %p277 = scmp.ne.s32.totalorder %s268, %s269
      %p278 = scmp.eq.s32.totalorder %s29, 0
      %p279 = por %p277, %p278
      %p280 = scmp.ne.s32.totalorder %s268, %s269
      %p281 = scmp.eq.s32.totalorder %s30, 7
      %p282 = por %p280, %p281
      %p284 = scmp.ne.s32.totalorder %s269, %s283
      %p285 = scmp.eq.s32.totalorder %s30, 0
      %p286 = por %p284, %p285
      %s288 = sadd.s32 %s287, 1
      %p291 = scmp.eq.s32.totalorder %s24, 7
      %p292 = scmp.ne.s32.totalorder %s287, %s289
      %p293 = scmp.eq.s32.totalorder %s24, 0
      %p294 = por %p292, %p293
      %p295 = scmp.ne.s32.totalorder %s287, %s289
      %p296 = scmp.eq.s32.totalorder %s29, 7
      %p297 = por %p295, %p296
      %p298 = scmp.ne.s32.totalorder %s289, %s290
      %p299 = scmp.eq.s32.totalorder %s29, 0
      %p300 = por %p298, %p299
      %p301 = scmp.ne.s32.totalorder %s289, %s290
      %p302 = scmp.eq.s32.totalorder %s30, 7
      %p303 = por %p301, %p302
      %p305 = scmp.ne.s32.totalorder %s290, %s304
      %p306 = scmp.eq.s32.totalorder %s30, 0
      %p307 = por %p305, %p306
      %s309 = sadd.s32 %s308, 1
      %p312 = scmp.eq.s32.totalorder %s24, 7
      %p313 = scmp.ne.s32.totalorder %s308, %s310
      %p314 = scmp.eq.s32.totalorder %s24, 0
      %p315 = por %p313, %p314
      %p316 = scmp.ne.s32.totalorder %s308, %s310
      %p317 = scmp.eq.s32.totalorder %s29, 7
      %p318 = por %p316, %p317
      %p319 = scmp.ne.s32.totalorder %s310, %s311
      %p320 = scmp.eq.s32.totalorder %s29, 0
      %p321 = por %p319, %p320
      %p322 = scmp.ne.s32.totalorder %s310, %s311
      %p323 = scmp.eq.s32.totalorder %s30, 7
      %p324 = por %p322, %p323
      %p326 = scmp.ne.s32.totalorder %s311, %s325
      %p327 = scmp.eq.s32.totalorder %s30, 0
      %p328 = por %p326, %p327
      %s330 = sadd.s32 %s329, 1
      %p333 = scmp.eq.s32.totalorder %s24, 7
      %p334 = scmp.ne.s32.totalorder %s329, %s331
      %p335 = scmp.eq.s32.totalorder %s24, 0
      %p336 = por %p334, %p335
      %p337 = scmp.ne.s32.totalorder %s329, %s331
      %p338 = scmp.eq.s32.totalorder %s29, 7
      %p339 = por %p337, %p338
      %p340 = scmp.ne.s32.totalorder %s331, %s332
      %p341 = scmp.eq.s32.totalorder %s29, 0
      %p342 = por %p340, %p341
      %p343 = scmp.ne.s32.totalorder %s331, %s332
      %p344 = scmp.eq.s32.totalorder %s30, 7
      %p345 = por %p343, %p344
      %p347 = scmp.ne.s32.totalorder %s332, %s346
      %p348 = scmp.eq.s32.totalorder %s30, 0
      %p349 = por %p347, %p348
      %s351 = sadd.s32 %s350, 1
      %p354 = scmp.eq.s32.totalorder %s24, 7
      %p355 = scmp.ne.s32.totalorder %s350, %s352
      %p356 = scmp.eq.s32.totalorder %s24, 0
      %p357 = por %p355, %p356
      %p358 = scmp.ne.s32.totalorder %s350, %s352
      %p359 = scmp.eq.s32.totalorder %s29, 7
      %p360 = por %p358, %p359
      %p361 = scmp.ne.s32.totalorder %s352, %s353
      %p362 = scmp.eq.s32.totalorder %s29, 0
      %p363 = por %p361, %p362
      %p364 = scmp.ne.s32.totalorder %s352, %s353
      %p365 = scmp.eq.s32.totalorder %s30, 7
      %p366 = por %p364, %p365
      %p368 = scmp.ne.s32.totalorder %s353, %s367
      %p369 = scmp.eq.s32.totalorder %s30, 0
      %p370 = por %p368, %p369
      %s371 = ssub.s32 %s31, %s43
      %p372 = scmp.eq.s32.totalorder %s371, 0
      %s374 = sadd.s32 %s373, 1
      %s375 = scalar_select %p372, %s373, %s374
      %p378 = pneg %p372
      %p379 = scmp.eq.s32.totalorder %s24, 7
      %p380 = por %p378, %p379
      %p381 = scmp.ne.s32.totalorder %s373, %s376
      %p382 = scmp.eq.s32.totalorder %s24, 0
      %p383 = por %p381, %p382
      %p384 = scmp.ne.s32.totalorder %s373, %s376
      %p385 = scmp.eq.s32.totalorder %s29, 7
      %p386 = por %p384, %p385
      %p387 = scmp.ne.s32.totalorder %s376, %s377
      %p388 = scmp.eq.s32.totalorder %s29, 0
      %p389 = por %p387, %p388
      %p390 = scmp.ne.s32.totalorder %s376, %s377
      %p391 = scmp.eq.s32.totalorder %s30, 7
      %p392 = por %p390, %p391
      %p394 = scmp.ne.s32.totalorder %s377, %s393
      %p395 = scmp.eq.s32.totalorder %s30, 0
      %p396 = por %p394, %p395
      %p397 = scmp.le.s32.totalorder 1, %s24
      %p398 = scmp.lt.s32.totalorder %s24, 9
      %p399 = pnand %p397, %p398
      %p400 = pneg %p399
      // Predicated region
      $region9: #{tpu_custom_call.1} parent=5 // pred_check
        _
      $region10: #{tpu_custom_call.1} parent=5 // pred_check_branch
        %402 = sbr.rel (%p399) target = $region12
      $region11: #{tpu_custom_call.1} parent=5 // pred_region
        %s403 = ssub.s32 %s24, 1
        // Predicated region
        $region13: #{tpu_custom_call.1} parent=11 // pred_check
          %p404 = pneg %p111
        $region14: #{tpu_custom_call.1} parent=11 // pred_check_branch
          %406 = sbr.rel (%p404) target = $region16
        $region15: #{tpu_custom_call.1} parent=11 // pred_region
          _
        $region16: #{tpu_custom_call.1} parent=11 // pred_fallthru
          _
        // Predicated region
        $region17: #{tpu_custom_call.1} parent=11 // pred_check
          %p407 = pneg %p132
        $region18: #{tpu_custom_call.1} parent=11 // pred_check_branch
          %409 = sbr.rel (%p407) target = $region20
        $region19: #{tpu_custom_call.1} parent=11 // pred_region
          _
        $region20: #{tpu_custom_call.1} parent=11 // pred_fallthru
          _
        // Predicated region
        $region21: #{tpu_custom_call.1} parent=11 // pred_check
          %p410 = pneg %p153
        $region22: #{tpu_custom_call.1} parent=11 // pred_check_branch
          %412 = sbr.rel (%p410) target = $region24
        $region23: #{tpu_custom_call.1} parent=11 // pred_region
          _
        $region24: #{tpu_custom_call.1} parent=11 // pred_fallthru
          _
        // Predicated region
        $region25: #{tpu_custom_call.1} parent=11 // pred_check
          %p413 = pneg %p174
        $region26: #{tpu_custom_call.1} parent=11 // pred_check_branch
          %415 = sbr.rel (%p413) target = $region28
        $region27: #{tpu_custom_call.1} parent=11 // pred_region
          _
        $region28: #{tpu_custom_call.1} parent=11 // pred_fallthru
          _
        // Predicated region
        $region29: #{tpu_custom_call.1} parent=11 // pred_check
          %p416 = pneg %p195
        $region30: #{tpu_custom_call.1} parent=11 // pred_check_branch
          %418 = sbr.rel (%p416) target = $region32
        $region31: #{tpu_custom_call.1} parent=11 // pred_region
          _
        $region32: #{tpu_custom_call.1} parent=11 // pred_fallthru
          _
        // Predicated region
        $region33: #{tpu_custom_call.1} parent=11 // pred_check
          %p419 = pneg %p216
        $region34: #{tpu_custom_call.1} parent=11 // pred_check_branch
          %421 = sbr.rel (%p419) target = $region36
        $region35: #{tpu_custom_call.1} parent=11 // pred_region
          _
        $region36: #{tpu_custom_call.1} parent=11 // pred_fallthru
          _
        // Predicated region
        $region37: #{tpu_custom_call.1} parent=11 // pred_check
          %p422 = pneg %p237
        $region38: #{tpu_custom_call.1} parent=11 // pred_check_branch
          %424 = sbr.rel (%p422) target = $region40
        $region39: #{tpu_custom_call.1} parent=11 // pred_region
          _
        $region40: #{tpu_custom_call.1} parent=11 // pred_fallthru
          _
        // Predicated region
        $region41: #{tpu_custom_call.1} parent=11 // pred_check
          %p425 = pneg %p258
        $region42: #{tpu_custom_call.1} parent=11 // pred_check_branch
          %427 = sbr.rel (%p425) target = $region44
        $region43: #{tpu_custom_call.1} parent=11 // pred_region
          _
        $region44: #{tpu_custom_call.1} parent=11 // pred_fallthru
          _
        // Predicated region
        $region45: #{tpu_custom_call.1} parent=11 // pred_check
          %p428 = pneg %p279
        $region46: #{tpu_custom_call.1} parent=11 // pred_check_branch
          %430 = sbr.rel (%p428) target = $region48
        $region47: #{tpu_custom_call.1} parent=11 // pred_region
          _
        $region48: #{tpu_custom_call.1} parent=11 // pred_fallthru
          _
        // Predicated region
        $region49: #{tpu_custom_call.1} parent=11 // pred_check
          %p431 = pneg %p300
        $region50: #{tpu_custom_call.1} parent=11 // pred_check_branch
          %433 = sbr.rel (%p431) target = $region52
        $region51: #{tpu_custom_call.1} parent=11 // pred_region
          _
        $region52: #{tpu_custom_call.1} parent=11 // pred_fallthru
          _
        // Predicated region
        $region53: #{tpu_custom_call.1} parent=11 // pred_check
          %p434 = pneg %p321
        $region54: #{tpu_custom_call.1} parent=11 // pred_check_branch
          %436 = sbr.rel (%p434) target = $region56
        $region55: #{tpu_custom_call.1} parent=11 // pred_region
          _
        $region56: #{tpu_custom_call.1} parent=11 // pred_fallthru
          _
        // Predicated region
        $region57: #{tpu_custom_call.1} parent=11 // pred_check
          %p437 = pneg %p342
        $region58: #{tpu_custom_call.1} parent=11 // pred_check_branch
          %439 = sbr.rel (%p437) target = $region60
        $region59: #{tpu_custom_call.1} parent=11 // pred_region
          _
        $region60: #{tpu_custom_call.1} parent=11 // pred_fallthru
          _
        // Predicated region
        $region61: #{tpu_custom_call.1} parent=11 // pred_check
          %p440 = pneg %p363
        $region62: #{tpu_custom_call.1} parent=11 // pred_check_branch
          %442 = sbr.rel (%p440) target = $region64
        $region63: #{tpu_custom_call.1} parent=11 // pred_region
          _
        $region64: #{tpu_custom_call.1} parent=11 // pred_fallthru
          _
      $region12: #{tpu_custom_call.1} parent=5 // pred_fallthru
        _
      %p443 = scmp.lt.s32.totalorder %s24, 8
      // Predicated region
      $region65: #{tpu_custom_call.1} parent=5 // pred_check
        %p444 = pneg %p443
      $region66: #{tpu_custom_call.1} parent=5 // pred_check_branch
        %446 = sbr.rel (%p444) target = $region68
      $region67: #{tpu_custom_call.1} parent=5 // pred_region
        // Predicated region
        $region69: #{tpu_custom_call.1} parent=67 // pred_check
          %p447 = pneg %p58
        $region70: #{tpu_custom_call.1} parent=67 // pred_check_branch
          %449 = sbr.rel (%p447) target = $region72
        $region71: #{tpu_custom_call.1} parent=67 // pred_region
          %p450 = scmp.lt.s32.totalorder %s31, 1
          %s451 = scalar_select %p450, %s31, 1
          %p452 = scmp.lt.s32.totalorder %s32, 3
          %s453 = scalar_select %p452, %s32, 3
          %s454 = smul.addr %s451, 4
          %s455 = sadd.s32 %s453, %s454
          %s456 = smul.addr %s455, 4
          %s457 = scalar_lea.vmem %s0, %s456
        $region72: #{tpu_custom_call.1} parent=67 // pred_fallthru
          _
        // Predicated region
        $region73: #{tpu_custom_call.1} parent=67 // pred_check
          %p458 = pneg %p84
        $region74: #{tpu_custom_call.1} parent=67 // pred_check_branch
          %460 = sbr.rel (%p458) target = $region76
        $region75: #{tpu_custom_call.1} parent=67 // pred_region
          %p461 = scmp.lt.s32.totalorder %s31, 1
          %s462 = scalar_select %p461, %s31, 1
          %s463 = scalar_lea.vmem %s1, %s462
        $region76: #{tpu_custom_call.1} parent=67 // pred_fallthru
          _
      $region68: #{tpu_custom_call.1} parent=5 // pred_fallthru
        _
      %p464 = scmp.le.s32.totalorder 1, %s24
      %p465 = scmp.lt.s32.totalorder %s24, 9
      %p466 = pnand %p464, %p465
      %p467 = pneg %p466
      // Predicated region
      $region77: #{tpu_custom_call.1} parent=5 // pred_check
        _
      $region78: #{tpu_custom_call.1} parent=5 // pred_check_branch
        %469 = sbr.rel (%p466) target = $region80
      $region79: #{tpu_custom_call.1} parent=5 // pred_region
        %s470 = ssub.s32 %s24, 1
        %p471 = scmp.lt.s32.totalorder %s33, 1
        %s472 = scalar_select %p471, %s33, 1
        %p473 = scmp.lt.s32.totalorder %s34, 3
        %s474 = scalar_select %p473, %s34, 3
        %s475 = smul.addr %s472, 4
        %s476 = sadd.s32 %s474, %s475
        %s477 = smul.addr %s476, 4
        %s478 = scalar_lea.vmem %s0, %s477
        %p479 = pneg %p64
        %p480 = pneg %p61
        %p481 = scmp.lt.s32.totalorder %s33, 1
        %s482 = scalar_select %p481, %s33, 1
        %s483 = scalar_lea.vmem %s1, %s482
        %p484 = pneg %p90
        %p485 = pneg %p87
        %p486 = pneg %p111
        %p487 = pneg %p108
        %p488 = pneg %p132
        %p489 = pneg %p129
        %p490 = pneg %p153
        %p491 = pneg %p150
        %p492 = pneg %p174
        %p493 = pneg %p171
        %p494 = pneg %p195
        %p495 = pneg %p192
        %p496 = pneg %p216
        %p497 = pneg %p213
        %p498 = pneg %p237
        %p499 = pneg %p234
        %p500 = pneg %p258
        %p501 = pneg %p255
        %p502 = pneg %p279
        %p503 = pneg %p276
        %p504 = pneg %p300
        %p505 = pneg %p297
        %p506 = pneg %p321
        %p507 = pneg %p318
        %p508 = pneg %p342
        %p509 = pneg %p339
        %p510 = pneg %p363
        %p511 = pneg %p360
        %p512 = pneg %p389
        %p513 = pneg %p386
        %s514 = sand.u32 %s376, 1
        %s515 = scalar_lea.sflag [#allocation4], %s514
        %s516 = sand.u32 %s376, 1
        %s517 = scalar_lea.vmem [#allocation3], %s516
        %p518 = scmp.lt.s32.totalorder %s33, 1
        %s519 = scalar_select %p518, %s33, 1
        %p520 = scmp.lt.s32.totalorder %s34, 3
        %s521 = scalar_select %p520, %s34, 3
        %s522 = smul.addr %s519, 4
        %s523 = sadd.s32 %s521, %s522
        %s524 = smul.addr %s523, 4
        %s525 = scalar_lea.vmem %s0, %s524
        %p526 = scmp.lt.s32.totalorder %s33, 1
        %s527 = scalar_select %p526, %s33, 1
        %s528 = scalar_lea.vmem %s1, %s527
        %v530 = vld [vmem:[%s525] sm:$0x7]
        %v531 = vld [vmem:[%s2] sm:$0xff]
        %v532 = vld [vmem:[%s2 + $0x8] sm:$0xff]
        %v533 = vld [vmem:[%s2 + $0x10] sm:$0xff]
        %v534 = vld [vmem:[%s2 + $0x18] sm:$0xff]
        %v535 = vld [vmem:[%s2 + $0x20] sm:$0xff]
        %v536 = vld [vmem:[%s2 + $0x28] sm:$0xff]
        %v537 = vld [vmem:[%s2 + $0x30] sm:$0xff]
        %v538 = vld [vmem:[%s2 + $0x38] sm:$0xff]
        %v539 = vld [vmem:[%s2 + $0x40] sm:$0xff]
        %v540 = vld [vmem:[%s2 + $0x48] sm:$0xff]
        %v541 = vld [vmem:[%s2 + $0x50] sm:$0xff]
        %v542 = vld [vmem:[%s2 + $0x58] sm:$0xff]
        %v543 = vld [vmem:[%s2 + $0x60] sm:$0xff]
        %v544 = vld [vmem:[%s2 + $0x68] sm:$0xff]
        %v545 = vld [vmem:[%s2 + $0x70] sm:$0xff]
        %v546 = vld [vmem:[%s2 + $0x78] sm:$0xff]
        %548 = vset.pattern.permute.xlu0 0
        %549 = vperm.xlu0 %548, %v531
        %v550 = vpop.permute.xlu0 %549
        %553 = vset.pattern.permute.xlu0 0
        %554 = vperm.xlu0 %553, %v532
        %v555 = vpop.permute.xlu0 %554
        %558 = vset.pattern.permute.xlu0 0
        %559 = vperm.xlu0 %558, %v533
        %v560 = vpop.permute.xlu0 %559
        %563 = vset.pattern.permute.xlu0 0
        %564 = vperm.xlu0 %563, %v534
        %v565 = vpop.permute.xlu0 %564
        %568 = vset.pattern.permute.xlu0 0
        %569 = vperm.xlu0 %568, %v535
        %v570 = vpop.permute.xlu0 %569
        %573 = vset.pattern.permute.xlu0 0
        %574 = vperm.xlu0 %573, %v536
        %v575 = vpop.permute.xlu0 %574
        %578 = vset.pattern.permute.xlu0 0
        %579 = vperm.xlu0 %578, %v537
        %v580 = vpop.permute.xlu0 %579
        %583 = vset.pattern.permute.xlu0 0
        %584 = vperm.xlu0 %583, %v538
        %v585 = vpop.permute.xlu0 %584
        %588 = vset.pattern.permute.xlu0 0
        %589 = vperm.xlu0 %588, %v539
        %v590 = vpop.permute.xlu0 %589
        %593 = vset.pattern.permute.xlu0 0
        %594 = vperm.xlu0 %593, %v540
        %v595 = vpop.permute.xlu0 %594
        %598 = vset.pattern.permute.xlu0 0
        %599 = vperm.xlu0 %598, %v541
        %v600 = vpop.permute.xlu0 %599
        %603 = vset.pattern.permute.xlu0 0
        %604 = vperm.xlu0 %603, %v542
        %v605 = vpop.permute.xlu0 %604
        %608 = vset.pattern.permute.xlu0 0
        %609 = vperm.xlu0 %608, %v543
        %v610 = vpop.permute.xlu0 %609
        %613 = vset.pattern.permute.xlu0 0
        %614 = vperm.xlu0 %613, %v544
        %v615 = vpop.permute.xlu0 %614
        %618 = vset.pattern.permute.xlu0 0
        %619 = vperm.xlu0 %618, %v545
        %v620 = vpop.permute.xlu0 %619
        %623 = vset.pattern.permute.xlu0 0
        %624 = vperm.xlu0 %623, %v546
        %v625 = vpop.permute.xlu0 %624
        %v627 = vlaneseq
        %v628 = vshrl.u32 %v627, 7
        %v629 = vsub.s32 0, %v628
        %v630 = vrot.slane %v530, %v629
        %v631 = vmul.f32 %v550, %v630
        %v632 = vmul.f32 %v555, %v630
        %v633 = vmul.f32 %v560, %v630
        %v634 = vmul.f32 %v565, %v630
        %v635 = vmul.f32 %v570, %v630
        %v636 = vmul.f32 %v575, %v630
        %v637 = vmul.f32 %v580, %v630
        %v638 = vmul.f32 %v585, %v630
        %v639 = vmul.f32 %v590, %v630
        %v640 = vmul.f32 %v595, %v630
        %v641 = vmul.f32 %v600, %v630
        %v642 = vmul.f32 %v605, %v630
        %v643 = vmul.f32 %v610, %v630
        %v644 = vmul.f32 %v615, %v630
        %v645 = vmul.f32 %v620, %v630
        %v646 = vmul.f32 %v625, %v630
        %647 = vset.pattern.permute.xlu0 1
        %648 = vperm.xlu0 %647, %v531
        %v649 = vpop.permute.xlu0 %648
        %651 = vset.pattern.permute.xlu0 1
        %652 = vperm.xlu0 %651, %v532
        %v653 = vpop.permute.xlu0 %652
        %655 = vset.pattern.permute.xlu0 1
        %656 = vperm.xlu0 %655, %v533
        %v657 = vpop.permute.xlu0 %656
        %659 = vset.pattern.permute.xlu0 1
        %660 = vperm.xlu0 %659, %v534
        %v661 = vpop.permute.xlu0 %660
        %663 = vset.pattern.permute.xlu0 1
        %664 = vperm.xlu0 %663, %v535
        %v665 = vpop.permute.xlu0 %664
        %667 = vset.pattern.permute.xlu0 1
        %668 = vperm.xlu0 %667, %v536
        %v669 = vpop.permute.xlu0 %668
        %671 = vset.pattern.permute.xlu0 1
        %672 = vperm.xlu0 %671, %v537
        %v673 = vpop.permute.xlu0 %672
        %675 = vset.pattern.permute.xlu0 1
        %676 = vperm.xlu0 %675, %v538
        %v677 = vpop.permute.xlu0 %676
        %679 = vset.pattern.permute.xlu0 1
        %680 = vperm.xlu0 %679, %v539
        %v681 = vpop.permute.xlu0 %680
        %683 = vset.pattern.permute.xlu0 1
        %684 = vperm.xlu0 %683, %v540
        %v685 = vpop.permute.xlu0 %684
        %687 = vset.pattern.permute.xlu0 1
        %688 = vperm.xlu0 %687, %v541
        %v689 = vpop.permute.xlu0 %688
        %691 = vset.pattern.permute.xlu0 1
        %692 = vperm.xlu0 %691, %v542
        %v693 = vpop.permute.xlu0 %692
        %695 = vset.pattern.permute.xlu0 1
        %696 = vperm.xlu0 %695, %v543
        %v697 = vpop.permute.xlu0 %696
        %699 = vset.pattern.permute.xlu0 1
        %700 = vperm.xlu0 %699, %v544
        %v701 = vpop.permute.xlu0 %700
        %703 = vset.pattern.permute.xlu0 1
        %704 = vperm.xlu0 %703, %v545
        %v705 = vpop.permute.xlu0 %704
        %707 = vset.pattern.permute.xlu0 1
        %708 = vperm.xlu0 %707, %v546
        %v709 = vpop.permute.xlu0 %708
        %v711 = vlaneseq
        %v712 = vshrl.u32 %v711, 7
        %v713 = vsub.s32 1, %v712
        %v714 = vrot.slane %v530, %v713
        %v715 = vmul.f32 %v649, %v714
        %v716 = vmul.f32 %v653, %v714
        %v717 = vmul.f32 %v657, %v714
        %v718 = vmul.f32 %v661, %v714
        %v719 = vmul.f32 %v665, %v714
        %v720 = vmul.f32 %v669, %v714
        %v721 = vmul.f32 %v673, %v714
        %v722 = vmul.f32 %v677, %v714
        %v723 = vmul.f32 %v681, %v714
        %v724 = vmul.f32 %v685, %v714
        %v725 = vmul.f32 %v689, %v714
        %v726 = vmul.f32 %v693, %v714
        %v727 = vmul.f32 %v697, %v714
        %v728 = vmul.f32 %v701, %v714
        %v729 = vmul.f32 %v705, %v714
        %v730 = vmul.f32 %v709, %v714
        %v731 = vadd.f32 %v631, %v715
        %v732 = vadd.f32 %v632, %v716
        %v733 = vadd.f32 %v633, %v717
        %v734 = vadd.f32 %v634, %v718
        %v735 = vadd.f32 %v635, %v719
        %v736 = vadd.f32 %v636, %v720
        %v737 = vadd.f32 %v637, %v721
        %v738 = vadd.f32 %v638, %v722
        %v739 = vadd.f32 %v639, %v723
        %v740 = vadd.f32 %v640, %v724
        %v741 = vadd.f32 %v641, %v725
        %v742 = vadd.f32 %v642, %v726
        %v743 = vadd.f32 %v643, %v727
        %v744 = vadd.f32 %v644, %v728
        %v745 = vadd.f32 %v645, %v729
        %v746 = vadd.f32 %v646, %v730
        %747 = vset.pattern.permute.xlu0 2
        %748 = vperm.xlu0 %747, %v531
        %v749 = vpop.permute.xlu0 %748
        %751 = vset.pattern.permute.xlu0 2
        %752 = vperm.xlu0 %751, %v532
        %v753 = vpop.permute.xlu0 %752
        %755 = vset.pattern.permute.xlu0 2
        %756 = vperm.xlu0 %755, %v533
        %v757 = vpop.permute.xlu0 %756
        %759 = vset.pattern.permute.xlu0 2
        %760 = vperm.xlu0 %759, %v534
        %v761 = vpop.permute.xlu0 %760
        %763 = vset.pattern.permute.xlu0 2
        %764 = vperm.xlu0 %763, %v535
        %v765 = vpop.permute.xlu0 %764
        %767 = vset.pattern.permute.xlu0 2
        %768 = vperm.xlu0 %767, %v536
        %v769 = vpop.permute.xlu0 %768
        %771 = vset.pattern.permute.xlu0 2
        %772 = vperm.xlu0 %771, %v537
        %v773 = vpop.permute.xlu0 %772
        %775 = vset.pattern.permute.xlu0 2
        %776 = vperm.xlu0 %775, %v538
        %v777 = vpop.permute.xlu0 %776
        %779 = vset.pattern.permute.xlu0 2
        %780 = vperm.xlu0 %779, %v539
        %v781 = vpop.permute.xlu0 %780
        %783 = vset.pattern.permute.xlu0 2
        %784 = vperm.xlu0 %783, %v540
        %v785 = vpop.permute.xlu0 %784
        %787 = vset.pattern.permute.xlu0 2
        %788 = vperm.xlu0 %787, %v541
        %v789 = vpop.permute.xlu0 %788
        %791 = vset.pattern.permute.xlu0 2
        %792 = vperm.xlu0 %791, %v542
        %v793 = vpop.permute.xlu0 %792
        %795 = vset.pattern.permute.xlu0 2
        %796 = vperm.xlu0 %795, %v543
        %v797 = vpop.permute.xlu0 %796
        %799 = vset.pattern.permute.xlu0 2
        %800 = vperm.xlu0 %799, %v544
        %v801 = vpop.permute.xlu0 %800
        %803 = vset.pattern.permute.xlu0 2
        %804 = vperm.xlu0 %803, %v545
        %v805 = vpop.permute.xlu0 %804
        %807 = vset.pattern.permute.xlu0 2
        %808 = vperm.xlu0 %807, %v546
        %v809 = vpop.permute.xlu0 %808
        %v811 = vlaneseq
        %v812 = vshrl.u32 %v811, 7
        %v813 = vsub.s32 2, %v812
        %v814 = vrot.slane %v530, %v813
        %v815 = vmul.f32 %v749, %v814
        %v816 = vmul.f32 %v753, %v814
        %v817 = vmul.f32 %v757, %v814
        %v818 = vmul.f32 %v761, %v814
        %v819 = vmul.f32 %v765, %v814
        %v820 = vmul.f32 %v769, %v814
        %v821 = vmul.f32 %v773, %v814
        %v822 = vmul.f32 %v777, %v814
        %v823 = vmul.f32 %v781, %v814
        %v824 = vmul.f32 %v785, %v814
        %v825 = vmul.f32 %v789, %v814
        %v826 = vmul.f32 %v793, %v814
        %v827 = vmul.f32 %v797, %v814
        %v828 = vmul.f32 %v801, %v814
        %v829 = vmul.f32 %v805, %v814
        %v830 = vmul.f32 %v809, %v814
        %v831 = vadd.f32 %v731, %v815
        %v832 = vadd.f32 %v732, %v816
        %v833 = vadd.f32 %v733, %v817
        %v834 = vadd.f32 %v734, %v818
        %v835 = vadd.f32 %v735, %v819
        %v836 = vadd.f32 %v736, %v820
        %v837 = vadd.f32 %v737, %v821
        %v838 = vadd.f32 %v738, %v822
        %v839 = vadd.f32 %v739, %v823
        %v840 = vadd.f32 %v740, %v824
        %v841 = vadd.f32 %v741, %v825
        %v842 = vadd.f32 %v742, %v826
        %v843 = vadd.f32 %v743, %v827
        %v844 = vadd.f32 %v744, %v828
        %v845 = vadd.f32 %v745, %v829
        %v846 = vadd.f32 %v746, %v830
        %v847 = vld [vmem:[%s3] sm:$0xff]
        %v848 = vld [vmem:[%s3 + $0x8] sm:$0xff]
        %v849 = vld [vmem:[%s3 + $0x10] sm:$0xff]
        %v850 = vld [vmem:[%s3 + $0x18] sm:$0xff]
        %v851 = vld [vmem:[%s3 + $0x20] sm:$0xff]
        %v852 = vld [vmem:[%s3 + $0x28] sm:$0xff]
        %v853 = vld [vmem:[%s3 + $0x30] sm:$0xff]
        %v854 = vld [vmem:[%s3 + $0x38] sm:$0xff]
        %v855 = vld [vmem:[%s3 + $0x40] sm:$0xff]
        %v856 = vld [vmem:[%s3 + $0x48] sm:$0xff]
        %v857 = vld [vmem:[%s3 + $0x50] sm:$0xff]
        %v858 = vld [vmem:[%s3 + $0x58] sm:$0xff]
        %v859 = vld [vmem:[%s3 + $0x60] sm:$0xff]
        %v860 = vld [vmem:[%s3 + $0x68] sm:$0xff]
        %v861 = vld [vmem:[%s3 + $0x70] sm:$0xff]
        %v862 = vld [vmem:[%s3 + $0x78] sm:$0xff]
        %864 = vset.pattern.permute.xlu0 0
        %865 = vperm.xlu0 %864, %v847
        %v866 = vpop.permute.xlu0 %865
        %869 = vset.pattern.permute.xlu0 0
        %870 = vperm.xlu0 %869, %v848
        %v871 = vpop.permute.xlu0 %870
        %874 = vset.pattern.permute.xlu0 0
        %875 = vperm.xlu0 %874, %v849
        %v876 = vpop.permute.xlu0 %875
        %879 = vset.pattern.permute.xlu0 0
        %880 = vperm.xlu0 %879, %v850
        %v881 = vpop.permute.xlu0 %880
        %884 = vset.pattern.permute.xlu0 0
        %885 = vperm.xlu0 %884, %v851
        %v886 = vpop.permute.xlu0 %885
        %889 = vset.pattern.permute.xlu0 0
        %890 = vperm.xlu0 %889, %v852
        %v891 = vpop.permute.xlu0 %890
        %894 = vset.pattern.permute.xlu0 0
        %895 = vperm.xlu0 %894, %v853
        %v896 = vpop.permute.xlu0 %895
        %899 = vset.pattern.permute.xlu0 0
        %900 = vperm.xlu0 %899, %v854
        %v901 = vpop.permute.xlu0 %900
        %904 = vset.pattern.permute.xlu0 0
        %905 = vperm.xlu0 %904, %v855
        %v906 = vpop.permute.xlu0 %905
        %909 = vset.pattern.permute.xlu0 0
        %910 = vperm.xlu0 %909, %v856
        %v911 = vpop.permute.xlu0 %910
        %914 = vset.pattern.permute.xlu0 0
        %915 = vperm.xlu0 %914, %v857
        %v916 = vpop.permute.xlu0 %915
        %919 = vset.pattern.permute.xlu0 0
        %920 = vperm.xlu0 %919, %v858
        %v921 = vpop.permute.xlu0 %920
        %924 = vset.pattern.permute.xlu0 0
        %925 = vperm.xlu0 %924, %v859
        %v926 = vpop.permute.xlu0 %925
        %929 = vset.pattern.permute.xlu0 0
        %930 = vperm.xlu0 %929, %v860
        %v931 = vpop.permute.xlu0 %930
        %934 = vset.pattern.permute.xlu0 0
        %935 = vperm.xlu0 %934, %v861
        %v936 = vpop.permute.xlu0 %935
        %939 = vset.pattern.permute.xlu0 0
        %940 = vperm.xlu0 %939, %v862
        %v941 = vpop.permute.xlu0 %940
        %v943 = vadd.f32 %v831, %v866
        %v944 = vadd.f32 %v832, %v871
        %v945 = vadd.f32 %v833, %v876
        %v946 = vadd.f32 %v834, %v881
        %v947 = vadd.f32 %v835, %v886
        %v948 = vadd.f32 %v836, %v891
        %v949 = vadd.f32 %v837, %v896
        %v950 = vadd.f32 %v838, %v901
        %v951 = vadd.f32 %v839, %v906
        %v952 = vadd.f32 %v840, %v911
        %v953 = vadd.f32 %v841, %v916
        %v954 = vadd.f32 %v842, %v921
        %v955 = vadd.f32 %v843, %v926
        %v956 = vadd.f32 %v844, %v931
        %v957 = vadd.f32 %v845, %v936
        %v958 = vadd.f32 %v846, %v941
        %v959 = vmax.f32 %v943, 0.0
        %v960 = vmax.f32 %v944, 0.0
        %v961 = vmax.f32 %v945, 0.0
        %v962 = vmax.f32 %v946, 0.0
        %v963 = vmax.f32 %v947, 0.0
        %v964 = vmax.f32 %v948, 0.0
        %v965 = vmax.f32 %v949, 0.0
        %v966 = vmax.f32 %v950, 0.0
        %v967 = vmax.f32 %v951, 0.0
        %v968 = vmax.f32 %v952, 0.0
        %v969 = vmax.f32 %v953, 0.0
        %v970 = vmax.f32 %v954, 0.0
        %v971 = vmax.f32 %v955, 0.0
        %v972 = vmax.f32 %v956, 0.0
        %v973 = vmax.f32 %v957, 0.0
        %v974 = vmax.f32 %v958, 0.0
        %v975 = vld [vmem:[%s4] sm:$0xf]
        %v976 = vld [vmem:[%s4 + $0x4] sm:$0xf]
        %v977 = vld [vmem:[%s4 + $0x8] sm:$0xf]
        %v978 = vld [vmem:[%s4 + $0xc] sm:$0xf]
        %v979 = vld [vmem:[%s4 + $0x10] sm:$0xf]
        %v980 = vld [vmem:[%s4 + $0x14] sm:$0xf]
        %v981 = vld [vmem:[%s4 + $0x18] sm:$0xf]
        %v982 = vld [vmem:[%s4 + $0x1c] sm:$0xf]
        %v983 = vld [vmem:[%s4 + $0x20] sm:$0xf]
        %v984 = vld [vmem:[%s4 + $0x24] sm:$0xf]
        %v985 = vld [vmem:[%s4 + $0x28] sm:$0xf]
        %v986 = vld [vmem:[%s4 + $0x2c] sm:$0xf]
        %v987 = vld [vmem:[%s4 + $0x30] sm:$0xf]
        %v988 = vld [vmem:[%s4 + $0x34] sm:$0xf]
        %v989 = vld [vmem:[%s4 + $0x38] sm:$0xf]
        %v990 = vld [vmem:[%s4 + $0x3c] sm:$0xf]
        %v991 = vpack.c.bf16 %v960, %v959
        %v992 = vpack.c.bf16 %v962, %v961
        %v993 = vpack.c.bf16 %v964, %v963
        %v994 = vpack.c.bf16 %v966, %v965
        %v995 = vpack.c.bf16 %v968, %v967
        %v996 = vpack.c.bf16 %v970, %v969
        %v997 = vpack.c.bf16 %v972, %v971
        %v998 = vpack.c.bf16 %v974, %v973
        %v999 = vld [vmem:[%s5] sm:$0xff]
        %v1000 = vld [vmem:[%s5 + $0x8] sm:$0xff]
        %v1001 = vld [vmem:[%s5 + $0x10] sm:$0xff]
        %v1002 = vld [vmem:[%s5 + $0x18] sm:$0xff]
        %v1003 = vld [vmem:[%s5 + $0x20] sm:$0xff]
        %v1004 = vld [vmem:[%s5 + $0x28] sm:$0xff]
        %v1005 = vld [vmem:[%s5 + $0x30] sm:$0xff]
        %v1006 = vld [vmem:[%s5 + $0x38] sm:$0xff]
        %v1007 = vld [vmem:[%s5 + $0x40] sm:$0xff]
        %v1008 = vld [vmem:[%s5 + $0x48] sm:$0xff]
        %v1009 = vld [vmem:[%s5 + $0x50] sm:$0xff]
        %v1010 = vld [vmem:[%s5 + $0x58] sm:$0xff]
        %v1011 = vld [vmem:[%s5 + $0x60] sm:$0xff]
        %v1012 = vld [vmem:[%s5 + $0x68] sm:$0xff]
        %v1013 = vld [vmem:[%s5 + $0x70] sm:$0xff]
        %v1014 = vld [vmem:[%s5 + $0x78] sm:$0xff]
        %1016 = vset.pattern.permute.xlu0 0
        %1017 = vperm.xlu0 %1016, %v999
        %v1018 = vpop.permute.xlu0 %1017
        %1021 = vset.pattern.permute.xlu0 0
        %1022 = vperm.xlu0 %1021, %v1000
        %v1023 = vpop.permute.xlu0 %1022
        %1026 = vset.pattern.permute.xlu0 0
        %1027 = vperm.xlu0 %1026, %v1001
        %v1028 = vpop.permute.xlu0 %1027
        %1031 = vset.pattern.permute.xlu0 0
        %1032 = vperm.xlu0 %1031, %v1002
        %v1033 = vpop.permute.xlu0 %1032
        %1036 = vset.pattern.permute.xlu0 0
        %1037 = vperm.xlu0 %1036, %v1003
        %v1038 = vpop.permute.xlu0 %1037
        %1041 = vset.pattern.permute.xlu0 0
        %1042 = vperm.xlu0 %1041, %v1004
        %v1043 = vpop.permute.xlu0 %1042
        %1046 = vset.pattern.permute.xlu0 0
        %1047 = vperm.xlu0 %1046, %v1005
        %v1048 = vpop.permute.xlu0 %1047
        %1051 = vset.pattern.permute.xlu0 0
        %1052 = vperm.xlu0 %1051, %v1006
        %v1053 = vpop.permute.xlu0 %1052
        %1056 = vset.pattern.permute.xlu0 0
        %1057 = vperm.xlu0 %1056, %v1007
        %v1058 = vpop.permute.xlu0 %1057
        %1061 = vset.pattern.permute.xlu0 0
        %1062 = vperm.xlu0 %1061, %v1008
        %v1063 = vpop.permute.xlu0 %1062
        %1066 = vset.pattern.permute.xlu0 0
        %1067 = vperm.xlu0 %1066, %v1009
        %v1068 = vpop.permute.xlu0 %1067
        %1071 = vset.pattern.permute.xlu0 0
        %1072 = vperm.xlu0 %1071, %v1010
        %v1073 = vpop.permute.xlu0 %1072
        %1076 = vset.pattern.permute.xlu0 0
        %1077 = vperm.xlu0 %1076, %v1011
        %v1078 = vpop.permute.xlu0 %1077
        %1081 = vset.pattern.permute.xlu0 0
        %1082 = vperm.xlu0 %1081, %v1012
        %v1083 = vpop.permute.xlu0 %1082
        %1086 = vset.pattern.permute.xlu0 0
        %1087 = vperm.xlu0 %1086, %v1013
        %v1088 = vpop.permute.xlu0 %1087
        %1091 = vset.pattern.permute.xlu0 0
        %1092 = vperm.xlu0 %1091, %v1014
        %v1093 = vpop.permute.xlu0 %1092
        %v1111 = vunpack.c.l.b16 %v975
        %v1112 = vunpack.c.l.b16 %v976
        %v1113 = vunpack.c.l.b16 %v977
        %v1114 = vunpack.c.l.b16 %v978
        %v1115 = vunpack.c.l.b16 %v979
        %v1116 = vunpack.c.l.b16 %v980
        %v1117 = vunpack.c.l.b16 %v981
        %v1118 = vunpack.c.l.b16 %v982
        %v1119 = vunpack.c.l.b16 %v983
        %v1120 = vunpack.c.l.b16 %v984
        %v1121 = vunpack.c.l.b16 %v985
        %v1122 = vunpack.c.l.b16 %v986
        %v1123 = vunpack.c.l.b16 %v987
        %v1124 = vunpack.c.l.b16 %v988
        %v1125 = vunpack.c.l.b16 %v989
        %v1126 = vunpack.c.l.b16 %v990
        %v1127 = vpack.c.b16 %v1112, %v1111
        %v1128 = vpack.c.b16 %v1114, %v1113
        %v1129 = vpack.c.b16 %v1116, %v1115
        %v1130 = vpack.c.b16 %v1118, %v1117
        %v1131 = vpack.c.b16 %v1120, %v1119
        %v1132 = vpack.c.b16 %v1122, %v1121
        %v1133 = vpack.c.b16 %v1124, %v1123
        %v1134 = vpack.c.b16 %v1126, %v1125
        %1143 = vmatprep.subr.bf16.mxu0 0
        %1144 = vmatpush1.bf16.msra.mxu0 %v991
        %1145 = vmatprep.subr.bf16.mxu0 0
        %1146 = vmatpush1.bf16.msra.mxu0 %v992
        %1147 = vmatprep.subr.bf16.mxu0 0
        %1148 = vmatpush1.bf16.msra.mxu0 %v993
        %1149 = vmatprep.subr.bf16.mxu0 0
        %1150 = vmatpush1.bf16.msra.mxu0 %v994
        %1151 = vmatprep.subr.bf16.mxu0 0
        %1152 = vmatpush1.bf16.msra.mxu0 %v995
        %1153 = vmatprep.subr.bf16.mxu0 0
        %1154 = vmatpush1.bf16.msra.mxu0 %v996
        %1155 = vmatprep.subr.bf16.mxu0 0
        %1156 = vmatpush1.bf16.msra.mxu0 %v997
        %1157 = vmatprep.subr.bf16.mxu0 0
        %1158 = vmatpush1.bf16.msra.mxu0 %v998
        %1159 = vmatprep.subr.bf16.mxu0 0
        %1160 = vmatpush1.bf16.msra.mxu0 0
        %1161 = vmatprep.subr.bf16.mxu0 0
        %1162 = vmatpush1.bf16.msra.mxu0 0
        %1163 = vmatprep.subr.bf16.mxu0 0
        %1164 = vmatpush1.bf16.msra.mxu0 0
        %1165 = vmatprep.subr.bf16.mxu0 0
        %1166 = vmatpush1.bf16.msra.mxu0 0
        %1167 = vmatprep.subr.bf16.mxu0 0
        %1168 = vmatpush1.bf16.msra.mxu0 0
        %1169 = vmatprep.subr.bf16.mxu0 0
        %1170 = vmatpush1.bf16.msra.mxu0 0
        %1171 = vmatprep.subr.bf16.mxu0 0
        %1172 = vmatpush1.bf16.msra.mxu0 0
        %1173 = vmatprep.subr.bf16.mxu0 0
        %1174 = vmatpush1.bf16.msra.mxu0 0
        %1175 = vmatprep.mubr.bf16.mxu0 0
        %1176 = vmatmul.mubr.bf16.gmra.mrb[0].mxu0 %v1127
        %v1177 = vpop.f32.mrb[0].mxu0
        %v1178 = vadd.f32 %v1018, %v1177
        %v1179 = vpop.f32.mrb[0].mxu0
        %v1180 = vpop.f32.mrb[0].mxu0
        %v1181 = vadd.f32 %v1023, %v1180
        %v1182 = vpop.f32.mrb[0].mxu0
        %1183 = vmatprep.mubr.bf16.mxu0 0
        %1184 = vmatmul.mubr.bf16.gmra.mrb[0].mxu0 %v1128
        %v1185 = vpop.f32.mrb[0].mxu0
        %v1186 = vadd.f32 %v1028, %v1185
        %v1187 = vpop.f32.mrb[0].mxu0
        %v1188 = vpop.f32.mrb[0].mxu0
        %v1189 = vadd.f32 %v1033, %v1188
        %v1190 = vpop.f32.mrb[0].mxu0
        %1191 = vmatprep.mubr.bf16.mxu0 0
        %1192 = vmatmul.mubr.bf16.gmra.mrb[0].mxu0 %v1129
        %v1193 = vpop.f32.mrb[0].mxu0
        %v1194 = vadd.f32 %v1038, %v1193
        %v1195 = vpop.f32.mrb[0].mxu0
        %v1196 = vpop.f32.mrb[0].mxu0
        %v1197 = vadd.f32 %v1043, %v1196
        %v1198 = vpop.f32.mrb[0].mxu0
        %1199 = vmatprep.mubr.bf16.mxu0 0
        %1200 = vmatmul.mubr.bf16.gmra.mrb[0].mxu0 %v1130
        %v1201 = vpop.f32.mrb[0].mxu0
        %v1202 = vadd.f32 %v1048, %v1201
        %v1203 = vpop.f32.mrb[0].mxu0
        %v1204 = vpop.f32.mrb[0].mxu0
        %v1205 = vadd.f32 %v1053, %v1204
        %v1206 = vpop.f32.mrb[0].mxu0
        %1207 = vmatprep.mubr.bf16.mxu0 0
        %1208 = vmatmul.mubr.bf16.gmra.mrb[0].mxu0 %v1131
        %v1209 = vpop.f32.mrb[0].mxu0
        %v1210 = vadd.f32 %v1058, %v1209
        %v1211 = vpop.f32.mrb[0].mxu0
        %v1212 = vpop.f32.mrb[0].mxu0
        %v1213 = vadd.f32 %v1063, %v1212
        %v1214 = vpop.f32.mrb[0].mxu0
        %1215 = vmatprep.mubr.bf16.mxu0 0
        %1216 = vmatmul.mubr.bf16.gmra.mrb[0].mxu0 %v1132
        %v1217 = vpop.f32.mrb[0].mxu0
        %v1218 = vadd.f32 %v1068, %v1217
        %v1219 = vpop.f32.mrb[0].mxu0
        %v1220 = vpop.f32.mrb[0].mxu0
        %v1221 = vadd.f32 %v1073, %v1220
        %v1222 = vpop.f32.mrb[0].mxu0
        %1223 = vmatprep.mubr.bf16.mxu0 0
        %1224 = vmatmul.mubr.bf16.gmra.mrb[0].mxu0 %v1133
        %v1225 = vpop.f32.mrb[0].mxu0
        %v1226 = vadd.f32 %v1078, %v1225
        %v1227 = vpop.f32.mrb[0].mxu0
        %v1228 = vpop.f32.mrb[0].mxu0
        %v1229 = vadd.f32 %v1083, %v1228
        %v1230 = vpop.f32.mrb[0].mxu0
        %1231 = vmatprep.mubr.bf16.mxu0 0
        %1232 = vmatmul.mubr.bf16.gmra.mrb[0].mxu0 %v1134
        %v1233 = vpop.f32.mrb[0].mxu0
        %v1234 = vadd.f32 %v1088, %v1233
        %v1235 = vpop.f32.mrb[0].mxu0
        %v1236 = vpop.f32.mrb[0].mxu0
        %v1237 = vadd.f32 %v1093, %v1236
        %v1238 = vpop.f32.mrb[0].mxu0
        %1239 = vdwg.mxu0
        %v1240 = vmax.f32 %v1178, 0.0
        %v1241 = vmax.f32 %v1181, 0.0
        %v1242 = vmax.f32 %v1186, 0.0
        %v1243 = vmax.f32 %v1189, 0.0
        %v1244 = vmax.f32 %v1194, 0.0
        %v1245 = vmax.f32 %v1197, 0.0
        %v1246 = vmax.f32 %v1202, 0.0
        %v1247 = vmax.f32 %v1205, 0.0
        %v1248 = vmax.f32 %v1210, 0.0
        %v1249 = vmax.f32 %v1213, 0.0
        %v1250 = vmax.f32 %v1218, 0.0
        %v1251 = vmax.f32 %v1221, 0.0
        %v1252 = vmax.f32 %v1226, 0.0
        %v1253 = vmax.f32 %v1229, 0.0
        %v1254 = vmax.f32 %v1234, 0.0
        %v1255 = vmax.f32 %v1237, 0.0
        %v1256 = vld [vmem:[%s6] sm:$0xf]
        %v1257 = vld [vmem:[%s6 + $0x4] sm:$0xf]
        %v1258 = vld [vmem:[%s6 + $0x8] sm:$0xf]
        %v1259 = vld [vmem:[%s6 + $0xc] sm:$0xf]
        %v1260 = vld [vmem:[%s6 + $0x10] sm:$0xf]
        %v1261 = vld [vmem:[%s6 + $0x14] sm:$0xf]
        %v1262 = vld [vmem:[%s6 + $0x18] sm:$0xf]
        %v1263 = vld [vmem:[%s6 + $0x1c] sm:$0xf]
        %v1264 = vld [vmem:[%s6 + $0x20] sm:$0xf]
        %v1265 = vld [vmem:[%s6 + $0x24] sm:$0xf]
        %v1266 = vld [vmem:[%s6 + $0x28] sm:$0xf]
        %v1267 = vld [vmem:[%s6 + $0x2c] sm:$0xf]
        %v1268 = vld [vmem:[%s6 + $0x30] sm:$0xf]
        %v1269 = vld [vmem:[%s6 + $0x34] sm:$0xf]
        %v1270 = vld [vmem:[%s6 + $0x38] sm:$0xf]
        %v1271 = vld [vmem:[%s6 + $0x3c] sm:$0xf]
        %v1272 = vld [vmem:[%s6 + $0x40] sm:$0xf]
        %v1273 = vld [vmem:[%s6 + $0x44] sm:$0xf]
        %v1274 = vld [vmem:[%s6 + $0x48] sm:$0xf]
        %v1275 = vld [vmem:[%s6 + $0x4c] sm:$0xf]
        %v1276 = vld [vmem:[%s6 + $0x50] sm:$0xf]
        %v1277 = vld [vmem:[%s6 + $0x54] sm:$0xf]
        %v1278 = vld [vmem:[%s6 + $0x58] sm:$0xf]
        %v1279 = vld [vmem:[%s6 + $0x5c] sm:$0xf]
        %v1280 = vld [vmem:[%s6 + $0x60] sm:$0xf]
        %v1281 = vld [vmem:[%s6 + $0x64] sm:$0xf]
        %v1282 = vld [vmem:[%s6 + $0x68] sm:$0xf]
        %v1283 = vld [vmem:[%s6 + $0x6c] sm:$0xf]
        %v1284 = vld [vmem:[%s6 + $0x70] sm:$0xf]
        %v1285 = vld [vmem:[%s6 + $0x74] sm:$0xf]
        %v1286 = vld [vmem:[%s6 + $0x78] sm:$0xf]
        %v1287 = vld [vmem:[%s6 + $0x7c] sm:$0xf]
        %v1288 = vpack.c.bf16 %v1241, %v1240
        %v1289 = vpack.c.bf16 %v1243, %v1242
        %v1290 = vpack.c.bf16 %v1245, %v1244
        %v1291 = vpack.c.bf16 %v1247, %v1246
        %v1292 = vpack.c.bf16 %v1249, %v1248
        %v1293 = vpack.c.bf16 %v1251, %v1250
        %v1294 = vpack.c.bf16 %v1253, %v1252
        %v1295 = vpack.c.bf16 %v1255, %v1254
        %v1296 = vld [vmem:[%s7] sm:$0xff]
        %v1297 = vld [vmem:[%s7 + $0x8] sm:$0xff]
        %v1298 = vld [vmem:[%s7 + $0x10] sm:$0xff]
        %v1299 = vld [vmem:[%s7 + $0x18] sm:$0xff]
        %v1300 = vld [vmem:[%s7 + $0x20] sm:$0xff]
        %v1301 = vld [vmem:[%s7 + $0x28] sm:$0xff]
        %v1302 = vld [vmem:[%s7 + $0x30] sm:$0xff]
        %v1303 = vld [vmem:[%s7 + $0x38] sm:$0xff]
        %v1304 = vld [vmem:[%s7 + $0x40] sm:$0xff]
        %v1305 = vld [vmem:[%s7 + $0x48] sm:$0xff]
        %v1306 = vld [vmem:[%s7 + $0x50] sm:$0xff]
        %v1307 = vld [vmem:[%s7 + $0x58] sm:$0xff]
        %v1308 = vld [vmem:[%s7 + $0x60] sm:$0xff]
        %v1309 = vld [vmem:[%s7 + $0x68] sm:$0xff]
        %v1310 = vld [vmem:[%s7 + $0x70] sm:$0xff]
        %v1311 = vld [vmem:[%s7 + $0x78] sm:$0xff]
        %v1312 = vld [vmem:[%s7 + $0x80] sm:$0xff]
        %v1313 = vld [vmem:[%s7 + $0x88] sm:$0xff]
        %v1314 = vld [vmem:[%s7 + $0x90] sm:$0xff]
        %v1315 = vld [vmem:[%s7 + $0x98] sm:$0xff]
        %v1316 = vld [vmem:[%s7 + $0xa0] sm:$0xff]
        %v1317 = vld [vmem:[%s7 + $0xa8] sm:$0xff]
        %v1318 = vld [vmem:[%s7 + $0xb0] sm:$0xff]
        %v1319 = vld [vmem:[%s7 + $0xb8] sm:$0xff]
        %v1320 = vld [vmem:[%s7 + $0xc0] sm:$0xff]
        %v1321 = vld [vmem:[%s7 + $0xc8] sm:$0xff]
        %v1322 = vld [vmem:[%s7 + $0xd0] sm:$0xff]
        %v1323 = vld [vmem:[%s7 + $0xd8] sm:$0xff]
        %v1324 = vld [vmem:[%s7 + $0xe0] sm:$0xff]
        %v1325 = vld [vmem:[%s7 + $0xe8] sm:$0xff]
        %v1326 = vld [vmem:[%s7 + $0xf0] sm:$0xff]
        %v1327 = vld [vmem:[%s7 + $0xf8] sm:$0xff]
        %1329 = vset.pattern.permute.xlu0 0
        %1330 = vperm.xlu0 %1329, %v1296
        %v1331 = vpop.permute.xlu0 %1330
        %1334 = vset.pattern.permute.xlu0 0
        %1335 = vperm.xlu0 %1334, %v1297
        %v1336 = vpop.permute.xlu0 %1335
        %1339 = vset.pattern.permute.xlu0 0
        %1340 = vperm.xlu0 %1339, %v1298
        %v1341 = vpop.permute.xlu0 %1340
        %1344 = vset.pattern.permute.xlu0 0
        %1345 = vperm.xlu0 %1344, %v1299
        %v1346 = vpop.permute.xlu0 %1345
        %1349 = vset.pattern.permute.xlu0 0
        %1350 = vperm.xlu0 %1349, %v1300
        %v1351 = vpop.permute.xlu0 %1350
        %1354 = vset.pattern.permute.xlu0 0
        %1355 = vperm.xlu0 %1354, %v1301
        %v1356 = vpop.permute.xlu0 %1355
        %1359 = vset.pattern.permute.xlu0 0
        %1360 = vperm.xlu0 %1359, %v1302
        %v1361 = vpop.permute.xlu0 %1360
        %1364 = vset.pattern.permute.xlu0 0
        %1365 = vperm.xlu0 %1364, %v1303
        %v1366 = vpop.permute.xlu0 %1365
        %1369 = vset.pattern.permute.xlu0 0
        %1370 = vperm.xlu0 %1369, %v1304
        %v1371 = vpop.permute.xlu0 %1370
        %1374 = vset.pattern.permute.xlu0 0
        %1375 = vperm.xlu0 %1374, %v1305
        %v1376 = vpop.permute.xlu0 %1375
        %1379 = vset.pattern.permute.xlu0 0
        %1380 = vperm.xlu0 %1379, %v1306
        %v1381 = vpop.permute.xlu0 %1380
        %1384 = vset.pattern.permute.xlu0 0
        %1385 = vperm.xlu0 %1384, %v1307
        %v1386 = vpop.permute.xlu0 %1385
        %1389 = vset.pattern.permute.xlu0 0
        %1390 = vperm.xlu0 %1389, %v1308
        %v1391 = vpop.permute.xlu0 %1390
        %1394 = vset.pattern.permute.xlu0 0
        %1395 = vperm.xlu0 %1394, %v1309
        %v1396 = vpop.permute.xlu0 %1395
        %1399 = vset.pattern.permute.xlu0 0
        %1400 = vperm.xlu0 %1399, %v1310
        %v1401 = vpop.permute.xlu0 %1400
        %1404 = vset.pattern.permute.xlu0 0
        %1405 = vperm.xlu0 %1404, %v1311
        %v1406 = vpop.permute.xlu0 %1405
        %1409 = vset.pattern.permute.xlu0 0
        %1410 = vperm.xlu0 %1409, %v1312
        %v1411 = vpop.permute.xlu0 %1410
        %1414 = vset.pattern.permute.xlu0 0
        %1415 = vperm.xlu0 %1414, %v1313
        %v1416 = vpop.permute.xlu0 %1415
        %1419 = vset.pattern.permute.xlu0 0
        %1420 = vperm.xlu0 %1419, %v1314
        %v1421 = vpop.permute.xlu0 %1420
        %1424 = vset.pattern.permute.xlu0 0
        %1425 = vperm.xlu0 %1424, %v1315
        %v1426 = vpop.permute.xlu0 %1425
        %1429 = vset.pattern.permute.xlu0 0
        %1430 = vperm.xlu0 %1429, %v1316
        %v1431 = vpop.permute.xlu0 %1430
        %1434 = vset.pattern.permute.xlu0 0
        %1435 = vperm.xlu0 %1434, %v1317
        %v1436 = vpop.permute.xlu0 %1435
        %1439 = vset.pattern.permute.xlu0 0
        %1440 = vperm.xlu0 %1439, %v1318
        %v1441 = vpop.permute.xlu0 %1440
        %1444 = vset.pattern.permute.xlu0 0
        %1445 = vperm.xlu0 %1444, %v1319
        %v1446 = vpop.permute.xlu0 %1445
        %1449 = vset.pattern.permute.xlu0 0
        %1450 = vperm.xlu0 %1449, %v1320
        %v1451 = vpop.permute.xlu0 %1450
        %1454 = vset.pattern.permute.xlu0 0
        %1455 = vperm.xlu0 %1454, %v1321
        %v1456 = vpop.permute.xlu0 %1455
        %1459 = vset.pattern.permute.xlu0 0
        %1460 = vperm.xlu0 %1459, %v1322
        %v1461 = vpop.permute.xlu0 %1460
        %1464 = vset.pattern.permute.xlu0 0
        %1465 = vperm.xlu0 %1464, %v1323
        %v1466 = vpop.permute.xlu0 %1465
        %1469 = vset.pattern.permute.xlu0 0
        %1470 = vperm.xlu0 %1469, %v1324
        %v1471 = vpop.permute.xlu0 %1470
        %1474 = vset.pattern.permute.xlu0 0
        %1475 = vperm.xlu0 %1474, %v1325
        %v1476 = vpop.permute.xlu0 %1475
        %1479 = vset.pattern.permute.xlu0 0
        %1480 = vperm.xlu0 %1479, %v1326
        %v1481 = vpop.permute.xlu0 %1480
        %1484 = vset.pattern.permute.xlu0 0
        %1485 = vperm.xlu0 %1484, %v1327
        %v1486 = vpop.permute.xlu0 %1485
        %v1520 = vunpack.c.l.b16 %v1256
        %v1521 = vunpack.c.l.b16 %v1257
        %v1522 = vunpack.c.l.b16 %v1258
        %v1523 = vunpack.c.l.b16 %v1259
        %v1524 = vunpack.c.l.b16 %v1260
        %v1525 = vunpack.c.l.b16 %v1261
        %v1526 = vunpack.c.l.b16 %v1262
        %v1527 = vunpack.c.l.b16 %v1263
        %v1528 = vunpack.c.l.b16 %v1264
        %v1529 = vunpack.c.l.b16 %v1265
        %v1530 = vunpack.c.l.b16 %v1266
        %v1531 = vunpack.c.l.b16 %v1267
        %v1532 = vunpack.c.l.b16 %v1268
        %v1533 = vunpack.c.l.b16 %v1269
        %v1534 = vunpack.c.l.b16 %v1270
        %v1535 = vunpack.c.l.b16 %v1271
        %v1536 = vunpack.c.l.b16 %v1272
        %v1537 = vunpack.c.l.b16 %v1273
        %v1538 = vunpack.c.l.b16 %v1274
        %v1539 = vunpack.c.l.b16 %v1275
        %v1540 = vunpack.c.l.b16 %v1276
        %v1541 = vunpack.c.l.b16 %v1277
        %v1542 = vunpack.c.l.b16 %v1278
        %v1543 = vunpack.c.l.b16 %v1279
        %v1544 = vunpack.c.l.b16 %v1280
        %v1545 = vunpack.c.l.b16 %v1281
        %v1546 = vunpack.c.l.b16 %v1282
        %v1547 = vunpack.c.l.b16 %v1283
        %v1548 = vunpack.c.l.b16 %v1284
        %v1549 = vunpack.c.l.b16 %v1285
        %v1550 = vunpack.c.l.b16 %v1286
        %v1551 = vunpack.c.l.b16 %v1287
        %v1552 = vpack.c.b16 %v1521, %v1520
        %v1553 = vpack.c.b16 %v1523, %v1522
        %v1554 = vpack.c.b16 %v1525, %v1524
        %v1555 = vpack.c.b16 %v1527, %v1526
        %v1556 = vpack.c.b16 %v1529, %v1528
        %v1557 = vpack.c.b16 %v1531, %v1530
        %v1558 = vpack.c.b16 %v1533, %v1532
        %v1559 = vpack.c.b16 %v1535, %v1534
        %v1560 = vpack.c.b16 %v1537, %v1536
        %v1561 = vpack.c.b16 %v1539, %v1538
        %v1562 = vpack.c.b16 %v1541, %v1540
        %v1563 = vpack.c.b16 %v1543, %v1542
        %v1564 = vpack.c.b16 %v1545, %v1544
        %v1565 = vpack.c.b16 %v1547, %v1546
        %v1566 = vpack.c.b16 %v1549, %v1548
        %v1567 = vpack.c.b16 %v1551, %v1550
        %1584 = vmatprep.subr.bf16.mxu0 0
        %1585 = vmatpush1.bf16.msra.mxu0 %v1288
        %1586 = vmatprep.subr.bf16.mxu0 0
        %1587 = vmatpush1.bf16.msra.mxu0 %v1289
        %1588 = vmatprep.subr.bf16.mxu0 0
        %1589 = vmatpush1.bf16.msra.mxu0 %v1290
        %1590 = vmatprep.subr.bf16.mxu0 0
        %1591 = vmatpush1.bf16.msra.mxu0 %v1291
        %1592 = vmatprep.subr.bf16.mxu0 0
        %1593 = vmatpush1.bf16.msra.mxu0 %v1292
        %1594 = vmatprep.subr.bf16.mxu0 0
        %1595 = vmatpush1.bf16.msra.mxu0 %v1293
        %1596 = vmatprep.subr.bf16.mxu0 0
        %1597 = vmatpush1.bf16.msra.mxu0 %v1294
        %1598 = vmatprep.subr.bf16.mxu0 0
        %1599 = vmatpush1.bf16.msra.mxu0 %v1295
        %1600 = vmatprep.subr.bf16.mxu0 0
        %1601 = vmatpush1.bf16.msra.mxu0 0
        %1602 = vmatprep.subr.bf16.mxu0 0
        %1603 = vmatpush1.bf16.msra.mxu0 0
        %1604 = vmatprep.subr.bf16.mxu0 0
        %1605 = vmatpush1.bf16.msra.mxu0 0
        %1606 = vmatprep.subr.bf16.mxu0 0
        %1607 = vmatpush1.bf16.msra.mxu0 0
        %1608 = vmatprep.subr.bf16.mxu0 0
        %1609 = vmatpush1.bf16.msra.mxu0 0
        %1610 = vmatprep.subr.bf16.mxu0 0
        %1611 = vmatpush1.bf16.msra.mxu0 0
        %1612 = vmatprep.subr.bf16.mxu0 0
        %1613 = vmatpush1.bf16.msra.mxu0 0
        %1614 = vmatprep.subr.bf16.mxu0 0
        %1615 = vmatpush1.bf16.msra.mxu0 0
        %1616 = vmatprep.mubr.bf16.mxu0 0
        %1617 = vmatmul.mubr.bf16.gmra.mrb[0].mxu0 %v1552
        %v1618 = vpop.f32.mrb[0].mxu0
        %v1619 = vadd.f32 %v1331, %v1618
        %v1620 = vpop.f32.mrb[0].mxu0
        %v1621 = vpop.f32.mrb[0].mxu0
        %v1622 = vadd.f32 %v1336, %v1621
        %v1623 = vpop.f32.mrb[0].mxu0
        %1624 = vmatprep.mubr.bf16.mxu0 0
        %1625 = vmatmul.mubr.bf16.gmra.mrb[0].mxu0 %v1553
        %v1626 = vpop.f32.mrb[0].mxu0
        %v1627 = vadd.f32 %v1341, %v1626
        %v1628 = vpop.f32.mrb[0].mxu0
        %v1629 = vpop.f32.mrb[0].mxu0
        %v1630 = vadd.f32 %v1346, %v1629
        %v1631 = vpop.f32.mrb[0].mxu0
        %1632 = vmatprep.mubr.bf16.mxu0 0
        %1633 = vmatmul.mubr.bf16.gmra.mrb[0].mxu0 %v1554
        %v1634 = vpop.f32.mrb[0].mxu0
        %v1635 = vadd.f32 %v1351, %v1634
        %v1636 = vpop.f32.mrb[0].mxu0
        %v1637 = vpop.f32.mrb[0].mxu0
        %v1638 = vadd.f32 %v1356, %v1637
        %v1639 = vpop.f32.mrb[0].mxu0
        %1640 = vmatprep.mubr.bf16.mxu0 0
        %1641 = vmatmul.mubr.bf16.gmra.mrb[0].mxu0 %v1555
        %v1642 = vpop.f32.mrb[0].mxu0
        %v1643 = vadd.f32 %v1361, %v1642
        %v1644 = vpop.f32.mrb[0].mxu0
        %v1645 = vpop.f32.mrb[0].mxu0
        %v1646 = vadd.f32 %v1366, %v1645
        %v1647 = vpop.f32.mrb[0].mxu0
        %1648 = vmatprep.mubr.bf16.mxu0 0
        %1649 = vmatmul.mubr.bf16.gmra.mrb[0].mxu0 %v1556
        %v1650 = vpop.f32.mrb[0].mxu0
        %v1651 = vadd.f32 %v1371, %v1650
        %v1652 = vpop.f32.mrb[0].mxu0
        %v1653 = vpop.f32.mrb[0].mxu0
        %v1654 = vadd.f32 %v1376, %v1653
        %v1655 = vpop.f32.mrb[0].mxu0
        %1656 = vmatprep.mubr.bf16.mxu0 0
        %1657 = vmatmul.mubr.bf16.gmra.mrb[0].mxu0 %v1557
        %v1658 = vpop.f32.mrb[0].mxu0
        %v1659 = vadd.f32 %v1381, %v1658
        %v1660 = vpop.f32.mrb[0].mxu0
        %v1661 = vpop.f32.mrb[0].mxu0
        %v1662 = vadd.f32 %v1386, %v1661
        %v1663 = vpop.f32.mrb[0].mxu0
        %1664 = vmatprep.mubr.bf16.mxu0 0
        %1665 = vmatmul.mubr.bf16.gmra.mrb[0].mxu0 %v1558
        %v1666 = vpop.f32.mrb[0].mxu0
        %v1667 = vadd.f32 %v1391, %v1666
        %v1668 = vpop.f32.mrb[0].mxu0
        %v1669 = vpop.f32.mrb[0].mxu0
        %v1670 = vadd.f32 %v1396, %v1669
        %v1671 = vpop.f32.mrb[0].mxu0
        %1672 = vmatprep.mubr.bf16.mxu0 0
        %1673 = vmatmul.mubr.bf16.gmra.mrb[0].mxu0 %v1559
        %v1674 = vpop.f32.mrb[0].mxu0
        %v1675 = vadd.f32 %v1401, %v1674
        %v1676 = vpop.f32.mrb[0].mxu0
        %v1677 = vpop.f32.mrb[0].mxu0
        %v1678 = vadd.f32 %v1406, %v1677
        %v1679 = vpop.f32.mrb[0].mxu0
        %1680 = vmatprep.mubr.bf16.mxu0 0
        %1681 = vmatmul.mubr.bf16.gmra.mrb[0].mxu0 %v1560
        %v1682 = vpop.f32.mrb[0].mxu0
        %v1683 = vadd.f32 %v1411, %v1682
        %v1684 = vpop.f32.mrb[0].mxu0
        %v1685 = vpop.f32.mrb[0].mxu0
        %v1686 = vadd.f32 %v1416, %v1685
        %v1687 = vpop.f32.mrb[0].mxu0
        %1688 = vmatprep.mubr.bf16.mxu0 0
        %1689 = vmatmul.mubr.bf16.gmra.mrb[0].mxu0 %v1561
        %v1690 = vpop.f32.mrb[0].mxu0
        %v1691 = vadd.f32 %v1421, %v1690
        %v1692 = vpop.f32.mrb[0].mxu0
        %v1693 = vpop.f32.mrb[0].mxu0
        %v1694 = vadd.f32 %v1426, %v1693
        %v1695 = vpop.f32.mrb[0].mxu0
        %1696 = vmatprep.mubr.bf16.mxu0 0
        %1697 = vmatmul.mubr.bf16.gmra.mrb[0].mxu0 %v1562
        %v1698 = vpop.f32.mrb[0].mxu0
        %v1699 = vadd.f32 %v1431, %v1698
        %v1700 = vpop.f32.mrb[0].mxu0
        %v1701 = vpop.f32.mrb[0].mxu0
        %v1702 = vadd.f32 %v1436, %v1701
        %v1703 = vpop.f32.mrb[0].mxu0
        %1704 = vmatprep.mubr.bf16.mxu0 0
        %1705 = vmatmul.mubr.bf16.gmra.mrb[0].mxu0 %v1563
        %v1706 = vpop.f32.mrb[0].mxu0
        %v1707 = vadd.f32 %v1441, %v1706
        %v1708 = vpop.f32.mrb[0].mxu0
        %v1709 = vpop.f32.mrb[0].mxu0
        %v1710 = vadd.f32 %v1446, %v1709
        %v1711 = vpop.f32.mrb[0].mxu0
        %1712 = vmatprep.mubr.bf16.mxu0 0
        %1713 = vmatmul.mubr.bf16.gmra.mrb[0].mxu0 %v1564
        %v1714 = vpop.f32.mrb[0].mxu0
        %v1715 = vadd.f32 %v1451, %v1714
        %v1716 = vpop.f32.mrb[0].mxu0
        %v1717 = vpop.f32.mrb[0].mxu0
        %v1718 = vadd.f32 %v1456, %v1717
        %v1719 = vpop.f32.mrb[0].mxu0
        %1720 = vmatprep.mubr.bf16.mxu0 0
        %1721 = vmatmul.mubr.bf16.gmra.mrb[0].mxu0 %v1565
        %v1722 = vpop.f32.mrb[0].mxu0
        %v1723 = vadd.f32 %v1461, %v1722
        %v1724 = vpop.f32.mrb[0].mxu0
        %v1725 = vpop.f32.mrb[0].mxu0
        %v1726 = vadd.f32 %v1466, %v1725
        %v1727 = vpop.f32.mrb[0].mxu0
        %1728 = vmatprep.mubr.bf16.mxu0 0
        %1729 = vmatmul.mubr.bf16.gmra.mrb[0].mxu0 %v1566
        %v1730 = vpop.f32.mrb[0].mxu0
        %v1731 = vadd.f32 %v1471, %v1730
        %v1732 = vpop.f32.mrb[0].mxu0
        %v1733 = vpop.f32.mrb[0].mxu0
        %v1734 = vadd.f32 %v1476, %v1733
        %v1735 = vpop.f32.mrb[0].mxu0
        %1736 = vmatprep.mubr.bf16.mxu0 0
        %1737 = vmatmul.mubr.bf16.gmra.mrb[0].mxu0 %v1567
        %v1738 = vpop.f32.mrb[0].mxu0
        %v1739 = vadd.f32 %v1481, %v1738
        %v1740 = vpop.f32.mrb[0].mxu0
        %v1741 = vpop.f32.mrb[0].mxu0
        %v1742 = vadd.f32 %v1486, %v1741
        %v1743 = vpop.f32.mrb[0].mxu0
        %1744 = vdwg.mxu0
        %v1745 = vmax.f32 %v1619, 0.0
        %v1746 = vmax.f32 %v1622, 0.0
        %v1747 = vmax.f32 %v1627, 0.0
        %v1748 = vmax.f32 %v1630, 0.0
        %v1749 = vmax.f32 %v1635, 0.0
        %v1750 = vmax.f32 %v1638, 0.0
        %v1751 = vmax.f32 %v1643, 0.0
        %v1752 = vmax.f32 %v1646, 0.0
        %v1753 = vmax.f32 %v1651, 0.0
        %v1754 = vmax.f32 %v1654, 0.0
        %v1755 = vmax.f32 %v1659, 0.0
        %v1756 = vmax.f32 %v1662, 0.0
        %v1757 = vmax.f32 %v1667, 0.0
        %v1758 = vmax.f32 %v1670, 0.0
        %v1759 = vmax.f32 %v1675, 0.0
        %v1760 = vmax.f32 %v1678, 0.0
        %v1761 = vmax.f32 %v1683, 0.0
        %v1762 = vmax.f32 %v1686, 0.0
        %v1763 = vmax.f32 %v1691, 0.0
        %v1764 = vmax.f32 %v1694, 0.0
        %v1765 = vmax.f32 %v1699, 0.0
        %v1766 = vmax.f32 %v1702, 0.0
        %v1767 = vmax.f32 %v1707, 0.0
        %v1768 = vmax.f32 %v1710, 0.0
        %v1769 = vmax.f32 %v1715, 0.0
        %v1770 = vmax.f32 %v1718, 0.0
        %v1771 = vmax.f32 %v1723, 0.0
        %v1772 = vmax.f32 %v1726, 0.0
        %v1773 = vmax.f32 %v1731, 0.0
        %v1774 = vmax.f32 %v1734, 0.0
        %v1775 = vmax.f32 %v1739, 0.0
        %v1776 = vmax.f32 %v1742, 0.0
        %1777 = vmax.xlane.f32.xlu0 %v1745
        %v1778 = vpop.xlane.xlu0 %1777
        %1779 = vmax.xlane.f32.xlu0 %v1746
        %v1780 = vpop.xlane.xlu0 %1779
        %1781 = vmax.xlane.f32.xlu0 %v1747
        %v1782 = vpop.xlane.xlu0 %1781
        %1783 = vmax.xlane.f32.xlu0 %v1748
        %v1784 = vpop.xlane.xlu0 %1783
        %1785 = vmax.xlane.f32.xlu0 %v1749
        %v1786 = vpop.xlane.xlu0 %1785
        %1787 = vmax.xlane.f32.xlu0 %v1750
        %v1788 = vpop.xlane.xlu0 %1787
        %1789 = vmax.xlane.f32.xlu0 %v1751
        %v1790 = vpop.xlane.xlu0 %1789
        %1791 = vmax.xlane.f32.xlu0 %v1752
        %v1792 = vpop.xlane.xlu0 %1791
        %1793 = vmax.xlane.f32.xlu0 %v1753
        %v1794 = vpop.xlane.xlu0 %1793
        %1795 = vmax.xlane.f32.xlu0 %v1754
        %v1796 = vpop.xlane.xlu0 %1795
        %1797 = vmax.xlane.f32.xlu0 %v1755
        %v1798 = vpop.xlane.xlu0 %1797
        %1799 = vmax.xlane.f32.xlu0 %v1756
        %v1800 = vpop.xlane.xlu0 %1799
        %1801 = vmax.xlane.f32.xlu0 %v1757
        %v1802 = vpop.xlane.xlu0 %1801
        %1803 = vmax.xlane.f32.xlu0 %v1758
        %v1804 = vpop.xlane.xlu0 %1803
        %1805 = vmax.xlane.f32.xlu0 %v1759
        %v1806 = vpop.xlane.xlu0 %1805
        %1807 = vmax.xlane.f32.xlu0 %v1760
        %v1808 = vpop.xlane.xlu0 %1807
        %1809 = vmax.xlane.f32.xlu0 %v1761
        %v1810 = vpop.xlane.xlu0 %1809
        %1811 = vmax.xlane.f32.xlu0 %v1762
        %v1812 = vpop.xlane.xlu0 %1811
        %1813 = vmax.xlane.f32.xlu0 %v1763
        %v1814 = vpop.xlane.xlu0 %1813
        %1815 = vmax.xlane.f32.xlu0 %v1764
        %v1816 = vpop.xlane.xlu0 %1815
        %1817 = vmax.xlane.f32.xlu0 %v1765
        %v1818 = vpop.xlane.xlu0 %1817
        %1819 = vmax.xlane.f32.xlu0 %v1766
        %v1820 = vpop.xlane.xlu0 %1819
        %1821 = vmax.xlane.f32.xlu0 %v1767
        %v1822 = vpop.xlane.xlu0 %1821
        %1823 = vmax.xlane.f32.xlu0 %v1768
        %v1824 = vpop.xlane.xlu0 %1823
        %1825 = vmax.xlane.f32.xlu0 %v1769
        %v1826 = vpop.xlane.xlu0 %1825
        %1827 = vmax.xlane.f32.xlu0 %v1770
        %v1828 = vpop.xlane.xlu0 %1827
        %1829 = vmax.xlane.f32.xlu0 %v1771
        %v1830 = vpop.xlane.xlu0 %1829
        %1831 = vmax.xlane.f32.xlu0 %v1772
        %v1832 = vpop.xlane.xlu0 %1831
        %1833 = vmax.xlane.f32.xlu0 %v1773
        %v1834 = vpop.xlane.xlu0 %1833
        %1835 = vmax.xlane.f32.xlu0 %v1774
        %v1836 = vpop.xlane.xlu0 %1835
        %1837 = vmax.xlane.f32.xlu0 %v1775
        %v1838 = vpop.xlane.xlu0 %1837
        %1839 = vmax.xlane.f32.xlu0 %v1776
        %v1840 = vpop.xlane.xlu0 %1839
        %p1841 = scmp.eq.s32.totalorder %s34, 0
        // Predicated region
        $region81: #{tpu_custom_call.1} parent=79 // pred_check
          %p1842 = pneg %p1841
        $region82: #{tpu_custom_call.1} parent=79 // pred_check_branch
          %1844 = sbr.rel (%p1842) target = $region84
        $region83: #{tpu_custom_call.1} parent=79 // pred_region
          %vm1845 = vcmask 7168
          %1846 = vst.msk [vmem:[#allocation2] sm:$0xff] %vm1845, -inf
          %1847 = vst.msk [vmem:[#allocation2 + $0x8] sm:$0xff] %vm1845, -inf
          %1848 = vst.msk [vmem:[#allocation2 + $0x10] sm:$0xff] %vm1845, -inf
          %1849 = vst.msk [vmem:[#allocation2 + $0x18] sm:$0xff] %vm1845, -inf
          %1850 = vst.msk [vmem:[#allocation2 + $0x20] sm:$0xff] %vm1845, -inf
          %1851 = vst.msk [vmem:[#allocation2 + $0x28] sm:$0xff] %vm1845, -inf
          %1852 = vst.msk [vmem:[#allocation2 + $0x30] sm:$0xff] %vm1845, -inf
          %1853 = vst.msk [vmem:[#allocation2 + $0x38] sm:$0xff] %vm1845, -inf
          %1854 = vst.msk [vmem:[#allocation2 + $0x40] sm:$0xff] %vm1845, -inf
          %1855 = vst.msk [vmem:[#allocation2 + $0x48] sm:$0xff] %vm1845, -inf
          %1856 = vst.msk [vmem:[#allocation2 + $0x50] sm:$0xff] %vm1845, -inf
          %1857 = vst.msk [vmem:[#allocation2 + $0x58] sm:$0xff] %vm1845, -inf
          %1858 = vst.msk [vmem:[#allocation2 + $0x60] sm:$0xff] %vm1845, -inf
          %1859 = vst.msk [vmem:[#allocation2 + $0x68] sm:$0xff] %vm1845, -inf
          %1860 = vst.msk [vmem:[#allocation2 + $0x70] sm:$0xff] %vm1845, -inf
          %1861 = vst.msk [vmem:[#allocation2 + $0x78] sm:$0xff] %vm1845, -inf
          %1862 = vst.msk [vmem:[#allocation2 + $0x80] sm:$0xff] %vm1845, -inf
          %1863 = vst.msk [vmem:[#allocation2 + $0x88] sm:$0xff] %vm1845, -inf
          %1864 = vst.msk [vmem:[#allocation2 + $0x90] sm:$0xff] %vm1845, -inf
          %1865 = vst.msk [vmem:[#allocation2 + $0x98] sm:$0xff] %vm1845, -inf
          %1866 = vst.msk [vmem:[#allocation2 + $0xa0] sm:$0xff] %vm1845, -inf
          %1867 = vst.msk [vmem:[#allocation2 + $0xa8] sm:$0xff] %vm1845, -inf
          %1868 = vst.msk [vmem:[#allocation2 + $0xb0] sm:$0xff] %vm1845, -inf
          %1869 = vst.msk [vmem:[#allocation2 + $0xb8] sm:$0xff] %vm1845, -inf
          %1870 = vst.msk [vmem:[#allocation2 + $0xc0] sm:$0xff] %vm1845, -inf
          %1871 = vst.msk [vmem:[#allocation2 + $0xc8] sm:$0xff] %vm1845, -inf
          %1872 = vst.msk [vmem:[#allocation2 + $0xd0] sm:$0xff] %vm1845, -inf
          %1873 = vst.msk [vmem:[#allocation2 + $0xd8] sm:$0xff] %vm1845, -inf
          %1874 = vst.msk [vmem:[#allocation2 + $0xe0] sm:$0xff] %vm1845, -inf
          %1875 = vst.msk [vmem:[#allocation2 + $0xe8] sm:$0xff] %vm1845, -inf
          %1876 = vst.msk [vmem:[#allocation2 + $0xf0] sm:$0xff] %vm1845, -inf
          %1877 = vst.msk [vmem:[#allocation2 + $0xf8] sm:$0xff] %vm1845, -inf
        $region84: #{tpu_custom_call.1} parent=79 // pred_fallthru
          _
        %v1878 = vld [vmem:[#allocation2] sm:$0xff]
        %v1879 = vld [vmem:[#allocation2 + $0x8] sm:$0xff]
        %v1880 = vld [vmem:[#allocation2 + $0x10] sm:$0xff]
        %v1881 = vld [vmem:[#allocation2 + $0x18] sm:$0xff]
        %v1882 = vld [vmem:[#allocation2 + $0x20] sm:$0xff]
        %v1883 = vld [vmem:[#allocation2 + $0x28] sm:$0xff]
        %v1884 = vld [vmem:[#allocation2 + $0x30] sm:$0xff]
        %v1885 = vld [vmem:[#allocation2 + $0x38] sm:$0xff]
        %v1886 = vld [vmem:[#allocation2 + $0x40] sm:$0xff]
        %v1887 = vld [vmem:[#allocation2 + $0x48] sm:$0xff]
        %v1888 = vld [vmem:[#allocation2 + $0x50] sm:$0xff]
        %v1889 = vld [vmem:[#allocation2 + $0x58] sm:$0xff]
        %v1890 = vld [vmem:[#allocation2 + $0x60] sm:$0xff]
        %v1891 = vld [vmem:[#allocation2 + $0x68] sm:$0xff]
        %v1892 = vld [vmem:[#allocation2 + $0x70] sm:$0xff]
        %v1893 = vld [vmem:[#allocation2 + $0x78] sm:$0xff]
        %v1894 = vld [vmem:[#allocation2 + $0x80] sm:$0xff]
        %v1895 = vld [vmem:[#allocation2 + $0x88] sm:$0xff]
        %v1896 = vld [vmem:[#allocation2 + $0x90] sm:$0xff]
        %v1897 = vld [vmem:[#allocation2 + $0x98] sm:$0xff]
        %v1898 = vld [vmem:[#allocation2 + $0xa0] sm:$0xff]
        %v1899 = vld [vmem:[#allocation2 + $0xa8] sm:$0xff]
        %v1900 = vld [vmem:[#allocation2 + $0xb0] sm:$0xff]
        %v1901 = vld [vmem:[#allocation2 + $0xb8] sm:$0xff]
        %v1902 = vld [vmem:[#allocation2 + $0xc0] sm:$0xff]
        %v1903 = vld [vmem:[#allocation2 + $0xc8] sm:$0xff]
        %v1904 = vld [vmem:[#allocation2 + $0xd0] sm:$0xff]
        %v1905 = vld [vmem:[#allocation2 + $0xd8] sm:$0xff]
        %v1906 = vld [vmem:[#allocation2 + $0xe0] sm:$0xff]
        %v1907 = vld [vmem:[#allocation2 + $0xe8] sm:$0xff]
        %v1908 = vld [vmem:[#allocation2 + $0xf0] sm:$0xff]
        %v1909 = vld [vmem:[#allocation2 + $0xf8] sm:$0xff]
        %v1910 = vmax.f32 %v1878, %v1778
        %v1911 = vmax.f32 %v1879, %v1780
        %v1912 = vmax.f32 %v1880, %v1782
        %v1913 = vmax.f32 %v1881, %v1784
        %v1914 = vmax.f32 %v1882, %v1786
        %v1915 = vmax.f32 %v1883, %v1788
        %v1916 = vmax.f32 %v1884, %v1790
        %v1917 = vmax.f32 %v1885, %v1792
        %v1918 = vmax.f32 %v1886, %v1794
        %v1919 = vmax.f32 %v1887, %v1796
        %v1920 = vmax.f32 %v1888, %v1798
        %v1921 = vmax.f32 %v1889, %v1800
        %v1922 = vmax.f32 %v1890, %v1802
        %v1923 = vmax.f32 %v1891, %v1804
        %v1924 = vmax.f32 %v1892, %v1806
        %v1925 = vmax.f32 %v1893, %v1808
        %v1926 = vmax.f32 %v1894, %v1810
        %v1927 = vmax.f32 %v1895, %v1812
        %v1928 = vmax.f32 %v1896, %v1814
        %v1929 = vmax.f32 %v1897, %v1816
        %v1930 = vmax.f32 %v1898, %v1818
        %v1931 = vmax.f32 %v1899, %v1820
        %v1932 = vmax.f32 %v1900, %v1822
        %v1933 = vmax.f32 %v1901, %v1824
        %v1934 = vmax.f32 %v1902, %v1826
        %v1935 = vmax.f32 %v1903, %v1828
        %v1936 = vmax.f32 %v1904, %v1830
        %v1937 = vmax.f32 %v1905, %v1832
        %v1938 = vmax.f32 %v1906, %v1834
        %v1939 = vmax.f32 %v1907, %v1836
        %v1940 = vmax.f32 %v1908, %v1838
        %v1941 = vmax.f32 %v1909, %v1840
        %vm1942 = vcmask 7168
        %1943 = vst.msk [vmem:[#allocation2] sm:$0xff] %vm1942, %v1910
        %1944 = vst.msk [vmem:[#allocation2 + $0x8] sm:$0xff] %vm1942, %v1911
        %1945 = vst.msk [vmem:[#allocation2 + $0x10] sm:$0xff] %vm1942, %v1912
        %1946 = vst.msk [vmem:[#allocation2 + $0x18] sm:$0xff] %vm1942, %v1913
        %1947 = vst.msk [vmem:[#allocation2 + $0x20] sm:$0xff] %vm1942, %v1914
        %1948 = vst.msk [vmem:[#allocation2 + $0x28] sm:$0xff] %vm1942, %v1915
        %1949 = vst.msk [vmem:[#allocation2 + $0x30] sm:$0xff] %vm1942, %v1916
        %1950 = vst.msk [vmem:[#allocation2 + $0x38] sm:$0xff] %vm1942, %v1917
        %1951 = vst.msk [vmem:[#allocation2 + $0x40] sm:$0xff] %vm1942, %v1918
        %1952 = vst.msk [vmem:[#allocation2 + $0x48] sm:$0xff] %vm1942, %v1919
        %1953 = vst.msk [vmem:[#allocation2 + $0x50] sm:$0xff] %vm1942, %v1920
        %1954 = vst.msk [vmem:[#allocation2 + $0x58] sm:$0xff] %vm1942, %v1921
        %1955 = vst.msk [vmem:[#allocation2 + $0x60] sm:$0xff] %vm1942, %v1922
        %1956 = vst.msk [vmem:[#allocation2 + $0x68] sm:$0xff] %vm1942, %v1923
        %1957 = vst.msk [vmem:[#allocation2 + $0x70] sm:$0xff] %vm1942, %v1924
        %1958 = vst.msk [vmem:[#allocation2 + $0x78] sm:$0xff] %vm1942, %v1925
        %1959 = vst.msk [vmem:[#allocation2 + $0x80] sm:$0xff] %vm1942, %v1926
        %1960 = vst.msk [vmem:[#allocation2 + $0x88] sm:$0xff] %vm1942, %v1927
        %1961 = vst.msk [vmem:[#allocation2 + $0x90] sm:$0xff] %vm1942, %v1928
        %1962 = vst.msk [vmem:[#allocation2 + $0x98] sm:$0xff] %vm1942, %v1929
        %1963 = vst.msk [vmem:[#allocation2 + $0xa0] sm:$0xff] %vm1942, %v1930
        %1964 = vst.msk [vmem:[#allocation2 + $0xa8] sm:$0xff] %vm1942, %v1931
        %1965 = vst.msk [vmem:[#allocation2 + $0xb0] sm:$0xff] %vm1942, %v1932
        %1966 = vst.msk [vmem:[#allocation2 + $0xb8] sm:$0xff] %vm1942, %v1933
        %1967 = vst.msk [vmem:[#allocation2 + $0xc0] sm:$0xff] %vm1942, %v1934
        %1968 = vst.msk [vmem:[#allocation2 + $0xc8] sm:$0xff] %vm1942, %v1935
        %1969 = vst.msk [vmem:[#allocation2 + $0xd0] sm:$0xff] %vm1942, %v1936
        %1970 = vst.msk [vmem:[#allocation2 + $0xd8] sm:$0xff] %vm1942, %v1937
        %1971 = vst.msk [vmem:[#allocation2 + $0xe0] sm:$0xff] %vm1942, %v1938
        %1972 = vst.msk [vmem:[#allocation2 + $0xe8] sm:$0xff] %vm1942, %v1939
        %1973 = vst.msk [vmem:[#allocation2 + $0xf0] sm:$0xff] %vm1942, %v1940
        %1974 = vst.msk [vmem:[#allocation2 + $0xf8] sm:$0xff] %vm1942, %v1941
        %p1975 = scmp.eq.s32.totalorder %s34, 3
        // Predicated region
        $region85: #{tpu_custom_call.1} parent=79 // pred_check
          %p1976 = pneg %p1975
        $region86: #{tpu_custom_call.1} parent=79 // pred_check_branch
          %1978 = sbr.rel (%p1976) target = $region88
        $region87: #{tpu_custom_call.1} parent=79 // pred_region
          %v1979 = vld [vmem:[#allocation2] sm:$0xff]
          %v1980 = vld [vmem:[#allocation2 + $0x8] sm:$0xff]
          %v1981 = vld [vmem:[#allocation2 + $0x10] sm:$0xff]
          %v1982 = vld [vmem:[#allocation2 + $0x18] sm:$0xff]
          %v1983 = vld [vmem:[#allocation2 + $0x20] sm:$0xff]
          %v1984 = vld [vmem:[#allocation2 + $0x28] sm:$0xff]
          %v1985 = vld [vmem:[#allocation2 + $0x30] sm:$0xff]
          %v1986 = vld [vmem:[#allocation2 + $0x38] sm:$0xff]
          %v1987 = vld [vmem:[#allocation2 + $0x40] sm:$0xff]
          %v1988 = vld [vmem:[#allocation2 + $0x48] sm:$0xff]
          %v1989 = vld [vmem:[#allocation2 + $0x50] sm:$0xff]
          %v1990 = vld [vmem:[#allocation2 + $0x58] sm:$0xff]
          %v1991 = vld [vmem:[#allocation2 + $0x60] sm:$0xff]
          %v1992 = vld [vmem:[#allocation2 + $0x68] sm:$0xff]
          %v1993 = vld [vmem:[#allocation2 + $0x70] sm:$0xff]
          %v1994 = vld [vmem:[#allocation2 + $0x78] sm:$0xff]
          %v1995 = vld [vmem:[#allocation2 + $0x80] sm:$0xff]
          %v1996 = vld [vmem:[#allocation2 + $0x88] sm:$0xff]
          %v1997 = vld [vmem:[#allocation2 + $0x90] sm:$0xff]
          %v1998 = vld [vmem:[#allocation2 + $0x98] sm:$0xff]
          %v1999 = vld [vmem:[#allocation2 + $0xa0] sm:$0xff]
          %v2000 = vld [vmem:[#allocation2 + $0xa8] sm:$0xff]
          %v2001 = vld [vmem:[#allocation2 + $0xb0] sm:$0xff]
          %v2002 = vld [vmem:[#allocation2 + $0xb8] sm:$0xff]
          %v2003 = vld [vmem:[#allocation2 + $0xc0] sm:$0xff]
          %v2004 = vld [vmem:[#allocation2 + $0xc8] sm:$0xff]
          %v2005 = vld [vmem:[#allocation2 + $0xd0] sm:$0xff]
          %v2006 = vld [vmem:[#allocation2 + $0xd8] sm:$0xff]
          %v2007 = vld [vmem:[#allocation2 + $0xe0] sm:$0xff]
          %v2008 = vld [vmem:[#allocation2 + $0xe8] sm:$0xff]
          %v2009 = vld [vmem:[#allocation2 + $0xf0] sm:$0xff]
          %v2010 = vld [vmem:[#allocation2 + $0xf8] sm:$0xff]
          %v2011 = vld [vmem:[%s528] sm:$0x1]
          %v2012 = vld [vmem:[%s8] sm:$0xff]
          %v2013 = vld [vmem:[%s8 + $0x8] sm:$0xff]
          %v2014 = vld [vmem:[%s8 + $0x10] sm:$0xff]
          %v2015 = vld [vmem:[%s8 + $0x18] sm:$0xff]
          %v2016 = vld [vmem:[%s8 + $0x20] sm:$0xff]
          %v2017 = vld [vmem:[%s8 + $0x28] sm:$0xff]
          %v2018 = vld [vmem:[%s8 + $0x30] sm:$0xff]
          %v2019 = vld [vmem:[%s8 + $0x38] sm:$0xff]
          %v2020 = vld [vmem:[%s8 + $0x40] sm:$0xff]
          %v2021 = vld [vmem:[%s8 + $0x48] sm:$0xff]
          %v2022 = vld [vmem:[%s8 + $0x50] sm:$0xff]
          %v2023 = vld [vmem:[%s8 + $0x58] sm:$0xff]
          %v2024 = vld [vmem:[%s8 + $0x60] sm:$0xff]
          %v2025 = vld [vmem:[%s8 + $0x68] sm:$0xff]
          %v2026 = vld [vmem:[%s8 + $0x70] sm:$0xff]
          %v2027 = vld [vmem:[%s8 + $0x78] sm:$0xff]
          %v2028 = vld [vmem:[%s8 + $0x80] sm:$0xff]
          %v2029 = vld [vmem:[%s8 + $0x88] sm:$0xff]
          %v2030 = vld [vmem:[%s8 + $0x90] sm:$0xff]
          %v2031 = vld [vmem:[%s8 + $0x98] sm:$0xff]
          %v2032 = vld [vmem:[%s8 + $0xa0] sm:$0xff]
          %v2033 = vld [vmem:[%s8 + $0xa8] sm:$0xff]
          %v2034 = vld [vmem:[%s8 + $0xb0] sm:$0xff]
          %v2035 = vld [vmem:[%s8 + $0xb8] sm:$0xff]
          %v2036 = vld [vmem:[%s8 + $0xc0] sm:$0xff]
          %v2037 = vld [vmem:[%s8 + $0xc8] sm:$0xff]
          %v2038 = vld [vmem:[%s8 + $0xd0] sm:$0xff]
          %v2039 = vld [vmem:[%s8 + $0xd8] sm:$0xff]
          %v2040 = vld [vmem:[%s8 + $0xe0] sm:$0xff]
          %v2041 = vld [vmem:[%s8 + $0xe8] sm:$0xff]
          %v2042 = vld [vmem:[%s8 + $0xf0] sm:$0xff]
          %v2043 = vld [vmem:[%s8 + $0xf8] sm:$0xff]
          %v2044 = vld [vmem:[%s8 + $0x100] sm:$0xff]
          %v2045 = vld [vmem:[%s8 + $0x108] sm:$0xff]
          %v2046 = vld [vmem:[%s8 + $0x110] sm:$0xff]
          %v2047 = vld [vmem:[%s8 + $0x118] sm:$0xff]
          %v2048 = vld [vmem:[%s8 + $0x120] sm:$0xff]
          %v2049 = vld [vmem:[%s8 + $0x128] sm:$0xff]
          %v2050 = vld [vmem:[%s8 + $0x130] sm:$0xff]
          %v2051 = vld [vmem:[%s8 + $0x138] sm:$0xff]
          %v2052 = vld [vmem:[%s8 + $0x140] sm:$0xff]
          %v2053 = vld [vmem:[%s8 + $0x148] sm:$0xff]
          %v2054 = vld [vmem:[%s8 + $0x150] sm:$0xff]
          %v2055 = vld [vmem:[%s8 + $0x158] sm:$0xff]
          %v2056 = vld [vmem:[%s8 + $0x160] sm:$0xff]
          %v2057 = vld [vmem:[%s8 + $0x168] sm:$0xff]
          %v2058 = vld [vmem:[%s8 + $0x170] sm:$0xff]
          %v2059 = vld [vmem:[%s8 + $0x178] sm:$0xff]
          %v2060 = vld [vmem:[%s8 + $0x180] sm:$0xff]
          %v2061 = vld [vmem:[%s8 + $0x188] sm:$0xff]
          %v2062 = vld [vmem:[%s8 + $0x190] sm:$0xff]
          %v2063 = vld [vmem:[%s8 + $0x198] sm:$0xff]
          %v2064 = vld [vmem:[%s8 + $0x1a0] sm:$0xff]
          %v2065 = vld [vmem:[%s8 + $0x1a8] sm:$0xff]
          %v2066 = vld [vmem:[%s8 + $0x1b0] sm:$0xff]
          %v2067 = vld [vmem:[%s8 + $0x1b8] sm:$0xff]
          %v2068 = vld [vmem:[%s8 + $0x1c0] sm:$0xff]
          %v2069 = vld [vmem:[%s8 + $0x1c8] sm:$0xff]
          %v2070 = vld [vmem:[%s8 + $0x1d0] sm:$0xff]
          %v2071 = vld [vmem:[%s8 + $0x1d8] sm:$0xff]
          %v2072 = vld [vmem:[%s8 + $0x1e0] sm:$0xff]
          %v2073 = vld [vmem:[%s8 + $0x1e8] sm:$0xff]
          %v2074 = vld [vmem:[%s8 + $0x1f0] sm:$0xff]
          %v2075 = vld [vmem:[%s8 + $0x1f8] sm:$0xff]
          %v2076 = vld [vmem:[%s9] sm:$0xff]
          %v2077 = vld [vmem:[%s9 + $0x8] sm:$0xff]
          %v2078 = vld [vmem:[%s9 + $0x10] sm:$0xff]
          %v2079 = vld [vmem:[%s9 + $0x18] sm:$0xff]
          %v2080 = vld [vmem:[%s9 + $0x20] sm:$0xff]
          %v2081 = vld [vmem:[%s9 + $0x28] sm:$0xff]
          %v2082 = vld [vmem:[%s9 + $0x30] sm:$0xff]
          %v2083 = vld [vmem:[%s9 + $0x38] sm:$0xff]
          %v2084 = vld [vmem:[%s9 + $0x40] sm:$0xff]
          %v2085 = vld [vmem:[%s9 + $0x48] sm:$0xff]
          %v2086 = vld [vmem:[%s9 + $0x50] sm:$0xff]
          %v2087 = vld [vmem:[%s9 + $0x58] sm:$0xff]
          %v2088 = vld [vmem:[%s9 + $0x60] sm:$0xff]
          %v2089 = vld [vmem:[%s9 + $0x68] sm:$0xff]
          %v2090 = vld [vmem:[%s9 + $0x70] sm:$0xff]
          %v2091 = vld [vmem:[%s9 + $0x78] sm:$0xff]
          %v2092 = vld [vmem:[%s9 + $0x80] sm:$0xff]
          %v2093 = vld [vmem:[%s9 + $0x88] sm:$0xff]
          %v2094 = vld [vmem:[%s9 + $0x90] sm:$0xff]
          %v2095 = vld [vmem:[%s9 + $0x98] sm:$0xff]
          %v2096 = vld [vmem:[%s9 + $0xa0] sm:$0xff]
          %v2097 = vld [vmem:[%s9 + $0xa8] sm:$0xff]
          %v2098 = vld [vmem:[%s9 + $0xb0] sm:$0xff]
          %v2099 = vld [vmem:[%s9 + $0xb8] sm:$0xff]
          %v2100 = vld [vmem:[%s9 + $0xc0] sm:$0xff]
          %v2101 = vld [vmem:[%s9 + $0xc8] sm:$0xff]
          %v2102 = vld [vmem:[%s9 + $0xd0] sm:$0xff]
          %v2103 = vld [vmem:[%s9 + $0xd8] sm:$0xff]
          %v2104 = vld [vmem:[%s9 + $0xe0] sm:$0xff]
          %v2105 = vld [vmem:[%s9 + $0xe8] sm:$0xff]
          %v2106 = vld [vmem:[%s9 + $0xf0] sm:$0xff]
          %v2107 = vld [vmem:[%s9 + $0xf8] sm:$0xff]
          %v2109 = vlaneseq
          %v2110 = vshrl.u32 %v2109, 7
          %v2111 = vsub.s32 0, %v2110
          %v2112 = vrot.slane %v2011, %v2111
          %v2114 = vmul.f32 %v2076, %v2112
          %v2115 = vmul.f32 %v2077, %v2112
          %v2116 = vmul.f32 %v2078, %v2112
          %v2117 = vmul.f32 %v2079, %v2112
          %v2118 = vmul.f32 %v2080, %v2112
          %v2119 = vmul.f32 %v2081, %v2112
          %v2120 = vmul.f32 %v2082, %v2112
          %v2121 = vmul.f32 %v2083, %v2112
          %v2122 = vmul.f32 %v2084, %v2112
          %v2123 = vmul.f32 %v2085, %v2112
          %v2124 = vmul.f32 %v2086, %v2112
          %v2125 = vmul.f32 %v2087, %v2112
          %v2126 = vmul.f32 %v2088, %v2112
          %v2127 = vmul.f32 %v2089, %v2112
          %v2128 = vmul.f32 %v2090, %v2112
          %v2129 = vmul.f32 %v2091, %v2112
          %v2130 = vmul.f32 %v2092, %v2112
          %v2131 = vmul.f32 %v2093, %v2112
          %v2132 = vmul.f32 %v2094, %v2112
          %v2133 = vmul.f32 %v2095, %v2112
          %v2134 = vmul.f32 %v2096, %v2112
          %v2135 = vmul.f32 %v2097, %v2112
          %v2136 = vmul.f32 %v2098, %v2112
          %v2137 = vmul.f32 %v2099, %v2112
          %v2138 = vmul.f32 %v2100, %v2112
          %v2139 = vmul.f32 %v2101, %v2112
          %v2140 = vmul.f32 %v2102, %v2112
          %v2141 = vmul.f32 %v2103, %v2112
          %v2142 = vmul.f32 %v2104, %v2112
          %v2143 = vmul.f32 %v2105, %v2112
          %v2144 = vmul.f32 %v2106, %v2112
          %v2145 = vmul.f32 %v2107, %v2112
          %vm2146 = vcmask 23552
          %v2147 = vsel %vm2146, %v2114, 0.0
          %2148 = vadd.xlane.f32.xlu0 %v2147
          %v2149 = vpop.xlane.xlu0 %2148
          %v2150 = vsel %vm2146, %v2115, 0.0
          %2151 = vadd.xlane.f32.xlu0 %v2150
          %v2152 = vpop.xlane.xlu0 %2151
          %v2153 = vsel %vm2146, %v2116, 0.0
          %2154 = vadd.xlane.f32.xlu0 %v2153
          %v2155 = vpop.xlane.xlu0 %2154
          %v2156 = vsel %vm2146, %v2117, 0.0
          %2157 = vadd.xlane.f32.xlu0 %v2156
          %v2158 = vpop.xlane.xlu0 %2157
          %v2159 = vsel %vm2146, %v2118, 0.0
          %2160 = vadd.xlane.f32.xlu0 %v2159
          %v2161 = vpop.xlane.xlu0 %2160
          %v2162 = vsel %vm2146, %v2119, 0.0
          %2163 = vadd.xlane.f32.xlu0 %v2162
          %v2164 = vpop.xlane.xlu0 %2163
          %v2165 = vsel %vm2146, %v2120, 0.0
          %2166 = vadd.xlane.f32.xlu0 %v2165
          %v2167 = vpop.xlane.xlu0 %2166
          %v2168 = vsel %vm2146, %v2121, 0.0
          %2169 = vadd.xlane.f32.xlu0 %v2168
          %v2170 = vpop.xlane.xlu0 %2169
          %v2171 = vsel %vm2146, %v2122, 0.0
          %2172 = vadd.xlane.f32.xlu0 %v2171
          %v2173 = vpop.xlane.xlu0 %2172
          %v2174 = vsel %vm2146, %v2123, 0.0
          %2175 = vadd.xlane.f32.xlu0 %v2174
          %v2176 = vpop.xlane.xlu0 %2175
          %v2177 = vsel %vm2146, %v2124, 0.0
          %2178 = vadd.xlane.f32.xlu0 %v2177
          %v2179 = vpop.xlane.xlu0 %2178
          %v2180 = vsel %vm2146, %v2125, 0.0
          %2181 = vadd.xlane.f32.xlu0 %v2180
          %v2182 = vpop.xlane.xlu0 %2181
          %v2183 = vsel %vm2146, %v2126, 0.0
          %2184 = vadd.xlane.f32.xlu0 %v2183
          %v2185 = vpop.xlane.xlu0 %2184
          %v2186 = vsel %vm2146, %v2127, 0.0
          %2187 = vadd.xlane.f32.xlu0 %v2186
          %v2188 = vpop.xlane.xlu0 %2187
          %v2189 = vsel %vm2146, %v2128, 0.0
          %2190 = vadd.xlane.f32.xlu0 %v2189
          %v2191 = vpop.xlane.xlu0 %2190
          %v2192 = vsel %vm2146, %v2129, 0.0
          %2193 = vadd.xlane.f32.xlu0 %v2192
          %v2194 = vpop.xlane.xlu0 %2193
          %v2195 = vsel %vm2146, %v2130, 0.0
          %2196 = vadd.xlane.f32.xlu0 %v2195
          %v2197 = vpop.xlane.xlu0 %2196
          %v2198 = vsel %vm2146, %v2131, 0.0
          %2199 = vadd.xlane.f32.xlu0 %v2198
          %v2200 = vpop.xlane.xlu0 %2199
          %v2201 = vsel %vm2146, %v2132, 0.0
          %2202 = vadd.xlane.f32.xlu0 %v2201
          %v2203 = vpop.xlane.xlu0 %2202
          %v2204 = vsel %vm2146, %v2133, 0.0
          %2205 = vadd.xlane.f32.xlu0 %v2204
          %v2206 = vpop.xlane.xlu0 %2205
          %v2207 = vsel %vm2146, %v2134, 0.0
          %2208 = vadd.xlane.f32.xlu0 %v2207
          %v2209 = vpop.xlane.xlu0 %2208
          %v2210 = vsel %vm2146, %v2135, 0.0
          %2211 = vadd.xlane.f32.xlu0 %v2210
          %v2212 = vpop.xlane.xlu0 %2211
          %v2213 = vsel %vm2146, %v2136, 0.0
          %2214 = vadd.xlane.f32.xlu0 %v2213
          %v2215 = vpop.xlane.xlu0 %2214
          %v2216 = vsel %vm2146, %v2137, 0.0
          %2217 = vadd.xlane.f32.xlu0 %v2216
          %v2218 = vpop.xlane.xlu0 %2217
          %v2219 = vsel %vm2146, %v2138, 0.0
          %2220 = vadd.xlane.f32.xlu0 %v2219
          %v2221 = vpop.xlane.xlu0 %2220
          %v2222 = vsel %vm2146, %v2139, 0.0
          %2223 = vadd.xlane.f32.xlu0 %v2222
          %v2224 = vpop.xlane.xlu0 %2223
          %v2225 = vsel %vm2146, %v2140, 0.0
          %2226 = vadd.xlane.f32.xlu0 %v2225
          %v2227 = vpop.xlane.xlu0 %2226
          %v2228 = vsel %vm2146, %v2141, 0.0
          %2229 = vadd.xlane.f32.xlu0 %v2228
          %v2230 = vpop.xlane.xlu0 %2229
          %v2231 = vsel %vm2146, %v2142, 0.0
          %2232 = vadd.xlane.f32.xlu0 %v2231
          %v2233 = vpop.xlane.xlu0 %2232
          %v2234 = vsel %vm2146, %v2143, 0.0
          %2235 = vadd.xlane.f32.xlu0 %v2234
          %v2236 = vpop.xlane.xlu0 %2235
          %v2237 = vsel %vm2146, %v2144, 0.0
          %2238 = vadd.xlane.f32.xlu0 %v2237
          %v2239 = vpop.xlane.xlu0 %2238
          %v2240 = vsel %vm2146, %v2145, 0.0
          %2241 = vadd.xlane.f32.xlu0 %v2240
          %v2242 = vpop.xlane.xlu0 %2241
          %2243 = vmatprep.subr.mxu0 0.0
          %2244 = vmatpush1.msra.mxu0 %v1979
          %2245 = vmatprep.subr.mxu0 0.0
          %2246 = vmatpush1.msra.mxu0 %v1980
          %2247 = vmatprep.subr.mxu0 0.0
          %2248 = vmatpush1.msra.mxu0 %v1981
          %2249 = vmatprep.subr.mxu0 0.0
          %2250 = vmatpush1.msra.mxu0 %v1982
          %2251 = vmatprep.subr.mxu0 0.0
          %2252 = vmatpush1.msra.mxu0 %v1983
          %2253 = vmatprep.subr.mxu0 0.0
          %2254 = vmatpush1.msra.mxu0 %v1984
          %2255 = vmatprep.subr.mxu0 0.0
          %2256 = vmatpush1.msra.mxu0 %v1985
          %2257 = vmatprep.subr.mxu0 0.0
          %2258 = vmatpush1.msra.mxu0 %v1986
          %2259 = vmatprep.subr.mxu0 0.0
          %2260 = vmatpush1.msra.mxu0 %v1987
          %2261 = vmatprep.subr.mxu0 0.0
          %2262 = vmatpush1.msra.mxu0 %v1988
          %2263 = vmatprep.subr.mxu0 0.0
          %2264 = vmatpush1.msra.mxu0 %v1989
          %2265 = vmatprep.subr.mxu0 0.0
          %2266 = vmatpush1.msra.mxu0 %v1990
          %2267 = vmatprep.subr.mxu0 0.0
          %2268 = vmatpush1.msra.mxu0 %v1991
          %2269 = vmatprep.subr.mxu0 0.0
          %2270 = vmatpush1.msra.mxu0 %v1992
          %2271 = vmatprep.subr.mxu0 0.0
          %2272 = vmatpush1.msra.mxu0 %v1993
          %2273 = vmatprep.subr.mxu0 0.0
          %2274 = vmatpush1.msra.mxu0 %v1994
          %2275 = vmatprep.subr.mxu0 0.0
          %2276 = vmatpush1.msra.mxu0 %v1995
          %2277 = vmatprep.subr.mxu0 0.0
          %2278 = vmatpush1.msra.mxu0 %v1996
          %2279 = vmatprep.subr.mxu0 0.0
          %2280 = vmatpush1.msra.mxu0 %v1997
          %2281 = vmatprep.subr.mxu0 0.0
          %2282 = vmatpush1.msra.mxu0 %v1998
          %2283 = vmatprep.subr.mxu0 0.0
          %2284 = vmatpush1.msra.mxu0 %v1999
          %2285 = vmatprep.subr.mxu0 0.0
          %2286 = vmatpush1.msra.mxu0 %v2000
          %2287 = vmatprep.subr.mxu0 0.0
          %2288 = vmatpush1.msra.mxu0 %v2001
          %2289 = vmatprep.subr.mxu0 0.0
          %2290 = vmatpush1.msra.mxu0 %v2002
          %2291 = vmatprep.subr.mxu0 0.0
          %2292 = vmatpush1.msra.mxu0 %v2003
          %2293 = vmatprep.subr.mxu0 0.0
          %2294 = vmatpush1.msra.mxu0 %v2004
          %2295 = vmatprep.subr.mxu0 0.0
          %2296 = vmatpush1.msra.mxu0 %v2005
          %2297 = vmatprep.subr.mxu0 0.0
          %2298 = vmatpush1.msra.mxu0 %v2006
          %2299 = vmatprep.subr.mxu0 0.0
          %2300 = vmatpush1.msra.mxu0 %v2007
          %2301 = vmatprep.subr.mxu0 0.0
          %2302 = vmatpush1.msra.mxu0 %v2008
          %2303 = vmatprep.subr.mxu0 0.0
          %2304 = vmatpush1.msra.mxu0 %v2009
          %2305 = vmatprep.subr.mxu0 0.0
          %2306 = vmatpush1.msra.mxu0 %v2010
          %2307 = vmatprep.mubr.f32.mxu0 %v2013
          %2308 = vmatmul.mubr.f32.gmra.mrb[0].mxu0 %v2012
          %v2309 = vpop.f32.mrb[0].mxu0
          %v2310 = vadd.f32 %v2149, %v2309
          %v2311 = vpop.f32.mrb[0].mxu0
          %2312 = vmatprep.mubr.f32.mxu0 %v2015
          %2313 = vmatmul.mubr.f32.gmra.mrb[0].mxu0 %v2014
          %v2314 = vpop.f32.mrb[0].mxu0
          %v2315 = vadd.f32 %v2152, %v2314
          %v2316 = vpop.f32.mrb[0].mxu0
          %2317 = vmatprep.mubr.f32.mxu0 %v2017
          %2318 = vmatmul.mubr.f32.gmra.mrb[0].mxu0 %v2016
          %v2319 = vpop.f32.mrb[0].mxu0
          %v2320 = vadd.f32 %v2155, %v2319
          %v2321 = vpop.f32.mrb[0].mxu0
          %2322 = vmatprep.mubr.f32.mxu0 %v2019
          %2323 = vmatmul.mubr.f32.gmra.mrb[0].mxu0 %v2018
          %v2324 = vpop.f32.mrb[0].mxu0
          %v2325 = vadd.f32 %v2158, %v2324
          %v2326 = vpop.f32.mrb[0].mxu0
          %2327 = vmatprep.mubr.f32.mxu0 %v2021
          %2328 = vmatmul.mubr.f32.gmra.mrb[0].mxu0 %v2020
          %v2329 = vpop.f32.mrb[0].mxu0
          %v2330 = vadd.f32 %v2161, %v2329
          %v2331 = vpop.f32.mrb[0].mxu0
          %2332 = vmatprep.mubr.f32.mxu0 %v2023
          %2333 = vmatmul.mubr.f32.gmra.mrb[0].mxu0 %v2022
          %v2334 = vpop.f32.mrb[0].mxu0
          %v2335 = vadd.f32 %v2164, %v2334
          %v2336 = vpop.f32.mrb[0].mxu0
          %2337 = vmatprep.mubr.f32.mxu0 %v2025
          %2338 = vmatmul.mubr.f32.gmra.mrb[0].mxu0 %v2024
          %v2339 = vpop.f32.mrb[0].mxu0
          %v2340 = vadd.f32 %v2167, %v2339
          %v2341 = vpop.f32.mrb[0].mxu0
          %2342 = vmatprep.mubr.f32.mxu0 %v2027
          %2343 = vmatmul.mubr.f32.gmra.mrb[0].mxu0 %v2026
          %v2344 = vpop.f32.mrb[0].mxu0
          %v2345 = vadd.f32 %v2170, %v2344
          %v2346 = vpop.f32.mrb[0].mxu0
          %2347 = vmatprep.mubr.f32.mxu0 %v2029
          %2348 = vmatmul.mubr.f32.gmra.mrb[0].mxu0 %v2028
          %v2349 = vpop.f32.mrb[0].mxu0
          %v2350 = vadd.f32 %v2173, %v2349
          %v2351 = vpop.f32.mrb[0].mxu0
          %2352 = vmatprep.mubr.f32.mxu0 %v2031
          %2353 = vmatmul.mubr.f32.gmra.mrb[0].mxu0 %v2030
          %v2354 = vpop.f32.mrb[0].mxu0
          %v2355 = vadd.f32 %v2176, %v2354
          %v2356 = vpop.f32.mrb[0].mxu0
          %2357 = vmatprep.mubr.f32.mxu0 %v2033
          %2358 = vmatmul.mubr.f32.gmra.mrb[0].mxu0 %v2032
          %v2359 = vpop.f32.mrb[0].mxu0
          %v2360 = vadd.f32 %v2179, %v2359
          %v2361 = vpop.f32.mrb[0].mxu0
          %2362 = vmatprep.mubr.f32.mxu0 %v2035
          %2363 = vmatmul.mubr.f32.gmra.mrb[0].mxu0 %v2034
          %v2364 = vpop.f32.mrb[0].mxu0
          %v2365 = vadd.f32 %v2182, %v2364
          %v2366 = vpop.f32.mrb[0].mxu0
          %2367 = vmatprep.mubr.f32.mxu0 %v2037
          %2368 = vmatmul.mubr.f32.gmra.mrb[0].mxu0 %v2036
          %v2369 = vpop.f32.mrb[0].mxu0
          %v2370 = vadd.f32 %v2185, %v2369
          %v2371 = vpop.f32.mrb[0].mxu0
          %2372 = vmatprep.mubr.f32.mxu0 %v2039
          %2373 = vmatmul.mubr.f32.gmra.mrb[0].mxu0 %v2038
          %v2374 = vpop.f32.mrb[0].mxu0
          %v2375 = vadd.f32 %v2188, %v2374
          %v2376 = vpop.f32.mrb[0].mxu0
          %2377 = vmatprep.mubr.f32.mxu0 %v2041
          %2378 = vmatmul.mubr.f32.gmra.mrb[0].mxu0 %v2040
          %v2379 = vpop.f32.mrb[0].mxu0
          %v2380 = vadd.f32 %v2191, %v2379
          %v2381 = vpop.f32.mrb[0].mxu0
          %2382 = vmatprep.mubr.f32.mxu0 %v2043
          %2383 = vmatmul.mubr.f32.gmra.mrb[0].mxu0 %v2042
          %v2384 = vpop.f32.mrb[0].mxu0
          %v2385 = vadd.f32 %v2194, %v2384
          %v2386 = vpop.f32.mrb[0].mxu0
          %2387 = vmatprep.mubr.f32.mxu0 %v2045
          %2388 = vmatmul.mubr.f32.gmra.mrb[0].mxu0 %v2044
          %v2389 = vpop.f32.mrb[0].mxu0
          %v2390 = vadd.f32 %v2197, %v2389
          %v2391 = vpop.f32.mrb[0].mxu0
          %2392 = vmatprep.mubr.f32.mxu0 %v2047
          %2393 = vmatmul.mubr.f32.gmra.mrb[0].mxu0 %v2046
          %v2394 = vpop.f32.mrb[0].mxu0
          %v2395 = vadd.f32 %v2200, %v2394
          %v2396 = vpop.f32.mrb[0].mxu0
          %2397 = vmatprep.mubr.f32.mxu0 %v2049
          %2398 = vmatmul.mubr.f32.gmra.mrb[0].mxu0 %v2048
          %v2399 = vpop.f32.mrb[0].mxu0
          %v2400 = vadd.f32 %v2203, %v2399
          %v2401 = vpop.f32.mrb[0].mxu0
          %2402 = vmatprep.mubr.f32.mxu0 %v2051
          %2403 = vmatmul.mubr.f32.gmra.mrb[0].mxu0 %v2050
          %v2404 = vpop.f32.mrb[0].mxu0
          %v2405 = vadd.f32 %v2206, %v2404
          %v2406 = vpop.f32.mrb[0].mxu0
          %2407 = vmatprep.mubr.f32.mxu0 %v2053
          %2408 = vmatmul.mubr.f32.gmra.mrb[0].mxu0 %v2052
          %v2409 = vpop.f32.mrb[0].mxu0
          %v2410 = vadd.f32 %v2209, %v2409
          %v2411 = vpop.f32.mrb[0].mxu0
          %2412 = vmatprep.mubr.f32.mxu0 %v2055
          %2413 = vmatmul.mubr.f32.gmra.mrb[0].mxu0 %v2054
          %v2414 = vpop.f32.mrb[0].mxu0
          %v2415 = vadd.f32 %v2212, %v2414
          %v2416 = vpop.f32.mrb[0].mxu0
          %2417 = vmatprep.mubr.f32.mxu0 %v2057
          %2418 = vmatmul.mubr.f32.gmra.mrb[0].mxu0 %v2056
          %v2419 = vpop.f32.mrb[0].mxu0
          %v2420 = vadd.f32 %v2215, %v2419
          %v2421 = vpop.f32.mrb[0].mxu0
          %2422 = vmatprep.mubr.f32.mxu0 %v2059
          %2423 = vmatmul.mubr.f32.gmra.mrb[0].mxu0 %v2058
          %v2424 = vpop.f32.mrb[0].mxu0
          %v2425 = vadd.f32 %v2218, %v2424
          %v2426 = vpop.f32.mrb[0].mxu0
          %2427 = vmatprep.mubr.f32.mxu0 %v2061
          %2428 = vmatmul.mubr.f32.gmra.mrb[0].mxu0 %v2060
          %v2429 = vpop.f32.mrb[0].mxu0
          %v2430 = vadd.f32 %v2221, %v2429
          %v2431 = vpop.f32.mrb[0].mxu0
          %2432 = vmatprep.mubr.f32.mxu0 %v2063
          %2433 = vmatmul.mubr.f32.gmra.mrb[0].mxu0 %v2062
          %v2434 = vpop.f32.mrb[0].mxu0
          %v2435 = vadd.f32 %v2224, %v2434
          %v2436 = vpop.f32.mrb[0].mxu0
          %2437 = vmatprep.mubr.f32.mxu0 %v2065
          %2438 = vmatmul.mubr.f32.gmra.mrb[0].mxu0 %v2064
          %v2439 = vpop.f32.mrb[0].mxu0
          %v2440 = vadd.f32 %v2227, %v2439
          %v2441 = vpop.f32.mrb[0].mxu0
          %2442 = vmatprep.mubr.f32.mxu0 %v2067
          %2443 = vmatmul.mubr.f32.gmra.mrb[0].mxu0 %v2066
          %v2444 = vpop.f32.mrb[0].mxu0
          %v2445 = vadd.f32 %v2230, %v2444
          %v2446 = vpop.f32.mrb[0].mxu0
          %2447 = vmatprep.mubr.f32.mxu0 %v2069
          %2448 = vmatmul.mubr.f32.gmra.mrb[0].mxu0 %v2068
          %v2449 = vpop.f32.mrb[0].mxu0
          %v2450 = vadd.f32 %v2233, %v2449
          %v2451 = vpop.f32.mrb[0].mxu0
          %2452 = vmatprep.mubr.f32.mxu0 %v2071
          %2453 = vmatmul.mubr.f32.gmra.mrb[0].mxu0 %v2070
          %v2454 = vpop.f32.mrb[0].mxu0
          %v2455 = vadd.f32 %v2236, %v2454
          %v2456 = vpop.f32.mrb[0].mxu0
          %2457 = vmatprep.mubr.f32.mxu0 %v2073
          %2458 = vmatmul.mubr.f32.gmra.mrb[0].mxu0 %v2072
          %v2459 = vpop.f32.mrb[0].mxu0
          %v2460 = vadd.f32 %v2239, %v2459
          %v2461 = vpop.f32.mrb[0].mxu0
          %2462 = vmatprep.mubr.f32.mxu0 %v2075
          %2463 = vmatmul.mubr.f32.gmra.mrb[0].mxu0 %v2074
          %v2464 = vpop.f32.mrb[0].mxu0
          %v2465 = vadd.f32 %v2242, %v2464
          %v2466 = vpop.f32.mrb[0].mxu0
          %2467 = vdwg.mxu0
          %v2468 = vld [vmem:[%s10] sm:$0xff]
          %v2469 = vld [vmem:[%s10 + $0x8] sm:$0xff]
          %v2470 = vld [vmem:[%s10 + $0x10] sm:$0xff]
          %v2471 = vld [vmem:[%s10 + $0x18] sm:$0xff]
          %v2472 = vld [vmem:[%s10 + $0x20] sm:$0xff]
          %v2473 = vld [vmem:[%s10 + $0x28] sm:$0xff]
          %v2474 = vld [vmem:[%s10 + $0x30] sm:$0xff]
          %v2475 = vld [vmem:[%s10 + $0x38] sm:$0xff]
          %v2476 = vld [vmem:[%s10 + $0x40] sm:$0xff]
          %v2477 = vld [vmem:[%s10 + $0x48] sm:$0xff]
          %v2478 = vld [vmem:[%s10 + $0x50] sm:$0xff]
          %v2479 = vld [vmem:[%s10 + $0x58] sm:$0xff]
          %v2480 = vld [vmem:[%s10 + $0x60] sm:$0xff]
          %v2481 = vld [vmem:[%s10 + $0x68] sm:$0xff]
          %v2482 = vld [vmem:[%s10 + $0x70] sm:$0xff]
          %v2483 = vld [vmem:[%s10 + $0x78] sm:$0xff]
          %v2484 = vld [vmem:[%s10 + $0x80] sm:$0xff]
          %v2485 = vld [vmem:[%s10 + $0x88] sm:$0xff]
          %v2486 = vld [vmem:[%s10 + $0x90] sm:$0xff]
          %v2487 = vld [vmem:[%s10 + $0x98] sm:$0xff]
          %v2488 = vld [vmem:[%s10 + $0xa0] sm:$0xff]
          %v2489 = vld [vmem:[%s10 + $0xa8] sm:$0xff]
          %v2490 = vld [vmem:[%s10 + $0xb0] sm:$0xff]
          %v2491 = vld [vmem:[%s10 + $0xb8] sm:$0xff]
          %v2492 = vld [vmem:[%s10 + $0xc0] sm:$0xff]
          %v2493 = vld [vmem:[%s10 + $0xc8] sm:$0xff]
          %v2494 = vld [vmem:[%s10 + $0xd0] sm:$0xff]
          %v2495 = vld [vmem:[%s10 + $0xd8] sm:$0xff]
          %v2496 = vld [vmem:[%s10 + $0xe0] sm:$0xff]
          %v2497 = vld [vmem:[%s10 + $0xe8] sm:$0xff]
          %v2498 = vld [vmem:[%s10 + $0xf0] sm:$0xff]
          %v2499 = vld [vmem:[%s10 + $0xf8] sm:$0xff]
          %v2500 = vadd.f32 %v2310, %v2468
          %v2501 = vadd.f32 %v2315, %v2469
          %v2502 = vadd.f32 %v2320, %v2470
          %v2503 = vadd.f32 %v2325, %v2471
          %v2504 = vadd.f32 %v2330, %v2472
          %v2505 = vadd.f32 %v2335, %v2473
          %v2506 = vadd.f32 %v2340, %v2474
          %v2507 = vadd.f32 %v2345, %v2475
          %v2508 = vadd.f32 %v2350, %v2476
          %v2509 = vadd.f32 %v2355, %v2477
          %v2510 = vadd.f32 %v2360, %v2478
          %v2511 = vadd.f32 %v2365, %v2479
          %v2512 = vadd.f32 %v2370, %v2480
          %v2513 = vadd.f32 %v2375, %v2481
          %v2514 = vadd.f32 %v2380, %v2482
          %v2515 = vadd.f32 %v2385, %v2483
          %v2516 = vadd.f32 %v2390, %v2484
          %v2517 = vadd.f32 %v2395, %v2485
          %v2518 = vadd.f32 %v2400, %v2486
          %v2519 = vadd.f32 %v2405, %v2487
          %v2520 = vadd.f32 %v2410, %v2488
          %v2521 = vadd.f32 %v2415, %v2489
          %v2522 = vadd.f32 %v2420, %v2490
          %v2523 = vadd.f32 %v2425, %v2491
          %v2524 = vadd.f32 %v2430, %v2492
          %v2525 = vadd.f32 %v2435, %v2493
          %v2526 = vadd.f32 %v2440, %v2494
          %v2527 = vadd.f32 %v2445, %v2495
          %v2528 = vadd.f32 %v2450, %v2496
          %v2529 = vadd.f32 %v2455, %v2497
          %v2530 = vadd.f32 %v2460, %v2498
          %v2531 = vadd.f32 %v2465, %v2499
          %v2532 = vmax.f32 %v2500, 0.0
          %v2533 = vmax.f32 %v2501, 0.0
          %v2534 = vmax.f32 %v2502, 0.0
          %v2535 = vmax.f32 %v2503, 0.0
          %v2536 = vmax.f32 %v2504, 0.0
          %v2537 = vmax.f32 %v2505, 0.0
          %v2538 = vmax.f32 %v2506, 0.0
          %v2539 = vmax.f32 %v2507, 0.0
          %v2540 = vmax.f32 %v2508, 0.0
          %v2541 = vmax.f32 %v2509, 0.0
          %v2542 = vmax.f32 %v2510, 0.0
          %v2543 = vmax.f32 %v2511, 0.0
          %v2544 = vmax.f32 %v2512, 0.0
          %v2545 = vmax.f32 %v2513, 0.0
          %v2546 = vmax.f32 %v2514, 0.0
          %v2547 = vmax.f32 %v2515, 0.0
          %v2548 = vmax.f32 %v2516, 0.0
          %v2549 = vmax.f32 %v2517, 0.0
          %v2550 = vmax.f32 %v2518, 0.0
          %v2551 = vmax.f32 %v2519, 0.0
          %v2552 = vmax.f32 %v2520, 0.0
          %v2553 = vmax.f32 %v2521, 0.0
          %v2554 = vmax.f32 %v2522, 0.0
          %v2555 = vmax.f32 %v2523, 0.0
          %v2556 = vmax.f32 %v2524, 0.0
          %v2557 = vmax.f32 %v2525, 0.0
          %v2558 = vmax.f32 %v2526, 0.0
          %v2559 = vmax.f32 %v2527, 0.0
          %v2560 = vmax.f32 %v2528, 0.0
          %v2561 = vmax.f32 %v2529, 0.0
          %v2562 = vmax.f32 %v2530, 0.0
          %v2563 = vmax.f32 %v2531, 0.0
          %v2564 = vld [vmem:[%s11] sm:$0xff]
          %v2565 = vld [vmem:[%s11 + $0x8] sm:$0xff]
          %v2566 = vld [vmem:[%s11 + $0x10] sm:$0xff]
          %v2567 = vld [vmem:[%s11 + $0x18] sm:$0xff]
          %v2568 = vld [vmem:[%s11 + $0x20] sm:$0xff]
          %v2569 = vld [vmem:[%s11 + $0x28] sm:$0xff]
          %v2570 = vld [vmem:[%s11 + $0x30] sm:$0xff]
          %v2571 = vld [vmem:[%s11 + $0x38] sm:$0xff]
          %v2572 = vld [vmem:[%s11 + $0x40] sm:$0xff]
          %v2573 = vld [vmem:[%s11 + $0x48] sm:$0xff]
          %v2574 = vld [vmem:[%s11 + $0x50] sm:$0xff]
          %v2575 = vld [vmem:[%s11 + $0x58] sm:$0xff]
          %v2576 = vld [vmem:[%s11 + $0x60] sm:$0xff]
          %v2577 = vld [vmem:[%s11 + $0x68] sm:$0xff]
          %v2578 = vld [vmem:[%s11 + $0x70] sm:$0xff]
          %v2579 = vld [vmem:[%s11 + $0x78] sm:$0xff]
          %v2580 = vld [vmem:[%s11 + $0x80] sm:$0xff]
          %v2581 = vld [vmem:[%s11 + $0x88] sm:$0xff]
          %v2582 = vld [vmem:[%s11 + $0x90] sm:$0xff]
          %v2583 = vld [vmem:[%s11 + $0x98] sm:$0xff]
          %v2584 = vld [vmem:[%s11 + $0xa0] sm:$0xff]
          %v2585 = vld [vmem:[%s11 + $0xa8] sm:$0xff]
          %v2586 = vld [vmem:[%s11 + $0xb0] sm:$0xff]
          %v2587 = vld [vmem:[%s11 + $0xb8] sm:$0xff]
          %v2588 = vld [vmem:[%s11 + $0xc0] sm:$0xff]
          %v2589 = vld [vmem:[%s11 + $0xc8] sm:$0xff]
          %v2590 = vld [vmem:[%s11 + $0xd0] sm:$0xff]
          %v2591 = vld [vmem:[%s11 + $0xd8] sm:$0xff]
          %v2592 = vld [vmem:[%s11 + $0xe0] sm:$0xff]
          %v2593 = vld [vmem:[%s11 + $0xe8] sm:$0xff]
          %v2594 = vld [vmem:[%s11 + $0xf0] sm:$0xff]
          %v2595 = vld [vmem:[%s11 + $0xf8] sm:$0xff]
          %v2596 = vld [vmem:[%s12] sm:$0xff]
          %v2597 = vld [vmem:[%s12 + $0x8] sm:$0xff]
          %v2598 = vld [vmem:[%s12 + $0x10] sm:$0xff]
          %v2599 = vld [vmem:[%s12 + $0x18] sm:$0xff]
          %v2600 = vld [vmem:[%s12 + $0x20] sm:$0xff]
          %v2601 = vld [vmem:[%s12 + $0x28] sm:$0xff]
          %v2602 = vld [vmem:[%s12 + $0x30] sm:$0xff]
          %v2603 = vld [vmem:[%s12 + $0x38] sm:$0xff]
          %v2604 = vld [vmem:[%s12 + $0x40] sm:$0xff]
          %v2605 = vld [vmem:[%s12 + $0x48] sm:$0xff]
          %v2606 = vld [vmem:[%s12 + $0x50] sm:$0xff]
          %v2607 = vld [vmem:[%s12 + $0x58] sm:$0xff]
          %v2608 = vld [vmem:[%s12 + $0x60] sm:$0xff]
          %v2609 = vld [vmem:[%s12 + $0x68] sm:$0xff]
          %v2610 = vld [vmem:[%s12 + $0x70] sm:$0xff]
          %v2611 = vld [vmem:[%s12 + $0x78] sm:$0xff]
          %2612 = vmatprep.subr.mxu0 0.0
          %2613 = vmatpush1.msra.mxu0 %v2532
          %2614 = vmatprep.subr.mxu0 0.0
          %2615 = vmatpush1.msra.mxu0 %v2533
          %2616 = vmatprep.subr.mxu0 0.0
          %2617 = vmatpush1.msra.mxu0 %v2534
          %2618 = vmatprep.subr.mxu0 0.0
          %2619 = vmatpush1.msra.mxu0 %v2535
          %2620 = vmatprep.subr.mxu0 0.0
          %2621 = vmatpush1.msra.mxu0 %v2536
          %2622 = vmatprep.subr.mxu0 0.0
          %2623 = vmatpush1.msra.mxu0 %v2537
          %2624 = vmatprep.subr.mxu0 0.0
          %2625 = vmatpush1.msra.mxu0 %v2538
          %2626 = vmatprep.subr.mxu0 0.0
          %2627 = vmatpush1.msra.mxu0 %v2539
          %2628 = vmatprep.subr.mxu0 0.0
          %2629 = vmatpush1.msra.mxu0 %v2540
          %2630 = vmatprep.subr.mxu0 0.0
          %2631 = vmatpush1.msra.mxu0 %v2541
          %2632 = vmatprep.subr.mxu0 0.0
          %2633 = vmatpush1.msra.mxu0 %v2542
          %2634 = vmatprep.subr.mxu0 0.0
          %2635 = vmatpush1.msra.mxu0 %v2543
          %2636 = vmatprep.subr.mxu0 0.0
          %2637 = vmatpush1.msra.mxu0 %v2544
          %2638 = vmatprep.subr.mxu0 0.0
          %2639 = vmatpush1.msra.mxu0 %v2545
          %2640 = vmatprep.subr.mxu0 0.0
          %2641 = vmatpush1.msra.mxu0 %v2546
          %2642 = vmatprep.subr.mxu0 0.0
          %2643 = vmatpush1.msra.mxu0 %v2547
          %2644 = vmatprep.subr.mxu0 0.0
          %2645 = vmatpush1.msra.mxu0 %v2548
          %2646 = vmatprep.subr.mxu0 0.0
          %2647 = vmatpush1.msra.mxu0 %v2549
          %2648 = vmatprep.subr.mxu0 0.0
          %2649 = vmatpush1.msra.mxu0 %v2550
          %2650 = vmatprep.subr.mxu0 0.0
          %2651 = vmatpush1.msra.mxu0 %v2551
          %2652 = vmatprep.subr.mxu0 0.0
          %2653 = vmatpush1.msra.mxu0 %v2552
          %2654 = vmatprep.subr.mxu0 0.0
          %2655 = vmatpush1.msra.mxu0 %v2553
          %2656 = vmatprep.subr.mxu0 0.0
          %2657 = vmatpush1.msra.mxu0 %v2554
          %2658 = vmatprep.subr.mxu0 0.0
          %2659 = vmatpush1.msra.mxu0 %v2555
          %2660 = vmatprep.subr.mxu0 0.0
          %2661 = vmatpush1.msra.mxu0 %v2556
          %2662 = vmatprep.subr.mxu0 0.0
          %2663 = vmatpush1.msra.mxu0 %v2557
          %2664 = vmatprep.subr.mxu0 0.0
          %2665 = vmatpush1.msra.mxu0 %v2558
          %2666 = vmatprep.subr.mxu0 0.0
          %2667 = vmatpush1.msra.mxu0 %v2559
          %2668 = vmatprep.subr.mxu0 0.0
          %2669 = vmatpush1.msra.mxu0 %v2560
          %2670 = vmatprep.subr.mxu0 0.0
          %2671 = vmatpush1.msra.mxu0 %v2561
          %2672 = vmatprep.subr.mxu0 0.0
          %2673 = vmatpush1.msra.mxu0 %v2562
          %2674 = vmatprep.subr.mxu0 0.0
          %2675 = vmatpush1.msra.mxu0 %v2563
          %2676 = vmatprep.mubr.f32.mxu0 %v2565
          %2677 = vmatmul.mubr.f32.gmra.mrb[0].mxu0 %v2564
          %v2678 = vpop.f32.mrb[0].mxu0
          %v2679 = vadd.f32 %v2596, %v2678
          %v2680 = vpop.f32.mrb[0].mxu0
          %2681 = vmatprep.mubr.f32.mxu0 %v2567
          %2682 = vmatmul.mubr.f32.gmra.mrb[0].mxu0 %v2566
          %v2683 = vpop.f32.mrb[0].mxu0
          %v2684 = vadd.f32 %v2597, %v2683
          %v2685 = vpop.f32.mrb[0].mxu0
          %2686 = vmatprep.mubr.f32.mxu0 %v2569
          %2687 = vmatmul.mubr.f32.gmra.mrb[0].mxu0 %v2568
          %v2688 = vpop.f32.mrb[0].mxu0
          %v2689 = vadd.f32 %v2598, %v2688
          %v2690 = vpop.f32.mrb[0].mxu0
          %2691 = vmatprep.mubr.f32.mxu0 %v2571
          %2692 = vmatmul.mubr.f32.gmra.mrb[0].mxu0 %v2570
          %v2693 = vpop.f32.mrb[0].mxu0
          %v2694 = vadd.f32 %v2599, %v2693
          %v2695 = vpop.f32.mrb[0].mxu0
          %2696 = vmatprep.mubr.f32.mxu0 %v2573
          %2697 = vmatmul.mubr.f32.gmra.mrb[0].mxu0 %v2572
          %v2698 = vpop.f32.mrb[0].mxu0
          %v2699 = vadd.f32 %v2600, %v2698
          %v2700 = vpop.f32.mrb[0].mxu0
          %2701 = vmatprep.mubr.f32.mxu0 %v2575
          %2702 = vmatmul.mubr.f32.gmra.mrb[0].mxu0 %v2574
          %v2703 = vpop.f32.mrb[0].mxu0
          %v2704 = vadd.f32 %v2601, %v2703
          %v2705 = vpop.f32.mrb[0].mxu0
          %2706 = vmatprep.mubr.f32.mxu0 %v2577
          %2707 = vmatmul.mubr.f32.gmra.mrb[0].mxu0 %v2576
          %v2708 = vpop.f32.mrb[0].mxu0
          %v2709 = vadd.f32 %v2602, %v2708
          %v2710 = vpop.f32.mrb[0].mxu0
          %2711 = vmatprep.mubr.f32.mxu0 %v2579
          %2712 = vmatmul.mubr.f32.gmra.mrb[0].mxu0 %v2578
          %v2713 = vpop.f32.mrb[0].mxu0
          %v2714 = vadd.f32 %v2603, %v2713
          %v2715 = vpop.f32.mrb[0].mxu0
          %2716 = vmatprep.mubr.f32.mxu0 %v2581
          %2717 = vmatmul.mubr.f32.gmra.mrb[0].mxu0 %v2580
          %v2718 = vpop.f32.mrb[0].mxu0
          %v2719 = vadd.f32 %v2604, %v2718
          %v2720 = vpop.f32.mrb[0].mxu0
          %2721 = vmatprep.mubr.f32.mxu0 %v2583
          %2722 = vmatmul.mubr.f32.gmra.mrb[0].mxu0 %v2582
          %v2723 = vpop.f32.mrb[0].mxu0
          %v2724 = vadd.f32 %v2605, %v2723
          %v2725 = vpop.f32.mrb[0].mxu0
          %2726 = vmatprep.mubr.f32.mxu0 %v2585
          %2727 = vmatmul.mubr.f32.gmra.mrb[0].mxu0 %v2584
          %v2728 = vpop.f32.mrb[0].mxu0
          %v2729 = vadd.f32 %v2606, %v2728
          %v2730 = vpop.f32.mrb[0].mxu0
          %2731 = vmatprep.mubr.f32.mxu0 %v2587
          %2732 = vmatmul.mubr.f32.gmra.mrb[0].mxu0 %v2586
          %v2733 = vpop.f32.mrb[0].mxu0
          %v2734 = vadd.f32 %v2607, %v2733
          %v2735 = vpop.f32.mrb[0].mxu0
          %2736 = vmatprep.mubr.f32.mxu0 %v2589
          %2737 = vmatmul.mubr.f32.gmra.mrb[0].mxu0 %v2588
          %v2738 = vpop.f32.mrb[0].mxu0
          %v2739 = vadd.f32 %v2608, %v2738
          %v2740 = vpop.f32.mrb[0].mxu0
          %2741 = vmatprep.mubr.f32.mxu0 %v2591
          %2742 = vmatmul.mubr.f32.gmra.mrb[0].mxu0 %v2590
          %v2743 = vpop.f32.mrb[0].mxu0
          %v2744 = vadd.f32 %v2609, %v2743
          %v2745 = vpop.f32.mrb[0].mxu0
          %2746 = vmatprep.mubr.f32.mxu0 %v2593
          %2747 = vmatmul.mubr.f32.gmra.mrb[0].mxu0 %v2592
          %v2748 = vpop.f32.mrb[0].mxu0
          %v2749 = vadd.f32 %v2610, %v2748
          %v2750 = vpop.f32.mrb[0].mxu0
          %2751 = vmatprep.mubr.f32.mxu0 %v2595
          %2752 = vmatmul.mubr.f32.gmra.mrb[0].mxu0 %v2594
          %v2753 = vpop.f32.mrb[0].mxu0
          %v2754 = vadd.f32 %v2611, %v2753
          %v2755 = vpop.f32.mrb[0].mxu0
          %2756 = vdwg.mxu0
          %v2757 = vmax.f32 %v2679, 0.0
          %v2758 = vmax.f32 %v2684, 0.0
          %v2759 = vmax.f32 %v2689, 0.0
          %v2760 = vmax.f32 %v2694, 0.0
          %v2761 = vmax.f32 %v2699, 0.0
          %v2762 = vmax.f32 %v2704, 0.0
          %v2763 = vmax.f32 %v2709, 0.0
          %v2764 = vmax.f32 %v2714, 0.0
          %v2765 = vmax.f32 %v2719, 0.0
          %v2766 = vmax.f32 %v2724, 0.0
          %v2767 = vmax.f32 %v2729, 0.0
          %v2768 = vmax.f32 %v2734, 0.0
          %v2769 = vmax.f32 %v2739, 0.0
          %v2770 = vmax.f32 %v2744, 0.0
          %v2771 = vmax.f32 %v2749, 0.0
          %v2772 = vmax.f32 %v2754, 0.0
          %v2773 = vld [vmem:[%s13] sm:$0xff]
          %v2774 = vld [vmem:[%s13 + $0x8] sm:$0xff]
          %v2775 = vld [vmem:[%s13 + $0x10] sm:$0xff]
          %v2776 = vld [vmem:[%s13 + $0x18] sm:$0xff]
          %v2777 = vld [vmem:[%s13 + $0x20] sm:$0xff]
          %v2778 = vld [vmem:[%s13 + $0x28] sm:$0xff]
          %v2779 = vld [vmem:[%s13 + $0x30] sm:$0xff]
          %v2780 = vld [vmem:[%s13 + $0x38] sm:$0xff]
          %v2781 = vld [vmem:[%s13 + $0x40] sm:$0xff]
          %v2782 = vld [vmem:[%s13 + $0x48] sm:$0xff]
          %v2783 = vld [vmem:[%s13 + $0x50] sm:$0xff]
          %v2784 = vld [vmem:[%s13 + $0x58] sm:$0xff]
          %v2785 = vld [vmem:[%s13 + $0x60] sm:$0xff]
          %v2786 = vld [vmem:[%s13 + $0x68] sm:$0xff]
          %v2787 = vld [vmem:[%s13 + $0x70] sm:$0xff]
          %v2788 = vld [vmem:[%s13 + $0x78] sm:$0xff]
          %2790 = vset.pattern.permute.xlu0 0
          %2791 = vperm.xlu0 %2790, %v2757
          %v2792 = vpop.permute.xlu0 %2791
          %2795 = vset.pattern.permute.xlu0 0
          %2796 = vperm.xlu0 %2795, %v2758
          %v2797 = vpop.permute.xlu0 %2796
          %2800 = vset.pattern.permute.xlu0 0
          %2801 = vperm.xlu0 %2800, %v2759
          %v2802 = vpop.permute.xlu0 %2801
          %2805 = vset.pattern.permute.xlu0 0
          %2806 = vperm.xlu0 %2805, %v2760
          %v2807 = vpop.permute.xlu0 %2806
          %2810 = vset.pattern.permute.xlu0 0
          %2811 = vperm.xlu0 %2810, %v2761
          %v2812 = vpop.permute.xlu0 %2811
          %2815 = vset.pattern.permute.xlu0 0
          %2816 = vperm.xlu0 %2815, %v2762
          %v2817 = vpop.permute.xlu0 %2816
          %2820 = vset.pattern.permute.xlu0 0
          %2821 = vperm.xlu0 %2820, %v2763
          %v2822 = vpop.permute.xlu0 %2821
          %2825 = vset.pattern.permute.xlu0 0
          %2826 = vperm.xlu0 %2825, %v2764
          %v2827 = vpop.permute.xlu0 %2826
          %2830 = vset.pattern.permute.xlu0 0
          %2831 = vperm.xlu0 %2830, %v2765
          %v2832 = vpop.permute.xlu0 %2831
          %2835 = vset.pattern.permute.xlu0 0
          %2836 = vperm.xlu0 %2835, %v2766
          %v2837 = vpop.permute.xlu0 %2836
          %2840 = vset.pattern.permute.xlu0 0
          %2841 = vperm.xlu0 %2840, %v2767
          %v2842 = vpop.permute.xlu0 %2841
          %2845 = vset.pattern.permute.xlu0 0
          %2846 = vperm.xlu0 %2845, %v2768
          %v2847 = vpop.permute.xlu0 %2846
          %2850 = vset.pattern.permute.xlu0 0
          %2851 = vperm.xlu0 %2850, %v2769
          %v2852 = vpop.permute.xlu0 %2851
          %2855 = vset.pattern.permute.xlu0 0
          %2856 = vperm.xlu0 %2855, %v2770
          %v2857 = vpop.permute.xlu0 %2856
          %2860 = vset.pattern.permute.xlu0 0
          %2861 = vperm.xlu0 %2860, %v2771
          %v2862 = vpop.permute.xlu0 %2861
          %2865 = vset.pattern.permute.xlu0 0
          %2866 = vperm.xlu0 %2865, %v2772
          %v2867 = vpop.permute.xlu0 %2866
          %v2869 = vmul.f32 %v2773, %v2792
          %v2870 = vmul.f32 %v2774, %v2797
          %v2871 = vmul.f32 %v2775, %v2802
          %v2872 = vmul.f32 %v2776, %v2807
          %v2873 = vmul.f32 %v2777, %v2812
          %v2874 = vmul.f32 %v2778, %v2817
          %v2875 = vmul.f32 %v2779, %v2822
          %v2876 = vmul.f32 %v2780, %v2827
          %v2877 = vmul.f32 %v2781, %v2832
          %v2878 = vmul.f32 %v2782, %v2837
          %v2879 = vmul.f32 %v2783, %v2842
          %v2880 = vmul.f32 %v2784, %v2847
          %v2881 = vmul.f32 %v2785, %v2852
          %v2882 = vmul.f32 %v2786, %v2857
          %v2883 = vmul.f32 %v2787, %v2862
          %v2884 = vmul.f32 %v2788, %v2867
          %v2885 = vsel %vm2146, %v2869, 0.0
          %v2886 = vsel %vm2146, %v2870, 0.0
          %v2887 = vadd.f32 %v2885, %v2886
          %v2888 = vsel %vm2146, %v2871, 0.0
          %v2889 = vadd.f32 %v2887, %v2888
          %v2890 = vsel %vm2146, %v2872, 0.0
          %v2891 = vadd.f32 %v2889, %v2890
          %v2892 = vsel %vm2146, %v2873, 0.0
          %v2893 = vadd.f32 %v2891, %v2892
          %v2894 = vsel %vm2146, %v2874, 0.0
          %v2895 = vadd.f32 %v2893, %v2894
          %v2896 = vsel %vm2146, %v2875, 0.0
          %v2897 = vadd.f32 %v2895, %v2896
          %v2898 = vsel %vm2146, %v2876, 0.0
          %v2899 = vadd.f32 %v2897, %v2898
          %v2900 = vsel %vm2146, %v2877, 0.0
          %v2901 = vadd.f32 %v2899, %v2900
          %v2902 = vsel %vm2146, %v2878, 0.0
          %v2903 = vadd.f32 %v2901, %v2902
          %v2904 = vsel %vm2146, %v2879, 0.0
          %v2905 = vadd.f32 %v2903, %v2904
          %v2906 = vsel %vm2146, %v2880, 0.0
          %v2907 = vadd.f32 %v2905, %v2906
          %v2908 = vsel %vm2146, %v2881, 0.0
          %v2909 = vadd.f32 %v2907, %v2908
          %v2910 = vsel %vm2146, %v2882, 0.0
          %v2911 = vadd.f32 %v2909, %v2910
          %v2912 = vsel %vm2146, %v2883, 0.0
          %v2913 = vadd.f32 %v2911, %v2912
          %v2914 = vsel %vm2146, %v2884, 0.0
          %v2915 = vadd.f32 %v2913, %v2914
          %v2916 = vrot.slane %v2915, 4
          %v2917 = vadd.f32 %v2915, %v2916
          %v2918 = vrot.slane %v2917, 2
          %v2919 = vadd.f32 %v2917, %v2918
          %v2920 = vrot.slane %v2919, 1
          %v2921 = vadd.f32 %v2919, %v2920
          %v2922 = vld [vmem:[%s14] sm:$0x1]
          %v2923 = vadd.f32 %v2921, %v2922
          %vm2924 = vcmask 16384
          %2925 = vst.msk [vmem:[%s517] sm:$0x1] %vm2924, %v2923
        $region88: #{tpu_custom_call.1} parent=79 // pred_fallthru
          _
        %s2926 = sand.u32 %s376, 1
        %s2927 = scalar_lea.sflag [#allocation4], %s2926
        %s2928 = sand.u32 %s376, 1
        %s2929 = scalar_lea.vmem [#allocation3], %s2928
        // Predicated region
        $region89: #{tpu_custom_call.1} parent=79 // pred_check
          %p2930 = pneg %p386
        $region90: #{tpu_custom_call.1} parent=79 // pred_check_branch
          %2932 = sbr.rel (%p2930) target = $region92
        $region91: #{tpu_custom_call.1} parent=79 // pred_region
          %s2934 = ssub.s32 16, 16
          %2935 = vsyncadd %s2927, %s2934
          %s2936 = smul.addr %s33, 16
          %s2937 = scalar_lea.hbm %s15, %s2936
          %s2939 = sshll.u32 %s2929, 4
          %s2940 = int_to_ptr.vmem [resolvable:$true] %s2939
          %2942 = dma.vmem_to_hbm [thread:$0]  %s2940, 16, %s2937, %s2927
        $region92: #{tpu_custom_call.1} parent=79 // pred_fallthru
          _
      $region80: #{tpu_custom_call.1} parent=5 // pred_fallthru
        _
      %p2943 = scmp.le.s32.totalorder 2, %s24
      // Predicated region
      $region93: #{tpu_custom_call.1} parent=5 // pred_check
        %p2944 = pneg %p2943
      $region94: #{tpu_custom_call.1} parent=5 // pred_check_branch
        %2946 = sbr.rel (%p2944) target = $region96
      $region95: #{tpu_custom_call.1} parent=5 // pred_region
        %s2947 = ssub.s32 %s24, 2
        // Predicated region
        $region97: #{tpu_custom_call.1} parent=95 // pred_check
          %p2948 = pneg %p392
        $region98: #{tpu_custom_call.1} parent=95 // pred_check_branch
          %2950 = sbr.rel (%p2948) target = $region100
        $region99: #{tpu_custom_call.1} parent=95 // pred_region
          %s2951 = sand.u32 %s377, 1
          %s2952 = scalar_lea.sflag [#allocation4], %s2951
          %s2953 = sand.u32 %s377, 1
          %s2954 = scalar_lea.vmem [#allocation3], %s2953
          %2955 = dma.done %s2952, 16
        $region100: #{tpu_custom_call.1} parent=95 // pred_fallthru
          _
      $region96: #{tpu_custom_call.1} parent=5 // pred_fallthru
        _
    $region6: #{tpu_custom_call.1} parent=1 // loop_footer
      %s28 = sadd.s32 1, %s24
    $region7: #{tpu_custom_call.1} parent=1 // loop_footer_branch
      %23 = sbr.rel target = $region3
    $region8: #{tpu_custom_call.1} parent=1 // loop_exit
      _
    %2956 = vsyncpa [#allocation4], 1
    %s2957 = scalar_lea.sflag [#allocation4], 1
    %2958 = vsyncpa %s2957, 1

</llo_original>
